<compile_context>
chip_gen: v5e
topology: v5e:2x2
jax: 0.10.0
libtpu: 0.0.40
codegen_flags: <defaults>
</compile_context>

<pallas_src>
import functools

import jax
import jax.numpy as jnp
from jax import lax
from jax.experimental import pallas as pl
from jax.experimental.pallas import tpu as pltpu

DIM = 4                      # input channels `dim`
HEADS = 4
DIM_HEAD = 32
HIDDEN = HEADS * DIM_HEAD    # 128
SCALE = DIM_HEAD ** (-0.5)


def _attention_kernel(x_ref, wqkv_ref, wout_ref, bout_ref, o_ref,
                      qkv_ref, heads_ref, *, n, b_blk, q_chunk):
    # x_ref:    (C, b_blk*n) f32   channels on sublanes, pixels on lanes
    # wqkv_ref: (3*HIDDEN, C) f32  to_qkv weight (softmax scale pre-folded into Q rows)
    # wout_ref: (C, HIDDEN)  bf16  to_out weight (cast once in the wrapper)
    # bout_ref: (C, 1)       f32   to_out bias
    # o_ref:    (C, b_blk*n) f32
    # qkv_ref:  (3*HIDDEN, b_blk*n) bf16 scratch (staged QKV)
    # heads_ref:(HIDDEN,    b_blk*n) bf16 scratch (concatenated head outputs)

    # --- QKV projection: one wide, native-orientation matmul over all b_blk*n lanes.
    qkv = lax.dot_general(
        wqkv_ref[...], x_ref[...],
        dimension_numbers=(((1,), (0,)), ((), ())),
        preferred_element_type=jnp.float32)                       # (3*HIDDEN, b_blk*n)
    qkv_ref[...] = qkv.astype(jnp.bfloat16)                       # stage once as bf16

    # --- Per (batch-in-block, head) attention.
    #     Scores are produced transposed: keys on sublanes, queries on lanes.
    for bi in range(b_blk):
        col = bi * n
        for h in range(HEADS):
            q_lo = h * DIM_HEAD
            k_lo = HIDDEN + h * DIM_HEAD
            v_lo = 2 * HIDDEN + h * DIM_HEAD
            k_h = qkv_ref[k_lo:k_lo + DIM_HEAD, col:col + n]      # (32, n) bf16
            v_h = qkv_ref[v_lo:v_lo + DIM_HEAD, col:col + n]      # (32, n) bf16

            # Chunk the softmax over the query (lane) axis to keep the pipeline
            # max -> exp -> normalize -> MXU-feed in registers (no (n, n) f32 spills).
            for qc in range(0, n, q_chunk):
                q_c = qkv_ref[q_lo:q_lo + DIM_HEAD,
                              col + qc:col + qc + q_chunk]        # (32, q_chunk) bf16

                # simT[j, i] = sum_d k[d, j] * q[d, i]   (only the (32, n) k ever
                # needs XLU work; never the (n, n) score matrix).
                sim_t = lax.dot_general(
                    k_h, q_c,
                    dimension_numbers=(((0,), (0,)), ((), ())),
                    preferred_element_type=jnp.float32)           # (n, q_chunk) f32

                # Softmax over keys = sublane-axis reductions (mostly VPU adds).
                sim_t = sim_t - jnp.max(sim_t, axis=0, keepdims=True)
                p = jnp.exp(sim_t)                                # f32 softmax math
                attn_t = p * pl.reciprocal(jnp.sum(p, axis=0, keepdims=True),
                                           approx=False)

                # out[d, i] = sum_j v[d, j] * attnT[j, i]  -> native (32,n)x(n,qc) matmul.
                out_c = lax.dot_general(
                    v_h, attn_t.astype(jnp.bfloat16),
                    dimension_numbers=(((1,), (0,)), ((), ())),
                    preferred_element_type=jnp.float32)           # (32, q_chunk)

                heads_ref[q_lo:q_lo + DIM_HEAD,
                          col + qc:col + qc + q_chunk] = out_c.astype(jnp.bfloat16)

    # --- Output projection over the whole slab + bias (native matmul, bf16 operands).
    y = lax.dot_general(
        wout_ref[...], heads_ref[...],
        dimension_numbers=(((1,), (0,)), ((), ())),
        preferred_element_type=jnp.float32)                       # (C, b_blk*n)
    o_ref[...] = y + bout_ref[...]


def _pick_b_blk(b):
    """Fat grid steps (amortize per-step overhead) but keep >=2 steps when possible
    so v7x's two TensorCores can each take work."""
    for cand in (8, 4, 2):
        if b % cand == 0 and b // cand >= 2:
            return cand
    return 1


@jax.jit
def attention_forward(x_nchw, wqkv, wout, bout):
    """x_nchw: (B, C, H, W); wqkv: (3*HIDDEN, C, 1, 1); wout: (C, HIDDEN, 1, 1); bout: (C,)."""
    b, c, hh, ww = x_nchw.shape
    n = hh * ww

    b_blk = _pick_b_blk(b)
    q_chunk = 128 if n % 128 == 0 else n
    if n % 128 != 0:
        # Keep the lane block equal to the full array dim so the BlockSpec stays legal.
        b_blk = b

    # NCHW -> (C, B*N) slab: pixels of every batch element on the lane axis.
    # (Tiny one-time XLA transpose in HBM; x is only a few KiB at these sizes.)
    x_slab = x_nchw.reshape(b, c, n).transpose(1, 0, 2).reshape(c, b * n)
    x_slab = x_slab.astype(jnp.float32)

    wqkv2 = wqkv.reshape(3 * HIDDEN, c).astype(jnp.float32)        # (3*HIDDEN, C)
    wqkv2 = wqkv2.at[:HIDDEN, :].multiply(SCALE)                   # fold softmax scale into Q
    wout2 = wout.reshape(c, HIDDEN).astype(jnp.bfloat16)           # final MXU dtype, cast once
    bout2 = bout.reshape(c, 1).astype(jnp.float32)                 # (C, 1)

    flops_per_b = (2 * n * c * 3 * HIDDEN                          # qkv projection
                   + HEADS * (4 * n * n * DIM_HEAD)                # sim + attn@v
                   + 2 * n * HIDDEN * c)                           # output projection
    cost = pl.CostEstimate(
        flops=b * flops_per_b,
        transcendentals=b * HEADS * n * n,
        bytes_accessed=(4 * 2 * b * c * n                          # x in + y out (f32)
                        + 4 * 3 * HIDDEN * c                       # wqkv (f32)
                        + 2 * HIDDEN * c                           # wout (bf16)
                        + 4 * c),                                  # bias
    )

    kernel = functools.partial(_attention_kernel, n=n, b_blk=b_blk, q_chunk=q_chunk)

    out_slab = pl.pallas_call(
        kernel,
        out_shape=jax.ShapeDtypeStruct((c, b * n), jnp.float32),
        grid_spec=pltpu.PrefetchScalarGridSpec(
            num_scalar_prefetch=0,
            grid=(b // b_blk,),
            in_specs=[
                pl.BlockSpec((c, b_blk * n), lambda i: (0, i)),
                pl.BlockSpec((3 * HIDDEN, c), lambda i: (0, 0)),
                pl.BlockSpec((c, HIDDEN), lambda i: (0, 0)),
                pl.BlockSpec((c, 1), lambda i: (0, 0)),
            ],
            out_specs=pl.BlockSpec((c, b_blk * n), lambda i: (0, i)),
            scratch_shapes=[
                pltpu.VMEM((3 * HIDDEN, b_blk * n), jnp.bfloat16),   # staged QKV
                pltpu.VMEM((HIDDEN, b_blk * n), jnp.bfloat16),       # head outputs
            ],
        ),
        compiler_params=pltpu.CompilerParams(dimension_semantics=("parallel",)),
        cost_estimate=cost,
    )(x_slab, wqkv2, wout2, bout2)

    # (C, B*N) -> NCHW (reshape + tiny transpose only).
    return out_slab.reshape(c, b, n).transpose(1, 0, 2).reshape(b, c, hh, ww)


def reference_forward(x, wqkv, wout, bout):
    """Pure-JAX (f32) replica of the PyTorch forward, for verification."""
    b, c, hh, ww = x.shape
    n = hh * ww
    xf = x.reshape(b, c, n)
    qkv = jnp.einsum('oc,bcn->bon', wqkv.reshape(3 * HIDDEN, c), xf)   # (b, 3H, n)
    q, k, v = jnp.split(qkv, 3, axis=1)
    to_heads = lambda t: t.reshape(b, HEADS, DIM_HEAD, n)
    q, k, v = map(to_heads, (q, k, v))
    q = q * SCALE
    sim = jnp.einsum('bhdi,bhdj->bhij', q, k)
    sim = sim - jnp.max(sim, axis=-1, keepdims=True)
    attn = jax.nn.softmax(sim, axis=-1)
    out = jnp.einsum('bhij,bhdj->bhid', attn, v)                       # (b, h, n, d)
    out = out.transpose(0, 1, 3, 2).reshape(b, HIDDEN, n)              # b (h d) n
    y = jnp.einsum('oc,bcn->bon', wout.reshape(c, HIDDEN), out) + bout[None, :, None]
    return y.reshape(b, c, hh, ww)


if __name__ == "__main__":
    key = jax.random.PRNGKey(0)
    k1, k2, k3, k4 = jax.random.split(key, 4)

    b, c, hh, ww = 2, DIM, 16, 16
    x = jax.random.normal(k1, (b, c, hh, ww), jnp.float32)
    # Deterministic synthetic parameters (Conv2d 1x1 weight shapes from __init__).
    wqkv = jax.random.normal(k2, (3 * HIDDEN, DIM, 1, 1), jnp.float32) * 0.1
    wout = jax.random.normal(k3, (DIM, HIDDEN, 1, 1), jnp.float32) * 0.1
    bout = jax.random.normal(k4, (DIM,), jnp.float32) * 0.1

    out = jax.block_until_ready(attention_forward(x, wqkv, wout, bout))

    ref = reference_forward(x, wqkv, wout, bout)
    assert out.shape == (b, c, hh, ww)
    # bf16 MXU operands (softmax max/exp/sum and accumulation stay f32).
    assert jnp.allclose(out, ref, atol=2e-2, rtol=2e-2), "Pallas output mismatch vs reference"

    print("KERNEL_OK")
</pallas_src>

<mosaic_0001>
module attributes {stable_mosaic.version = 11 : i64} {
  func.func @_attention_kernel(%arg0: i32, %arg1: memref<4x256xf32, #tpu.memory_space<vmem>>, %arg2: memref<384x4xf32, #tpu.memory_space<vmem>>, %arg3: memref<4x128xbf16, #tpu.memory_space<vmem>>, %arg4: memref<4x1xf32, #tpu.memory_space<vmem>>, %arg5: memref<4x256xf32, #tpu.memory_space<vmem>>, %arg6: memref<384x256xbf16, #tpu.memory_space<vmem>>, %arg7: memref<128x256xbf16, #tpu.memory_space<vmem>>) attributes {dimension_semantics = [#tpu.dimension_semantics<parallel>], iteration_bounds = array<i64: 2>, scalar_prefetch = 0 : i64, scratch_operands = 2 : i64, tpu.core_type = #tpu.core_type<tc>, window_params = [{transform_indices = @transform_0, window_bounds = array<i64: 4, 256>}, {pipeline_mode = #tpu.pipeline_mode<synchronous>, transform_indices = @transform_1, window_bounds = array<i64: 384, 4>}, {pipeline_mode = #tpu.pipeline_mode<synchronous>, transform_indices = @transform_2, window_bounds = array<i64: 4, 128>}, {pipeline_mode = #tpu.pipeline_mode<synchronous>, transform_indices = @transform_3, window_bounds = array<i64: 4, 1>}, {transform_indices = @transform_4, window_bounds = array<i64: 4, 256>}]} {
    %c0 = arith.constant 0 : index
    %c0_0 = arith.constant 0 : index
    %0 = vector.load %arg2[%c0, %c0_0] : memref<384x4xf32, #tpu.memory_space<vmem>>, vector<384x4xf32>
    %c0_1 = arith.constant 0 : index
    %c0_2 = arith.constant 0 : index
    %1 = vector.load %arg1[%c0_1, %c0_2] : memref<4x256xf32, #tpu.memory_space<vmem>>, vector<4x256xf32>
    %cst = arith.constant dense<0.000000e+00> : vector<384x256xf32>
    %2 = tpu.matmul %0, %1, %cst {dimension_numbers = #tpu.dot_dimension_numbers<[1], [0], [0], [1], [0, 0, 1, 1], [], []>} : vector<384x4xf32>, vector<4x256xf32>, vector<384x256xf32> -> vector<384x256xf32>
    %3 = arith.truncf %2 : vector<384x256xf32> to vector<384x256xbf16>
    %c0_3 = arith.constant 0 : index
    %c0_4 = arith.constant 0 : index
    %4 = vector.load %arg6[%c0_3, %c0_4] : memref<384x256xbf16, #tpu.memory_space<vmem>>, vector<384x256xbf16>
    tpu.vector_store %arg6[%c0_3, %c0_4], %3 {strides = array<i32>} : memref<384x256xbf16, #tpu.memory_space<vmem>>, vector<384x256xbf16>,
    %c128 = arith.constant 128 : index
    %c0_5 = arith.constant 0 : index
    %5 = vector.load %arg6[%c128, %c0_5] : memref<384x256xbf16, #tpu.memory_space<vmem>>, vector<32x256xbf16>
    %c256 = arith.constant 256 : index
    %c0_6 = arith.constant 0 : index
    %6 = vector.load %arg6[%c256, %c0_6] : memref<384x256xbf16, #tpu.memory_space<vmem>>, vector<32x256xbf16>
    %c0_7 = arith.constant 0 : index
    %c0_8 = arith.constant 0 : index
    %7 = vector.load %arg6[%c0_7, %c0_8] : memref<384x256xbf16, #tpu.memory_space<vmem>>, vector<32x128xbf16>
    %cst_9 = arith.constant dense<0.000000e+00> : vector<256x128xf32>
    %8 = tpu.matmul %5, %7, %cst_9 {dimension_numbers = #tpu.dot_dimension_numbers<[0], [0], [1], [1], [0, 1, 1, 1], [], []>} : vector<32x256xbf16>, vector<32x128xbf16>, vector<256x128xf32> -> vector<256x128xf32>
    %cst_10 = arith.constant dense<0xFF800000> : vector<128xf32>
    %9 = vector.multi_reduction <maximumf>, %8, %cst_10 [0] : vector<256x128xf32> to vector<128xf32>
    %10 = vector.shape_cast %9 : vector<128xf32> to vector<1x128xf32>
    %11 = vector.broadcast %10 : vector<1x128xf32> to vector<256x128xf32>
    %12 = arith.subf %8, %11 : vector<256x128xf32>
    %13 = math.exp %12 : vector<256x128xf32>
    %cst_11 = arith.constant dense<0.000000e+00> : vector<128xf32>
    %14 = vector.multi_reduction <add>, %13, %cst_11 [0] : vector<256x128xf32> to vector<128xf32>
    %15 = vector.shape_cast %14 : vector<128xf32> to vector<1x128xf32>
    %16 = tpu.reciprocal %15 : vector<1x128xf32> -> vector<1x128xf32>
    %17 = vector.broadcast %16 : vector<1x128xf32> to vector<256x128xf32>
    %18 = arith.mulf %13, %17 : vector<256x128xf32>
    %19 = arith.truncf %18 : vector<256x128xf32> to vector<256x128xbf16>
    %cst_12 = arith.constant dense<0.000000e+00> : vector<32x128xf32>
    %20 = tpu.matmul %6, %19, %cst_12 {dimension_numbers = #tpu.dot_dimension_numbers<[1], [0], [0], [1], [0, 0, 1, 1], [], []>} : vector<32x256xbf16>, vector<256x128xbf16>, vector<32x128xf32> -> vector<32x128xf32>
    %21 = arith.truncf %20 : vector<32x128xf32> to vector<32x128xbf16>
    %c0_13 = arith.constant 0 : index
    %c0_14 = arith.constant 0 : index
    %22 = vector.load %arg7[%c0_13, %c0_14] : memref<128x256xbf16, #tpu.memory_space<vmem>>, vector<32x128xbf16>
    tpu.vector_store %arg7[%c0_13, %c0_14], %21 {strides = array<i32>} : memref<128x256xbf16, #tpu.memory_space<vmem>>, vector<32x128xbf16>,
    %c0_15 = arith.constant 0 : index
    %c128_16 = arith.constant 128 : index
    %23 = vector.load %arg6[%c0_15, %c128_16] : memref<384x256xbf16, #tpu.memory_space<vmem>>, vector<32x128xbf16>
    %cst_17 = arith.constant dense<0.000000e+00> : vector<256x128xf32>
    %24 = tpu.matmul %5, %23, %cst_17 {dimension_numbers = #tpu.dot_dimension_numbers<[0], [0], [1], [1], [0, 1, 1, 1], [], []>} : vector<32x256xbf16>, vector<32x128xbf16>, vector<256x128xf32> -> vector<256x128xf32>
    %cst_18 = arith.constant dense<0xFF800000> : vector<128xf32>
    %25 = vector.multi_reduction <maximumf>, %24, %cst_18 [0] : vector<256x128xf32> to vector<128xf32>
    %26 = vector.shape_cast %25 : vector<128xf32> to vector<1x128xf32>
    %27 = vector.broadcast %26 : vector<1x128xf32> to vector<256x128xf32>
    %28 = arith.subf %24, %27 : vector<256x128xf32>
    %29 = math.exp %28 : vector<256x128xf32>
    %cst_19 = arith.constant dense<0.000000e+00> : vector<128xf32>
    %30 = vector.multi_reduction <add>, %29, %cst_19 [0] : vector<256x128xf32> to vector<128xf32>
    %31 = vector.shape_cast %30 : vector<128xf32> to vector<1x128xf32>
    %32 = tpu.reciprocal %31 : vector<1x128xf32> -> vector<1x128xf32>
    %33 = vector.broadcast %32 : vector<1x128xf32> to vector<256x128xf32>
    %34 = arith.mulf %29, %33 : vector<256x128xf32>
    %35 = arith.truncf %34 : vector<256x128xf32> to vector<256x128xbf16>
    %cst_20 = arith.constant dense<0.000000e+00> : vector<32x128xf32>
    %36 = tpu.matmul %6, %35, %cst_20 {dimension_numbers = #tpu.dot_dimension_numbers<[1], [0], [0], [1], [0, 0, 1, 1], [], []>} : vector<32x256xbf16>, vector<256x128xbf16>, vector<32x128xf32> -> vector<32x128xf32>
    %37 = arith.truncf %36 : vector<32x128xf32> to vector<32x128xbf16>
    %c0_21 = arith.constant 0 : index
    %c128_22 = arith.constant 128 : index
    %38 = vector.load %arg7[%c0_21, %c128_22] : memref<128x256xbf16, #tpu.memory_space<vmem>>, vector<32x128xbf16>
    tpu.vector_store %arg7[%c0_21, %c128_22], %37 {strides = array<i32>} : memref<128x256xbf16, #tpu.memory_space<vmem>>, vector<32x128xbf16>,
    %c160 = arith.constant 160 : index
    %c0_23 = arith.constant 0 : index
    %39 = vector.load %arg6[%c160, %c0_23] : memref<384x256xbf16, #tpu.memory_space<vmem>>, vector<32x256xbf16>
    %c288 = arith.constant 288 : index
    %c0_24 = arith.constant 0 : index
    %40 = vector.load %arg6[%c288, %c0_24] : memref<384x256xbf16, #tpu.memory_space<vmem>>, vector<32x256xbf16>
    %c32 = arith.constant 32 : index
    %c0_25 = arith.constant 0 : index
    %41 = vector.load %arg6[%c32, %c0_25] : memref<384x256xbf16, #tpu.memory_space<vmem>>, vector<32x128xbf16>
    %cst_26 = arith.constant dense<0.000000e+00> : vector<256x128xf32>
    %42 = tpu.matmul %39, %41, %cst_26 {dimension_numbers = #tpu.dot_dimension_numbers<[0], [0], [1], [1], [0, 1, 1, 1], [], []>} : vector<32x256xbf16>, vector<32x128xbf16>, vector<256x128xf32> -> vector<256x128xf32>
    %cst_27 = arith.constant dense<0xFF800000> : vector<128xf32>
    %43 = vector.multi_reduction <maximumf>, %42, %cst_27 [0] : vector<256x128xf32> to vector<128xf32>
    %44 = vector.shape_cast %43 : vector<128xf32> to vector<1x128xf32>
    %45 = vector.broadcast %44 : vector<1x128xf32> to vector<256x128xf32>
    %46 = arith.subf %42, %45 : vector<256x128xf32>
    %47 = math.exp %46 : vector<256x128xf32>
    %cst_28 = arith.constant dense<0.000000e+00> : vector<128xf32>
    %48 = vector.multi_reduction <add>, %47, %cst_28 [0] : vector<256x128xf32> to vector<128xf32>
    %49 = vector.shape_cast %48 : vector<128xf32> to vector<1x128xf32>
    %50 = tpu.reciprocal %49 : vector<1x128xf32> -> vector<1x128xf32>
    %51 = vector.broadcast %50 : vector<1x128xf32> to vector<256x128xf32>
    %52 = arith.mulf %47, %51 : vector<256x128xf32>
    %53 = arith.truncf %52 : vector<256x128xf32> to vector<256x128xbf16>
    %cst_29 = arith.constant dense<0.000000e+00> : vector<32x128xf32>
    %54 = tpu.matmul %40, %53, %cst_29 {dimension_numbers = #tpu.dot_dimension_numbers<[1], [0], [0], [1], [0, 0, 1, 1], [], []>} : vector<32x256xbf16>, vector<256x128xbf16>, vector<32x128xf32> -> vector<32x128xf32>
    %55 = arith.truncf %54 : vector<32x128xf32> to vector<32x128xbf16>
    %c32_30 = arith.constant 32 : index
    %c0_31 = arith.constant 0 : index
    %56 = vector.load %arg7[%c32_30, %c0_31] : memref<128x256xbf16, #tpu.memory_space<vmem>>, vector<32x128xbf16>
    tpu.vector_store %arg7[%c32_30, %c0_31], %55 {strides = array<i32>} : memref<128x256xbf16, #tpu.memory_space<vmem>>, vector<32x128xbf16>,
    %c32_32 = arith.constant 32 : index
    %c128_33 = arith.constant 128 : index
    %57 = vector.load %arg6[%c32_32, %c128_33] : memref<384x256xbf16, #tpu.memory_space<vmem>>, vector<32x128xbf16>
    %cst_34 = arith.constant dense<0.000000e+00> : vector<256x128xf32>
    %58 = tpu.matmul %39, %57, %cst_34 {dimension_numbers = #tpu.dot_dimension_numbers<[0], [0], [1], [1], [0, 1, 1, 1], [], []>} : vector<32x256xbf16>, vector<32x128xbf16>, vector<256x128xf32> -> vector<256x128xf32>
    %cst_35 = arith.constant dense<0xFF800000> : vector<128xf32>
    %59 = vector.multi_reduction <maximumf>, %58, %cst_35 [0] : vector<256x128xf32> to vector<128xf32>
    %60 = vector.shape_cast %59 : vector<128xf32> to vector<1x128xf32>
    %61 = vector.broadcast %60 : vector<1x128xf32> to vector<256x128xf32>
    %62 = arith.subf %58, %61 : vector<256x128xf32>
    %63 = math.exp %62 : vector<256x128xf32>
    %cst_36 = arith.constant dense<0.000000e+00> : vector<128xf32>
    %64 = vector.multi_reduction <add>, %63, %cst_36 [0] : vector<256x128xf32> to vector<128xf32>
    %65 = vector.shape_cast %64 : vector<128xf32> to vector<1x128xf32>
    %66 = tpu.reciprocal %65 : vector<1x128xf32> -> vector<1x128xf32>
    %67 = vector.broadcast %66 : vector<1x128xf32> to vector<256x128xf32>
    %68 = arith.mulf %63, %67 : vector<256x128xf32>
    %69 = arith.truncf %68 : vector<256x128xf32> to vector<256x128xbf16>
    %cst_37 = arith.constant dense<0.000000e+00> : vector<32x128xf32>
    %70 = tpu.matmul %40, %69, %cst_37 {dimension_numbers = #tpu.dot_dimension_numbers<[1], [0], [0], [1], [0, 0, 1, 1], [], []>} : vector<32x256xbf16>, vector<256x128xbf16>, vector<32x128xf32> -> vector<32x128xf32>
    %71 = arith.truncf %70 : vector<32x128xf32> to vector<32x128xbf16>
    %c32_38 = arith.constant 32 : index
    %c128_39 = arith.constant 128 : index
    %72 = vector.load %arg7[%c32_38, %c128_39] : memref<128x256xbf16, #tpu.memory_space<vmem>>, vector<32x128xbf16>
    tpu.vector_store %arg7[%c32_38, %c128_39], %71 {strides = array<i32>} : memref<128x256xbf16, #tpu.memory_space<vmem>>, vector<32x128xbf16>,
    %c192 = arith.constant 192 : index
    %c0_40 = arith.constant 0 : index
    %73 = vector.load %arg6[%c192, %c0_40] : memref<384x256xbf16, #tpu.memory_space<vmem>>, vector<32x256xbf16>
    %c320 = arith.constant 320 : index
    %c0_41 = arith.constant 0 : index
    %74 = vector.load %arg6[%c320, %c0_41] : memref<384x256xbf16, #tpu.memory_space<vmem>>, vector<32x256xbf16>
    %c64 = arith.constant 64 : index
    %c0_42 = arith.constant 0 : index
    %75 = vector.load %arg6[%c64, %c0_42] : memref<384x256xbf16, #tpu.memory_space<vmem>>, vector<32x128xbf16>
    %cst_43 = arith.constant dense<0.000000e+00> : vector<256x128xf32>
    %76 = tpu.matmul %73, %75, %cst_43 {dimension_numbers = #tpu.dot_dimension_numbers<[0], [0], [1], [1], [0, 1, 1, 1], [], []>} : vector<32x256xbf16>, vector<32x128xbf16>, vector<256x128xf32> -> vector<256x128xf32>
    %cst_44 = arith.constant dense<0xFF800000> : vector<128xf32>
    %77 = vector.multi_reduction <maximumf>, %76, %cst_44 [0] : vector<256x128xf32> to vector<128xf32>
    %78 = vector.shape_cast %77 : vector<128xf32> to vector<1x128xf32>
    %79 = vector.broadcast %78 : vector<1x128xf32> to vector<256x128xf32>
    %80 = arith.subf %76, %79 : vector<256x128xf32>
    %81 = math.exp %80 : vector<256x128xf32>
    %cst_45 = arith.constant dense<0.000000e+00> : vector<128xf32>
    %82 = vector.multi_reduction <add>, %81, %cst_45 [0] : vector<256x128xf32> to vector<128xf32>
    %83 = vector.shape_cast %82 : vector<128xf32> to vector<1x128xf32>
    %84 = tpu.reciprocal %83 : vector<1x128xf32> -> vector<1x128xf32>
    %85 = vector.broadcast %84 : vector<1x128xf32> to vector<256x128xf32>
    %86 = arith.mulf %81, %85 : vector<256x128xf32>
    %87 = arith.truncf %86 : vector<256x128xf32> to vector<256x128xbf16>
    %cst_46 = arith.constant dense<0.000000e+00> : vector<32x128xf32>
    %88 = tpu.matmul %74, %87, %cst_46 {dimension_numbers = #tpu.dot_dimension_numbers<[1], [0], [0], [1], [0, 0, 1, 1], [], []>} : vector<32x256xbf16>, vector<256x128xbf16>, vector<32x128xf32> -> vector<32x128xf32>
    %89 = arith.truncf %88 : vector<32x128xf32> to vector<32x128xbf16>
    %c64_47 = arith.constant 64 : index
    %c0_48 = arith.constant 0 : index
    %90 = vector.load %arg7[%c64_47, %c0_48] : memref<128x256xbf16, #tpu.memory_space<vmem>>, vector<32x128xbf16>
    tpu.vector_store %arg7[%c64_47, %c0_48], %89 {strides = array<i32>} : memref<128x256xbf16, #tpu.memory_space<vmem>>, vector<32x128xbf16>,
    %c64_49 = arith.constant 64 : index
    %c128_50 = arith.constant 128 : index
    %91 = vector.load %arg6[%c64_49, %c128_50] : memref<384x256xbf16, #tpu.memory_space<vmem>>, vector<32x128xbf16>
    %cst_51 = arith.constant dense<0.000000e+00> : vector<256x128xf32>
    %92 = tpu.matmul %73, %91, %cst_51 {dimension_numbers = #tpu.dot_dimension_numbers<[0], [0], [1], [1], [0, 1, 1, 1], [], []>} : vector<32x256xbf16>, vector<32x128xbf16>, vector<256x128xf32> -> vector<256x128xf32>
    %cst_52 = arith.constant dense<0xFF800000> : vector<128xf32>
    %93 = vector.multi_reduction <maximumf>, %92, %cst_52 [0] : vector<256x128xf32> to vector<128xf32>
    %94 = vector.shape_cast %93 : vector<128xf32> to vector<1x128xf32>
    %95 = vector.broadcast %94 : vector<1x128xf32> to vector<256x128xf32>
    %96 = arith.subf %92, %95 : vector<256x128xf32>
    %97 = math.exp %96 : vector<256x128xf32>
    %cst_53 = arith.constant dense<0.000000e+00> : vector<128xf32>
    %98 = vector.multi_reduction <add>, %97, %cst_53 [0] : vector<256x128xf32> to vector<128xf32>
    %99 = vector.shape_cast %98 : vector<128xf32> to vector<1x128xf32>
    %100 = tpu.reciprocal %99 : vector<1x128xf32> -> vector<1x128xf32>
    %101 = vector.broadcast %100 : vector<1x128xf32> to vector<256x128xf32>
    %102 = arith.mulf %97, %101 : vector<256x128xf32>
    %103 = arith.truncf %102 : vector<256x128xf32> to vector<256x128xbf16>
    %cst_54 = arith.constant dense<0.000000e+00> : vector<32x128xf32>
    %104 = tpu.matmul %74, %103, %cst_54 {dimension_numbers = #tpu.dot_dimension_numbers<[1], [0], [0], [1], [0, 0, 1, 1], [], []>} : vector<32x256xbf16>, vector<256x128xbf16>, vector<32x128xf32> -> vector<32x128xf32>
    %105 = arith.truncf %104 : vector<32x128xf32> to vector<32x128xbf16>
    %c64_55 = arith.constant 64 : index
    %c128_56 = arith.constant 128 : index
    %106 = vector.load %arg7[%c64_55, %c128_56] : memref<128x256xbf16, #tpu.memory_space<vmem>>, vector<32x128xbf16>
    tpu.vector_store %arg7[%c64_55, %c128_56], %105 {strides = array<i32>} : memref<128x256xbf16, #tpu.memory_space<vmem>>, vector<32x128xbf16>,
    %c224 = arith.constant 224 : index
    %c0_57 = arith.constant 0 : index
    %107 = vector.load %arg6[%c224, %c0_57] : memref<384x256xbf16, #tpu.memory_space<vmem>>, vector<32x256xbf16>
    %c352 = arith.constant 352 : index
    %c0_58 = arith.constant 0 : index
    %108 = vector.load %arg6[%c352, %c0_58] : memref<384x256xbf16, #tpu.memory_space<vmem>>, vector<32x256xbf16>
    %c96 = arith.constant 96 : index
    %c0_59 = arith.constant 0 : index
    %109 = vector.load %arg6[%c96, %c0_59] : memref<384x256xbf16, #tpu.memory_space<vmem>>, vector<32x128xbf16>
    %cst_60 = arith.constant dense<0.000000e+00> : vector<256x128xf32>
    %110 = tpu.matmul %107, %109, %cst_60 {dimension_numbers = #tpu.dot_dimension_numbers<[0], [0], [1], [1], [0, 1, 1, 1], [], []>} : vector<32x256xbf16>, vector<32x128xbf16>, vector<256x128xf32> -> vector<256x128xf32>
    %cst_61 = arith.constant dense<0xFF800000> : vector<128xf32>
    %111 = vector.multi_reduction <maximumf>, %110, %cst_61 [0] : vector<256x128xf32> to vector<128xf32>
    %112 = vector.shape_cast %111 : vector<128xf32> to vector<1x128xf32>
    %113 = vector.broadcast %112 : vector<1x128xf32> to vector<256x128xf32>
    %114 = arith.subf %110, %113 : vector<256x128xf32>
    %115 = math.exp %114 : vector<256x128xf32>
    %cst_62 = arith.constant dense<0.000000e+00> : vector<128xf32>
    %116 = vector.multi_reduction <add>, %115, %cst_62 [0] : vector<256x128xf32> to vector<128xf32>
    %117 = vector.shape_cast %116 : vector<128xf32> to vector<1x128xf32>
    %118 = tpu.reciprocal %117 : vector<1x128xf32> -> vector<1x128xf32>
    %119 = vector.broadcast %118 : vector<1x128xf32> to vector<256x128xf32>
    %120 = arith.mulf %115, %119 : vector<256x128xf32>
    %121 = arith.truncf %120 : vector<256x128xf32> to vector<256x128xbf16>
    %cst_63 = arith.constant dense<0.000000e+00> : vector<32x128xf32>
    %122 = tpu.matmul %108, %121, %cst_63 {dimension_numbers = #tpu.dot_dimension_numbers<[1], [0], [0], [1], [0, 0, 1, 1], [], []>} : vector<32x256xbf16>, vector<256x128xbf16>, vector<32x128xf32> -> vector<32x128xf32>
    %123 = arith.truncf %122 : vector<32x128xf32> to vector<32x128xbf16>
    %c96_64 = arith.constant 96 : index
    %c0_65 = arith.constant 0 : index
    %124 = vector.load %arg7[%c96_64, %c0_65] : memref<128x256xbf16, #tpu.memory_space<vmem>>, vector<32x128xbf16>
    tpu.vector_store %arg7[%c96_64, %c0_65], %123 {strides = array<i32>} : memref<128x256xbf16, #tpu.memory_space<vmem>>, vector<32x128xbf16>,
    %c96_66 = arith.constant 96 : index
    %c128_67 = arith.constant 128 : index
    %125 = vector.load %arg6[%c96_66, %c128_67] : memref<384x256xbf16, #tpu.memory_space<vmem>>, vector<32x128xbf16>
    %cst_68 = arith.constant dense<0.000000e+00> : vector<256x128xf32>
    %126 = tpu.matmul %107, %125, %cst_68 {dimension_numbers = #tpu.dot_dimension_numbers<[0], [0], [1], [1], [0, 1, 1, 1], [], []>} : vector<32x256xbf16>, vector<32x128xbf16>, vector<256x128xf32> -> vector<256x128xf32>
    %cst_69 = arith.constant dense<0xFF800000> : vector<128xf32>
    %127 = vector.multi_reduction <maximumf>, %126, %cst_69 [0] : vector<256x128xf32> to vector<128xf32>
    %128 = vector.shape_cast %127 : vector<128xf32> to vector<1x128xf32>
    %129 = vector.broadcast %128 : vector<1x128xf32> to vector<256x128xf32>
    %130 = arith.subf %126, %129 : vector<256x128xf32>
    %131 = math.exp %130 : vector<256x128xf32>
    %cst_70 = arith.constant dense<0.000000e+00> : vector<128xf32>
    %132 = vector.multi_reduction <add>, %131, %cst_70 [0] : vector<256x128xf32> to vector<128xf32>
    %133 = vector.shape_cast %132 : vector<128xf32> to vector<1x128xf32>
    %134 = tpu.reciprocal %133 : vector<1x128xf32> -> vector<1x128xf32>
    %135 = vector.broadcast %134 : vector<1x128xf32> to vector<256x128xf32>
    %136 = arith.mulf %131, %135 : vector<256x128xf32>
    %137 = arith.truncf %136 : vector<256x128xf32> to vector<256x128xbf16>
    %cst_71 = arith.constant dense<0.000000e+00> : vector<32x128xf32>
    %138 = tpu.matmul %108, %137, %cst_71 {dimension_numbers = #tpu.dot_dimension_numbers<[1], [0], [0], [1], [0, 0, 1, 1], [], []>} : vector<32x256xbf16>, vector<256x128xbf16>, vector<32x128xf32> -> vector<32x128xf32>
    %139 = arith.truncf %138 : vector<32x128xf32> to vector<32x128xbf16>
    %c96_72 = arith.constant 96 : index
    %c128_73 = arith.constant 128 : index
    %140 = vector.load %arg7[%c96_72, %c128_73] : memref<128x256xbf16, #tpu.memory_space<vmem>>, vector<32x128xbf16>
    tpu.vector_store %arg7[%c96_72, %c128_73], %139 {strides = array<i32>} : memref<128x256xbf16, #tpu.memory_space<vmem>>, vector<32x128xbf16>,
    %c0_74 = arith.constant 0 : index
    %c0_75 = arith.constant 0 : index
    %141 = vector.load %arg3[%c0_74, %c0_75] : memref<4x128xbf16, #tpu.memory_space<vmem>>, vector<4x128xbf16>
    %c0_76 = arith.constant 0 : index
    %c0_77 = arith.constant 0 : index
    %142 = vector.load %arg7[%c0_76, %c0_77] : memref<128x256xbf16, #tpu.memory_space<vmem>>, vector<128x256xbf16>
    %cst_78 = arith.constant dense<0.000000e+00> : vector<4x256xf32>
    %143 = tpu.matmul %141, %142, %cst_78 {dimension_numbers = #tpu.dot_dimension_numbers<[1], [0], [0], [1], [0, 0, 1, 1], [], []>} : vector<4x128xbf16>, vector<128x256xbf16>, vector<4x256xf32> -> vector<4x256xf32>
    %c0_79 = arith.constant 0 : index
    %c0_80 = arith.constant 0 : index
    %144 = vector.load %arg4[%c0_79, %c0_80] : memref<4x1xf32, #tpu.memory_space<vmem>>, vector<4x1xf32>
    %145 = vector.broadcast %144 : vector<4x1xf32> to vector<4x256xf32>
    %146 = arith.addf %143, %145 : vector<4x256xf32>
    %c0_81 = arith.constant 0 : index
    %c0_82 = arith.constant 0 : index
    %147 = vector.load %arg5[%c0_81, %c0_82] : memref<4x256xf32, #tpu.memory_space<vmem>>, vector<4x256xf32>
    tpu.vector_store %arg5[%c0_81, %c0_82], %146 {strides = array<i32>} : memref<4x256xf32, #tpu.memory_space<vmem>>, vector<4x256xf32>,
    return
  }
  func.func @transform_0(%arg0: i32) -> (i32, i32) {
    %c0_i32 = arith.constant 0 : i32
    %c0_i32_0 = arith.constant 0 : i32
    return %c0_i32, %arg0 : i32, i32
  }
  func.func @transform_1(%arg0: i32) -> (i32, i32) {
    %c0_i32 = arith.constant 0 : i32
    %c0_i32_0 = arith.constant 0 : i32
    %c0_i32_1 = arith.constant 0 : i32
    return %c0_i32, %c0_i32_0 : i32, i32
  }
  func.func @transform_2(%arg0: i32) -> (i32, i32) {
    %c0_i32 = arith.constant 0 : i32
    %c0_i32_0 = arith.constant 0 : i32
    %c0_i32_1 = arith.constant 0 : i32
    return %c0_i32, %c0_i32_0 : i32, i32
  }
  func.func @transform_3(%arg0: i32) -> (i32, i32) {
    %c0_i32 = arith.constant 0 : i32
    %c0_i32_0 = arith.constant 0 : i32
    %c0_i32_1 = arith.constant 0 : i32
    return %c0_i32, %c0_i32_0 : i32, i32
  }
  func.func @transform_4(%arg0: i32) -> (i32, i32) {
    %c0_i32 = arith.constant 0 : i32
    %c0_i32_0 = arith.constant 0 : i32
    return %c0_i32, %arg0 : i32, i32
  }
}

</mosaic_0001>

<llo_original>
// kernel: attention_forward.1
$region0: #{attention_forward.1}
  #allocation0 [shape = 'u32[]', space=smem, size = 0x4, offset = 0x4, fixed_abs, tag = 'smem constant byte address 0x4 - core index']
  #allocation1 [shape = 'u32[72,128]{1,0:T(1,128)}', space=vmem, size = 0x9000, scoped, tag = 'internal scratch']
  #allocation2 [shape = 'bf16[384,256]{1,0:T(8,128)(2,1)}', space=vmem, size = 0x30000, scoped, tag = 'scratch operand']
  #allocation3 [shape = 'bf16[128,256]{1,0:T(8,128)(2,1)}', space=vmem, size = 0x10000, scoped, tag = 'scratch operand']
  %s0 = inlined_call_operand.vmem [shape: f32[4,512], index: 0, kind: input, shape index: {}]
  %s1 = inlined_call_operand.vmem [shape: f32[384,4], index: 1, kind: input, shape index: {}]
  %s2 = inlined_call_operand.vmem [shape: bf16[4,128], index: 2, kind: input, shape index: {}]
  %s3 = inlined_call_operand.vmem [shape: f32[4,1], index: 3, kind: input, shape index: {}]
  %s4 = inlined_call_operand.vmem [shape: f32[4,512], index: 4, kind: output, shape index: {}]
  %s5 = sld [smem:[#allocation0]]
  $region49: #{attention_forward.1} parent=0
    _
  %s7 = ssub.s32 1, %s5
  %s8 = scalar_select 0, %s7, %s5
  loop: start=0, step=1, limit=4
  $region2: #{attention_forward.1} parent=0 // loop_pre_header
    _
  $region3: #{attention_forward.1} parent=0 // loop_header
    %s10 = sphi 0, %s14
    %p11 = scmp.ge.s32.totalorder %s10, 4
    %s20 = sphi 0, %s22
    %s23 = sphi 0, %s20
    %s24 = sphi 0, %s23
    %s40 = sphi 0, %s24
    %s44 = sphi 0, %s44
    %s46 = sphi 0, %s44
    %s47 = sphi 0, %s46
    %s61 = sphi 0, %s47
    %s65 = sphi 0, %s65
    %s67 = sphi 0, %s65
    %s68 = sphi 0, %s67
    %s82 = sphi 0, %s68
    %s86 = sphi 0, %s86
    %s88 = sphi 0, %s86
    %s89 = sphi 0, %s88
    %s103 = sphi 0, %s89
    %s109 = sphi 0, %s111
    %s112 = sphi 0, %s109
    %s113 = sphi 0, %s112
    %s129 = sphi 0, %s113
  $region4: #{attention_forward.1} parent=0 // loop_header_branch
    %13 = sbr.rel (%p11) target = $region8
  $region5: #{attention_forward.1} parent=0 // loop_body
    %s15 = ssub.s32 %s10, 1
    %s16 = ssub.s32 %s10, 2
    %s17 = sadd.s32 %s10, 1
    %s18 = ssub.s32 %s10, %s17
    %p19 = scmp.eq.s32.totalorder %s18, 0
    %s21 = sadd.s32 %s20, 1
    %s22 = scalar_select %p19, %s20, %s21
    %p25 = pneg %p19
    %p26 = scmp.eq.s32.totalorder %s10, 1
    %p27 = por %p25, %p26
    %p28 = scmp.ne.s32.totalorder %s20, %s23
    %p29 = scmp.eq.s32.totalorder %s10, 0
    %p30 = por %p28, %p29
    %p31 = scmp.ne.s32.totalorder %s20, %s23
    %p32 = scmp.eq.s32.totalorder %s15, 1
    %p33 = por %p31, %p32
    %p34 = scmp.ne.s32.totalorder %s23, %s24
    %p35 = scmp.eq.s32.totalorder %s15, 0
    %p36 = por %p34, %p35
    %p37 = scmp.ne.s32.totalorder %s23, %s24
    %p38 = scmp.eq.s32.totalorder %s16, 1
    %p39 = por %p37, %p38
    %p41 = scmp.ne.s32.totalorder %s24, %s40
    %p42 = scmp.eq.s32.totalorder %s16, 0
    %p43 = por %p41, %p42
    %s45 = sadd.s32 %s44, 1
    %p48 = scmp.eq.s32.totalorder %s10, 1
    %p49 = scmp.ne.s32.totalorder %s44, %s46
    %p50 = scmp.eq.s32.totalorder %s10, 0
    %p51 = por %p49, %p50
    %p52 = scmp.ne.s32.totalorder %s44, %s46
    %p53 = scmp.eq.s32.totalorder %s15, 1
    %p54 = por %p52, %p53
    %p55 = scmp.ne.s32.totalorder %s46, %s47
    %p56 = scmp.eq.s32.totalorder %s15, 0
    %p57 = por %p55, %p56
    %p58 = scmp.ne.s32.totalorder %s46, %s47
    %p59 = scmp.eq.s32.totalorder %s16, 1
    %p60 = por %p58, %p59
    %p62 = scmp.ne.s32.totalorder %s47, %s61
    %p63 = scmp.eq.s32.totalorder %s16, 0
    %p64 = por %p62, %p63
    %s66 = sadd.s32 %s65, 1
    %p69 = scmp.eq.s32.totalorder %s10, 1
    %p70 = scmp.ne.s32.totalorder %s65, %s67
    %p71 = scmp.eq.s32.totalorder %s10, 0
    %p72 = por %p70, %p71
    %p73 = scmp.ne.s32.totalorder %s65, %s67
    %p74 = scmp.eq.s32.totalorder %s15, 1
    %p75 = por %p73, %p74
    %p76 = scmp.ne.s32.totalorder %s67, %s68
    %p77 = scmp.eq.s32.totalorder %s15, 0
    %p78 = por %p76, %p77
    %p79 = scmp.ne.s32.totalorder %s67, %s68
    %p80 = scmp.eq.s32.totalorder %s16, 1
    %p81 = por %p79, %p80
    %p83 = scmp.ne.s32.totalorder %s68, %s82
    %p84 = scmp.eq.s32.totalorder %s16, 0
    %p85 = por %p83, %p84
    %s87 = sadd.s32 %s86, 1
    %p90 = scmp.eq.s32.totalorder %s10, 1
    %p91 = scmp.ne.s32.totalorder %s86, %s88
    %p92 = scmp.eq.s32.totalorder %s10, 0
    %p93 = por %p91, %p92
    %p94 = scmp.ne.s32.totalorder %s86, %s88
    %p95 = scmp.eq.s32.totalorder %s15, 1
    %p96 = por %p94, %p95
    %p97 = scmp.ne.s32.totalorder %s88, %s89
    %p98 = scmp.eq.s32.totalorder %s15, 0
    %p99 = por %p97, %p98
    %p100 = scmp.ne.s32.totalorder %s88, %s89
    %p101 = scmp.eq.s32.totalorder %s16, 1
    %p102 = por %p100, %p101
    %p104 = scmp.ne.s32.totalorder %s89, %s103
    %p105 = scmp.eq.s32.totalorder %s16, 0
    %p106 = por %p104, %p105
    %s107 = ssub.s32 %s10, %s17
    %p108 = scmp.eq.s32.totalorder %s107, 0
    %s110 = sadd.s32 %s109, 1
    %s111 = scalar_select %p108, %s109, %s110
    %p114 = pneg %p108
    %p115 = scmp.eq.s32.totalorder %s10, 1
    %p116 = por %p114, %p115
    %p117 = scmp.ne.s32.totalorder %s109, %s112
    %p118 = scmp.eq.s32.totalorder %s10, 0
    %p119 = por %p117, %p118
    %p120 = scmp.ne.s32.totalorder %s109, %s112
    %p121 = scmp.eq.s32.totalorder %s15, 1
    %p122 = por %p120, %p121
    %p123 = scmp.ne.s32.totalorder %s112, %s113
    %p124 = scmp.eq.s32.totalorder %s15, 0
    %p125 = por %p123, %p124
    %p126 = scmp.ne.s32.totalorder %s112, %s113
    %p127 = scmp.eq.s32.totalorder %s16, 1
    %p128 = por %p126, %p127
    %p130 = scmp.ne.s32.totalorder %s113, %s129
    %p131 = scmp.eq.s32.totalorder %s16, 0
    %p132 = por %p130, %p131
    %p133 = scmp.le.s32.totalorder 1, %s10
    %p134 = scmp.lt.s32.totalorder %s10, 3
    %p135 = pnand %p133, %p134
    %p136 = pneg %p135
    // Predicated region
    $region9: #{attention_forward.1} parent=5 // pred_check
      _
    $region10: #{attention_forward.1} parent=5 // pred_check_branch
      %138 = sbr.rel (%p135) target = $region12
    $region11: #{attention_forward.1} parent=5 // pred_region
      %s139 = ssub.s32 %s10, 1
      // Predicated region
      $region13: #{attention_forward.1} parent=11 // pred_check
        %p140 = pneg %p57
      $region14: #{attention_forward.1} parent=11 // pred_check_branch
        %142 = sbr.rel (%p140) target = $region16
      $region15: #{attention_forward.1} parent=11 // pred_region
        _
      $region16: #{attention_forward.1} parent=11 // pred_fallthru
        _
      // Predicated region
      $region17: #{attention_forward.1} parent=11 // pred_check
        %p143 = pneg %p78
      $region18: #{attention_forward.1} parent=11 // pred_check_branch
        %145 = sbr.rel (%p143) target = $region20
      $region19: #{attention_forward.1} parent=11 // pred_region
        _
      $region20: #{attention_forward.1} parent=11 // pred_fallthru
        _
      // Predicated region
      $region21: #{attention_forward.1} parent=11 // pred_check
        %p146 = pneg %p99
      $region22: #{attention_forward.1} parent=11 // pred_check_branch
        %148 = sbr.rel (%p146) target = $region24
      $region23: #{attention_forward.1} parent=11 // pred_region
        _
      $region24: #{attention_forward.1} parent=11 // pred_fallthru
        _
    $region12: #{attention_forward.1} parent=5 // pred_fallthru
      _
    %p149 = scmp.lt.s32.totalorder %s10, 2
    // Predicated region
    $region25: #{attention_forward.1} parent=5 // pred_check
      %p150 = pneg %p149
    $region26: #{attention_forward.1} parent=5 // pred_check_branch
      %152 = sbr.rel (%p150) target = $region28
    $region27: #{attention_forward.1} parent=5 // pred_region
      // Predicated region
      $region29: #{attention_forward.1} parent=27 // pred_check
        %p153 = pneg %p30
      $region30: #{attention_forward.1} parent=27 // pred_check_branch
        %155 = sbr.rel (%p153) target = $region32
      $region31: #{attention_forward.1} parent=27 // pred_region
        %s156 = smul.u32 2, %s10
        %p157 = scmp.lt.s32.totalorder %s156, 3
        %s158 = scalar_select %p157, %s156, 3
        %s159 = smul.addr %s158, 4
        %s160 = scalar_lea.vmem %s0, %s159
        %s161 = smul.u32 2, %s10
      $region32: #{attention_forward.1} parent=27 // pred_fallthru
        _
    $region28: #{attention_forward.1} parent=5 // pred_fallthru
      _
    %p162 = scmp.le.s32.totalorder 1, %s10
    %p163 = scmp.lt.s32.totalorder %s10, 3
    %p164 = pnand %p162, %p163
    %p165 = pneg %p164
    // Predicated region
    $region33: #{attention_forward.1} parent=5 // pred_check
      _
    $region34: #{attention_forward.1} parent=5 // pred_check_branch
      %167 = sbr.rel (%p164) target = $region36
    $region35: #{attention_forward.1} parent=5 // pred_region
      %s168 = ssub.s32 %s10, 1
      %s169 = smul.u32 2, %s15
      %p170 = scmp.lt.s32.totalorder %s169, 3
      %s171 = scalar_select %p170, %s169, 3
      %s172 = smul.addr %s171, 4
      %s173 = scalar_lea.vmem %s0, %s172
      %p174 = pneg %p36
      %p175 = pneg %p33
      %p176 = pneg %p57
      %p177 = pneg %p54
      %p178 = pneg %p78
      %p179 = pneg %p75
      %p180 = pneg %p99
      %p181 = pneg %p96
      %p182 = pneg %p125
      %p183 = pneg %p122
      %s184 = smul.u32 2, %s15
      %p185 = scmp.lt.s32.totalorder %s184, 3
      %s186 = scalar_select %p185, %s184, 3
      %s187 = smul.addr %s186, 4
      %s188 = scalar_lea.vmem %s4, %s187
      %s189 = smul.u32 2, %s15
      %p190 = scmp.lt.s32.totalorder %s189, 3
      %s191 = scalar_select %p190, %s189, 3
      %s192 = smul.addr %s191, 4
      %s193 = scalar_lea.vmem %s0, %s192
      %s194 = smul.u32 2, %s15
      %s195 = smul.u32 2, %s15
      %p196 = scmp.lt.s32.totalorder %s195, 3
      %s197 = scalar_select %p196, %s195, 3
      %s198 = smul.addr %s197, 4
      %s199 = scalar_lea.vmem %s4, %s198
      %s200 = smul.u32 2, %s15
      %v202 = vld [vmem:[%s1] sm:$0xff]
      %v203 = vld [vmem:[%s1 + $0x8] sm:$0xff]
      %v204 = vld [vmem:[%s1 + $0x10] sm:$0xff]
      %v205 = vld [vmem:[%s1 + $0x18] sm:$0xff]
      %v206 = vld [vmem:[%s1 + $0x20] sm:$0xff]
      %v207 = vld [vmem:[%s1 + $0x28] sm:$0xff]
      %v208 = vld [vmem:[%s1 + $0x30] sm:$0xff]
      %v209 = vld [vmem:[%s1 + $0x38] sm:$0xff]
      %v210 = vld [vmem:[%s1 + $0x40] sm:$0xff]
      %v211 = vld [vmem:[%s1 + $0x48] sm:$0xff]
      %v212 = vld [vmem:[%s1 + $0x50] sm:$0xff]
      %v213 = vld [vmem:[%s1 + $0x58] sm:$0xff]
      %v214 = vld [vmem:[%s1 + $0x60] sm:$0xff]
      %v215 = vld [vmem:[%s1 + $0x68] sm:$0xff]
      %v216 = vld [vmem:[%s1 + $0x70] sm:$0xff]
      %v217 = vld [vmem:[%s1 + $0x78] sm:$0xff]
      %v218 = vld [vmem:[%s1 + $0x80] sm:$0xff]
      %v219 = vld [vmem:[%s1 + $0x88] sm:$0xff]
      %v220 = vld [vmem:[%s1 + $0x90] sm:$0xff]
      %v221 = vld [vmem:[%s1 + $0x98] sm:$0xff]
      %v222 = vld [vmem:[%s1 + $0xa0] sm:$0xff]
      %v223 = vld [vmem:[%s1 + $0xa8] sm:$0xff]
      %v224 = vld [vmem:[%s1 + $0xb0] sm:$0xff]
      %v225 = vld [vmem:[%s1 + $0xb8] sm:$0xff]
      %v226 = vld [vmem:[%s1 + $0xc0] sm:$0xff]
      %v227 = vld [vmem:[%s1 + $0xc8] sm:$0xff]
      %v228 = vld [vmem:[%s1 + $0xd0] sm:$0xff]
      %v229 = vld [vmem:[%s1 + $0xd8] sm:$0xff]
      %v230 = vld [vmem:[%s1 + $0xe0] sm:$0xff]
      %v231 = vld [vmem:[%s1 + $0xe8] sm:$0xff]
      %v232 = vld [vmem:[%s1 + $0xf0] sm:$0xff]
      %v233 = vld [vmem:[%s1 + $0xf8] sm:$0xff]
      %v234 = vld [vmem:[%s1 + $0x100] sm:$0xff]
      %v235 = vld [vmem:[%s1 + $0x108] sm:$0xff]
      %v236 = vld [vmem:[%s1 + $0x110] sm:$0xff]
      %v237 = vld [vmem:[%s1 + $0x118] sm:$0xff]
      %v238 = vld [vmem:[%s1 + $0x120] sm:$0xff]
      %v239 = vld [vmem:[%s1 + $0x128] sm:$0xff]
      %v240 = vld [vmem:[%s1 + $0x130] sm:$0xff]
      %v241 = vld [vmem:[%s1 + $0x138] sm:$0xff]
      %v242 = vld [vmem:[%s1 + $0x140] sm:$0xff]
      %v243 = vld [vmem:[%s1 + $0x148] sm:$0xff]
      %v244 = vld [vmem:[%s1 + $0x150] sm:$0xff]
      %v245 = vld [vmem:[%s1 + $0x158] sm:$0xff]
      %v246 = vld [vmem:[%s1 + $0x160] sm:$0xff]
      %v247 = vld [vmem:[%s1 + $0x168] sm:$0xff]
      %v248 = vld [vmem:[%s1 + $0x170] sm:$0xff]
      %v249 = vld [vmem:[%s1 + $0x178] sm:$0xff]
      %v250 = vld [vmem:[%s193] sm:$0xff]
      %252 = vst [vmem:[#allocation1] ss:$2 sm:$0xff] %v250
      %v253 = vld.sshfl [vmem:[#allocation1] sm:$0xff pattern:$0x75316420]
      %v254 = vld.sshfl [vmem:[#allocation1 + $0x8] sm:$0xff pattern:$0x75316420]
      %vm255 = vcmask 31744
      %v257 = vsel %vm255, %v202, 0
      %v260 = vsel %vm255, %v203, 0
      %v263 = vsel %vm255, %v204, 0
      %v266 = vsel %vm255, %v205, 0
      %v269 = vsel %vm255, %v206, 0
      %v272 = vsel %vm255, %v207, 0
      %v275 = vsel %vm255, %v208, 0
      %v278 = vsel %vm255, %v209, 0
      %v281 = vsel %vm255, %v210, 0
      %v284 = vsel %vm255, %v211, 0
      %v287 = vsel %vm255, %v212, 0
      %v290 = vsel %vm255, %v213, 0
      %v293 = vsel %vm255, %v214, 0
      %v296 = vsel %vm255, %v215, 0
      %v299 = vsel %vm255, %v216, 0
      %v302 = vsel %vm255, %v217, 0
      %v305 = vsel %vm255, %v218, 0
      %v308 = vsel %vm255, %v219, 0
      %v311 = vsel %vm255, %v220, 0
      %v314 = vsel %vm255, %v221, 0
      %v317 = vsel %vm255, %v222, 0
      %v320 = vsel %vm255, %v223, 0
      %v323 = vsel %vm255, %v224, 0
      %v326 = vsel %vm255, %v225, 0
      %v329 = vsel %vm255, %v226, 0
      %v332 = vsel %vm255, %v227, 0
      %v335 = vsel %vm255, %v228, 0
      %v338 = vsel %vm255, %v229, 0
      %v341 = vsel %vm255, %v230, 0
      %v344 = vsel %vm255, %v231, 0
      %v347 = vsel %vm255, %v232, 0
      %v350 = vsel %vm255, %v233, 0
      %v353 = vsel %vm255, %v234, 0
      %v356 = vsel %vm255, %v235, 0
      %v359 = vsel %vm255, %v236, 0
      %v362 = vsel %vm255, %v237, 0
      %v365 = vsel %vm255, %v238, 0
      %v368 = vsel %vm255, %v239, 0
      %v371 = vsel %vm255, %v240, 0
      %v374 = vsel %vm255, %v241, 0
      %v377 = vsel %vm255, %v242, 0
      %v380 = vsel %vm255, %v243, 0
      %v383 = vsel %vm255, %v244, 0
      %v386 = vsel %vm255, %v245, 0
      %v389 = vsel %vm255, %v246, 0
      %v392 = vsel %vm255, %v247, 0
      %v395 = vsel %vm255, %v248, 0
      %v398 = vsel %vm255, %v249, 0
      %vm400 = vcmask 1043456
      %v401 = vsel %vm400, %v253, 0
      %v403 = vsel %vm400, %v254, 0
      %405 = vmatpush.msra.mxu0 0.0
      %406 = vmatpush.msra.mxu0 0.0
      %407 = vmatpush.msra.mxu0 0.0
      %408 = vmatpush.msra.mxu0 0.0
      %409 = vmatpush.msra.mxu0 0.0
      %410 = vmatpush.msra.mxu0 0.0
      %411 = vmatpush.msra.mxu0 0.0
      %412 = vmatpush.msra.mxu0 0.0
      %413 = vmatpush.msra.mxu0 0.0
      %414 = vmatpush.msra.mxu0 0.0
      %415 = vmatpush.msra.mxu0 0.0
      %416 = vmatpush.msra.mxu0 0.0
      %417 = vmatpush.msra.mxu0 0.0
      %418 = vmatpush.msra.mxu0 0.0
      %419 = vmatpush.msra.mxu0 0.0
      %420 = vmatpush.msra.mxu0 %v401
      %421 = vmatmul.f32.gmra.mxu0 %v257
      %v422 = vpop.f32.mrf.mxu0
      %v423 = vadd.f32 0.0, %v422
      %424 = vmatmul.f32.gmra.mxu0 %v260
      %v425 = vpop.f32.mrf.mxu0
      %v426 = vadd.f32 0.0, %v425
      %427 = vmatmul.f32.gmra.mxu0 %v263
      %v428 = vpop.f32.mrf.mxu0
      %v429 = vadd.f32 0.0, %v428
      %430 = vmatmul.f32.gmra.mxu0 %v266
      %v431 = vpop.f32.mrf.mxu0
      %v432 = vadd.f32 0.0, %v431
      %433 = vmatmul.f32.gmra.mxu0 %v269
      %v434 = vpop.f32.mrf.mxu0
      %v435 = vadd.f32 0.0, %v434
      %436 = vmatmul.f32.gmra.mxu0 %v272
      %v437 = vpop.f32.mrf.mxu0
      %v438 = vadd.f32 0.0, %v437
      %439 = vmatmul.f32.gmra.mxu0 %v275
      %v440 = vpop.f32.mrf.mxu0
      %v441 = vadd.f32 0.0, %v440
      %442 = vmatmul.f32.gmra.mxu0 %v278
      %v443 = vpop.f32.mrf.mxu0
      %v444 = vadd.f32 0.0, %v443
      %445 = vmatmul.f32.gmra.mxu0 %v281
      %v446 = vpop.f32.mrf.mxu0
      %v447 = vadd.f32 0.0, %v446
      %448 = vmatmul.f32.gmra.mxu0 %v284
      %v449 = vpop.f32.mrf.mxu0
      %v450 = vadd.f32 0.0, %v449
      %451 = vmatmul.f32.gmra.mxu0 %v287
      %v452 = vpop.f32.mrf.mxu0
      %v453 = vadd.f32 0.0, %v452
      %454 = vmatmul.f32.gmra.mxu0 %v290
      %v455 = vpop.f32.mrf.mxu0
      %v456 = vadd.f32 0.0, %v455
      %457 = vmatmul.f32.gmra.mxu0 %v293
      %v458 = vpop.f32.mrf.mxu0
      %v459 = vadd.f32 0.0, %v458
      %460 = vmatmul.f32.gmra.mxu0 %v296
      %v461 = vpop.f32.mrf.mxu0
      %v462 = vadd.f32 0.0, %v461
      %463 = vmatmul.f32.gmra.mxu0 %v299
      %v464 = vpop.f32.mrf.mxu0
      %v465 = vadd.f32 0.0, %v464
      %466 = vmatmul.f32.gmra.mxu0 %v302
      %v467 = vpop.f32.mrf.mxu0
      %v468 = vadd.f32 0.0, %v467
      %469 = vmatmul.f32.gmra.mxu0 %v305
      %v470 = vpop.f32.mrf.mxu0
      %v471 = vadd.f32 0.0, %v470
      %472 = vmatmul.f32.gmra.mxu0 %v308
      %v473 = vpop.f32.mrf.mxu0
      %v474 = vadd.f32 0.0, %v473
      %475 = vmatmul.f32.gmra.mxu0 %v311
      %v476 = vpop.f32.mrf.mxu0
      %v477 = vadd.f32 0.0, %v476
      %478 = vmatmul.f32.gmra.mxu0 %v314
      %v479 = vpop.f32.mrf.mxu0
      %v480 = vadd.f32 0.0, %v479
      %481 = vmatmul.f32.gmra.mxu0 %v317
      %v482 = vpop.f32.mrf.mxu0
      %v483 = vadd.f32 0.0, %v482
      %484 = vmatmul.f32.gmra.mxu0 %v320
      %v485 = vpop.f32.mrf.mxu0
      %v486 = vadd.f32 0.0, %v485
      %487 = vmatmul.f32.gmra.mxu0 %v323
      %v488 = vpop.f32.mrf.mxu0
      %v489 = vadd.f32 0.0, %v488
      %490 = vmatmul.f32.gmra.mxu0 %v326
      %v491 = vpop.f32.mrf.mxu0
      %v492 = vadd.f32 0.0, %v491
      %493 = vmatmul.f32.gmra.mxu0 %v329
      %v494 = vpop.f32.mrf.mxu0
      %v495 = vadd.f32 0.0, %v494
      %496 = vmatmul.f32.gmra.mxu0 %v332
      %v497 = vpop.f32.mrf.mxu0
      %v498 = vadd.f32 0.0, %v497
      %499 = vmatmul.f32.gmra.mxu0 %v335
      %v500 = vpop.f32.mrf.mxu0
      %v501 = vadd.f32 0.0, %v500
      %502 = vmatmul.f32.gmra.mxu0 %v338
      %v503 = vpop.f32.mrf.mxu0
      %v504 = vadd.f32 0.0, %v503
      %505 = vmatmul.f32.gmra.mxu0 %v341
      %v506 = vpop.f32.mrf.mxu0
      %v507 = vadd.f32 0.0, %v506
      %508 = vmatmul.f32.gmra.mxu0 %v344
      %v509 = vpop.f32.mrf.mxu0
      %v510 = vadd.f32 0.0, %v509
      %511 = vmatmul.f32.gmra.mxu0 %v347
      %v512 = vpop.f32.mrf.mxu0
      %v513 = vadd.f32 0.0, %v512
      %514 = vmatmul.f32.gmra.mxu0 %v350
      %v515 = vpop.f32.mrf.mxu0
      %v516 = vadd.f32 0.0, %v515
      %517 = vmatmul.f32.gmra.mxu0 %v353
      %v518 = vpop.f32.mrf.mxu0
      %v519 = vadd.f32 0.0, %v518
      %520 = vmatmul.f32.gmra.mxu0 %v356
      %v521 = vpop.f32.mrf.mxu0
      %v522 = vadd.f32 0.0, %v521
      %523 = vmatmul.f32.gmra.mxu0 %v359
      %v524 = vpop.f32.mrf.mxu0
      %v525 = vadd.f32 0.0, %v524
      %526 = vmatmul.f32.gmra.mxu0 %v362
      %v527 = vpop.f32.mrf.mxu0
      %v528 = vadd.f32 0.0, %v527
      %529 = vmatmul.f32.gmra.mxu0 %v365
      %v530 = vpop.f32.mrf.mxu0
      %v531 = vadd.f32 0.0, %v530
      %532 = vmatmul.f32.gmra.mxu0 %v368
      %v533 = vpop.f32.mrf.mxu0
      %v534 = vadd.f32 0.0, %v533
      %535 = vmatmul.f32.gmra.mxu0 %v371
      %v536 = vpop.f32.mrf.mxu0
      %v537 = vadd.f32 0.0, %v536
      %538 = vmatmul.f32.gmra.mxu0 %v374
      %v539 = vpop.f32.mrf.mxu0
      %v540 = vadd.f32 0.0, %v539
      %541 = vmatmul.f32.gmra.mxu0 %v377
      %v542 = vpop.f32.mrf.mxu0
      %v543 = vadd.f32 0.0, %v542
      %544 = vmatmul.f32.gmra.mxu0 %v380
      %v545 = vpop.f32.mrf.mxu0
      %v546 = vadd.f32 0.0, %v545
      %547 = vmatmul.f32.gmra.mxu0 %v383
      %v548 = vpop.f32.mrf.mxu0
      %v549 = vadd.f32 0.0, %v548
      %550 = vmatmul.f32.gmra.mxu0 %v386
      %v551 = vpop.f32.mrf.mxu0
      %v552 = vadd.f32 0.0, %v551
      %553 = vmatmul.f32.gmra.mxu0 %v389
      %v554 = vpop.f32.mrf.mxu0
      %v555 = vadd.f32 0.0, %v554
      %556 = vmatmul.f32.gmra.mxu0 %v392
      %v557 = vpop.f32.mrf.mxu0
      %v558 = vadd.f32 0.0, %v557
      %559 = vmatmul.f32.gmra.mxu0 %v395
      %v560 = vpop.f32.mrf.mxu0
      %v561 = vadd.f32 0.0, %v560
      %562 = vmatmul.f32.gmra.mxu0 %v398
      %v563 = vpop.f32.mrf.mxu0
      %v564 = vadd.f32 0.0, %v563
      %565 = vdwg.mxu0
      %566 = vmatpush.msra.mxu0 0.0
      %567 = vmatpush.msra.mxu0 0.0
      %568 = vmatpush.msra.mxu0 0.0
      %569 = vmatpush.msra.mxu0 0.0
      %570 = vmatpush.msra.mxu0 0.0
      %571 = vmatpush.msra.mxu0 0.0
      %572 = vmatpush.msra.mxu0 0.0
      %573 = vmatpush.msra.mxu0 0.0
      %574 = vmatpush.msra.mxu0 0.0
      %575 = vmatpush.msra.mxu0 0.0
      %576 = vmatpush.msra.mxu0 0.0
      %577 = vmatpush.msra.mxu0 0.0
      %578 = vmatpush.msra.mxu0 0.0
      %579 = vmatpush.msra.mxu0 0.0
      %580 = vmatpush.msra.mxu0 0.0
      %581 = vmatpush.msra.mxu0 %v403
      %582 = vmatmul.f32.gmra.mxu0 %v257
      %v583 = vpop.f32.mrf.mxu0
      %v584 = vadd.f32 0.0, %v583
      %585 = vmatmul.f32.gmra.mxu0 %v260
      %v586 = vpop.f32.mrf.mxu0
      %v587 = vadd.f32 0.0, %v586
      %588 = vmatmul.f32.gmra.mxu0 %v263
      %v589 = vpop.f32.mrf.mxu0
      %v590 = vadd.f32 0.0, %v589
      %591 = vmatmul.f32.gmra.mxu0 %v266
      %v592 = vpop.f32.mrf.mxu0
      %v593 = vadd.f32 0.0, %v592
      %594 = vmatmul.f32.gmra.mxu0 %v269
      %v595 = vpop.f32.mrf.mxu0
      %v596 = vadd.f32 0.0, %v595
      %597 = vmatmul.f32.gmra.mxu0 %v272
      %v598 = vpop.f32.mrf.mxu0
      %v599 = vadd.f32 0.0, %v598
      %600 = vmatmul.f32.gmra.mxu0 %v275
      %v601 = vpop.f32.mrf.mxu0
      %v602 = vadd.f32 0.0, %v601
      %603 = vmatmul.f32.gmra.mxu0 %v278
      %v604 = vpop.f32.mrf.mxu0
      %v605 = vadd.f32 0.0, %v604
      %606 = vmatmul.f32.gmra.mxu0 %v281
      %v607 = vpop.f32.mrf.mxu0
      %v608 = vadd.f32 0.0, %v607
      %609 = vmatmul.f32.gmra.mxu0 %v284
      %v610 = vpop.f32.mrf.mxu0
      %v611 = vadd.f32 0.0, %v610
      %612 = vmatmul.f32.gmra.mxu0 %v287
      %v613 = vpop.f32.mrf.mxu0
      %v614 = vadd.f32 0.0, %v613
      %615 = vmatmul.f32.gmra.mxu0 %v290
      %v616 = vpop.f32.mrf.mxu0
      %v617 = vadd.f32 0.0, %v616
      %618 = vmatmul.f32.gmra.mxu0 %v293
      %v619 = vpop.f32.mrf.mxu0
      %v620 = vadd.f32 0.0, %v619
      %621 = vmatmul.f32.gmra.mxu0 %v296
      %v622 = vpop.f32.mrf.mxu0
      %v623 = vadd.f32 0.0, %v622
      %624 = vmatmul.f32.gmra.mxu0 %v299
      %v625 = vpop.f32.mrf.mxu0
      %v626 = vadd.f32 0.0, %v625
      %627 = vmatmul.f32.gmra.mxu0 %v302
      %v628 = vpop.f32.mrf.mxu0
      %v629 = vadd.f32 0.0, %v628
      %630 = vmatmul.f32.gmra.mxu0 %v305
      %v631 = vpop.f32.mrf.mxu0
      %v632 = vadd.f32 0.0, %v631
      %633 = vmatmul.f32.gmra.mxu0 %v308
      %v634 = vpop.f32.mrf.mxu0
      %v635 = vadd.f32 0.0, %v634
      %636 = vmatmul.f32.gmra.mxu0 %v311
      %v637 = vpop.f32.mrf.mxu0
      %v638 = vadd.f32 0.0, %v637
      %639 = vmatmul.f32.gmra.mxu0 %v314
      %v640 = vpop.f32.mrf.mxu0
      %v641 = vadd.f32 0.0, %v640
      %642 = vmatmul.f32.gmra.mxu0 %v317
      %v643 = vpop.f32.mrf.mxu0
      %v644 = vadd.f32 0.0, %v643
      %645 = vmatmul.f32.gmra.mxu0 %v320
      %v646 = vpop.f32.mrf.mxu0
      %v647 = vadd.f32 0.0, %v646
      %648 = vmatmul.f32.gmra.mxu0 %v323
      %v649 = vpop.f32.mrf.mxu0
      %v650 = vadd.f32 0.0, %v649
      %651 = vmatmul.f32.gmra.mxu0 %v326
      %v652 = vpop.f32.mrf.mxu0
      %v653 = vadd.f32 0.0, %v652
      %654 = vmatmul.f32.gmra.mxu0 %v329
      %v655 = vpop.f32.mrf.mxu0
      %v656 = vadd.f32 0.0, %v655
      %657 = vmatmul.f32.gmra.mxu0 %v332
      %v658 = vpop.f32.mrf.mxu0
      %v659 = vadd.f32 0.0, %v658
      %660 = vmatmul.f32.gmra.mxu0 %v335
      %v661 = vpop.f32.mrf.mxu0
      %v662 = vadd.f32 0.0, %v661
      %663 = vmatmul.f32.gmra.mxu0 %v338
      %v664 = vpop.f32.mrf.mxu0
      %v665 = vadd.f32 0.0, %v664
      %666 = vmatmul.f32.gmra.mxu0 %v341
      %v667 = vpop.f32.mrf.mxu0
      %v668 = vadd.f32 0.0, %v667
      %669 = vmatmul.f32.gmra.mxu0 %v344
      %v670 = vpop.f32.mrf.mxu0
      %v671 = vadd.f32 0.0, %v670
      %672 = vmatmul.f32.gmra.mxu0 %v347
      %v673 = vpop.f32.mrf.mxu0
      %v674 = vadd.f32 0.0, %v673
      %675 = vmatmul.f32.gmra.mxu0 %v350
      %v676 = vpop.f32.mrf.mxu0
      %v677 = vadd.f32 0.0, %v676
      %678 = vmatmul.f32.gmra.mxu0 %v353
      %v679 = vpop.f32.mrf.mxu0
      %v680 = vadd.f32 0.0, %v679
      %681 = vmatmul.f32.gmra.mxu0 %v356
      %v682 = vpop.f32.mrf.mxu0
      %v683 = vadd.f32 0.0, %v682
      %684 = vmatmul.f32.gmra.mxu0 %v359
      %v685 = vpop.f32.mrf.mxu0
      %v686 = vadd.f32 0.0, %v685
      %687 = vmatmul.f32.gmra.mxu0 %v362
      %v688 = vpop.f32.mrf.mxu0
      %v689 = vadd.f32 0.0, %v688
      %690 = vmatmul.f32.gmra.mxu0 %v365
      %v691 = vpop.f32.mrf.mxu0
      %v692 = vadd.f32 0.0, %v691
      %693 = vmatmul.f32.gmra.mxu0 %v368
      %v694 = vpop.f32.mrf.mxu0
      %v695 = vadd.f32 0.0, %v694
      %696 = vmatmul.f32.gmra.mxu0 %v371
      %v697 = vpop.f32.mrf.mxu0
      %v698 = vadd.f32 0.0, %v697
      %699 = vmatmul.f32.gmra.mxu0 %v374
      %v700 = vpop.f32.mrf.mxu0
      %v701 = vadd.f32 0.0, %v700
      %702 = vmatmul.f32.gmra.mxu0 %v377
      %v703 = vpop.f32.mrf.mxu0
      %v704 = vadd.f32 0.0, %v703
      %705 = vmatmul.f32.gmra.mxu0 %v380
      %v706 = vpop.f32.mrf.mxu0
      %v707 = vadd.f32 0.0, %v706
      %708 = vmatmul.f32.gmra.mxu0 %v383
      %v709 = vpop.f32.mrf.mxu0
      %v710 = vadd.f32 0.0, %v709
      %711 = vmatmul.f32.gmra.mxu0 %v386
      %v712 = vpop.f32.mrf.mxu0
      %v713 = vadd.f32 0.0, %v712
      %714 = vmatmul.f32.gmra.mxu0 %v389
      %v715 = vpop.f32.mrf.mxu0
      %v716 = vadd.f32 0.0, %v715
      %717 = vmatmul.f32.gmra.mxu0 %v392
      %v718 = vpop.f32.mrf.mxu0
      %v719 = vadd.f32 0.0, %v718
      %720 = vmatmul.f32.gmra.mxu0 %v395
      %v721 = vpop.f32.mrf.mxu0
      %v722 = vadd.f32 0.0, %v721
      %723 = vmatmul.f32.gmra.mxu0 %v398
      %v724 = vpop.f32.mrf.mxu0
      %v725 = vadd.f32 0.0, %v724
      %726 = vdwg.mxu0
      %v727 = vpack.c.bf16 %v584, %v423
      %v728 = vpack.c.bf16 %v587, %v426
      %v729 = vpack.c.bf16 %v590, %v429
      %v730 = vpack.c.bf16 %v593, %v432
      %v731 = vpack.c.bf16 %v596, %v435
      %v732 = vpack.c.bf16 %v599, %v438
      %v733 = vpack.c.bf16 %v602, %v441
      %v734 = vpack.c.bf16 %v605, %v444
      %v735 = vpack.c.bf16 %v608, %v447
      %v736 = vpack.c.bf16 %v611, %v450
      %v737 = vpack.c.bf16 %v614, %v453
      %v738 = vpack.c.bf16 %v617, %v456
      %v739 = vpack.c.bf16 %v620, %v459
      %v740 = vpack.c.bf16 %v623, %v462
      %v741 = vpack.c.bf16 %v626, %v465
      %v742 = vpack.c.bf16 %v629, %v468
      %v743 = vpack.c.bf16 %v632, %v471
      %v744 = vpack.c.bf16 %v635, %v474
      %v745 = vpack.c.bf16 %v638, %v477
      %v746 = vpack.c.bf16 %v641, %v480
      %v747 = vpack.c.bf16 %v644, %v483
      %v748 = vpack.c.bf16 %v647, %v486
      %v749 = vpack.c.bf16 %v650, %v489
      %v750 = vpack.c.bf16 %v653, %v492
      %v751 = vpack.c.bf16 %v656, %v495
      %v752 = vpack.c.bf16 %v659, %v498
      %v753 = vpack.c.bf16 %v662, %v501
      %v754 = vpack.c.bf16 %v665, %v504
      %v755 = vpack.c.bf16 %v668, %v507
      %v756 = vpack.c.bf16 %v671, %v510
      %v757 = vpack.c.bf16 %v674, %v513
      %v758 = vpack.c.bf16 %v677, %v516
      %v759 = vpack.c.bf16 %v680, %v519
      %v760 = vpack.c.bf16 %v683, %v522
      %v761 = vpack.c.bf16 %v686, %v525
      %v762 = vpack.c.bf16 %v689, %v528
      %v763 = vpack.c.bf16 %v692, %v531
      %v764 = vpack.c.bf16 %v695, %v534
      %v765 = vpack.c.bf16 %v698, %v537
      %v766 = vpack.c.bf16 %v701, %v540
      %v767 = vpack.c.bf16 %v704, %v543
      %v768 = vpack.c.bf16 %v707, %v546
      %v769 = vpack.c.bf16 %v710, %v549
      %v770 = vpack.c.bf16 %v713, %v552
      %v771 = vpack.c.bf16 %v716, %v555
      %v772 = vpack.c.bf16 %v719, %v558
      %v773 = vpack.c.bf16 %v722, %v561
      %v774 = vpack.c.bf16 %v725, %v564
      %775 = vst [vmem:[#allocation2] sm:$0xff] %v727
      %776 = vst [vmem:[#allocation2 + $0x8] sm:$0xff] %v728
      %777 = vst [vmem:[#allocation2 + $0x10] sm:$0xff] %v729
      %778 = vst [vmem:[#allocation2 + $0x18] sm:$0xff] %v730
      %779 = vst [vmem:[#allocation2 + $0x20] sm:$0xff] %v731
      %780 = vst [vmem:[#allocation2 + $0x28] sm:$0xff] %v732
      %781 = vst [vmem:[#allocation2 + $0x30] sm:$0xff] %v733
      %782 = vst [vmem:[#allocation2 + $0x38] sm:$0xff] %v734
      %783 = vst [vmem:[#allocation2 + $0x40] sm:$0xff] %v735
      %784 = vst [vmem:[#allocation2 + $0x48] sm:$0xff] %v736
      %785 = vst [vmem:[#allocation2 + $0x50] sm:$0xff] %v737
      %786 = vst [vmem:[#allocation2 + $0x58] sm:$0xff] %v738
      %787 = vst [vmem:[#allocation2 + $0x60] sm:$0xff] %v739
      %788 = vst [vmem:[#allocation2 + $0x68] sm:$0xff] %v740
      %789 = vst [vmem:[#allocation2 + $0x70] sm:$0xff] %v741
      %790 = vst [vmem:[#allocation2 + $0x78] sm:$0xff] %v742
      %791 = vst [vmem:[#allocation2 + $0x80] sm:$0xff] %v743
      %792 = vst [vmem:[#allocation2 + $0x88] sm:$0xff] %v744
      %793 = vst [vmem:[#allocation2 + $0x90] sm:$0xff] %v745
      %794 = vst [vmem:[#allocation2 + $0x98] sm:$0xff] %v746
      %795 = vst [vmem:[#allocation2 + $0xa0] sm:$0xff] %v747
      %796 = vst [vmem:[#allocation2 + $0xa8] sm:$0xff] %v748
      %797 = vst [vmem:[#allocation2 + $0xb0] sm:$0xff] %v749
      %798 = vst [vmem:[#allocation2 + $0xb8] sm:$0xff] %v750
      %799 = vst [vmem:[#allocation2 + $0xc0] sm:$0xff] %v751
      %800 = vst [vmem:[#allocation2 + $0xc8] sm:$0xff] %v752
      %801 = vst [vmem:[#allocation2 + $0xd0] sm:$0xff] %v753
      %802 = vst [vmem:[#allocation2 + $0xd8] sm:$0xff] %v754
      %803 = vst [vmem:[#allocation2 + $0xe0] sm:$0xff] %v755
      %804 = vst [vmem:[#allocation2 + $0xe8] sm:$0xff] %v756
      %805 = vst [vmem:[#allocation2 + $0xf0] sm:$0xff] %v757
      %806 = vst [vmem:[#allocation2 + $0xf8] sm:$0xff] %v758
      %807 = vst [vmem:[#allocation2 + $0x100] sm:$0xff] %v759
      %808 = vst [vmem:[#allocation2 + $0x108] sm:$0xff] %v760
      %809 = vst [vmem:[#allocation2 + $0x110] sm:$0xff] %v761
      %810 = vst [vmem:[#allocation2 + $0x118] sm:$0xff] %v762
      %811 = vst [vmem:[#allocation2 + $0x120] sm:$0xff] %v763
      %812 = vst [vmem:[#allocation2 + $0x128] sm:$0xff] %v764
      %813 = vst [vmem:[#allocation2 + $0x130] sm:$0xff] %v765
      %814 = vst [vmem:[#allocation2 + $0x138] sm:$0xff] %v766
      %815 = vst [vmem:[#allocation2 + $0x140] sm:$0xff] %v767
      %816 = vst [vmem:[#allocation2 + $0x148] sm:$0xff] %v768
      %817 = vst [vmem:[#allocation2 + $0x150] sm:$0xff] %v769
      %818 = vst [vmem:[#allocation2 + $0x158] sm:$0xff] %v770
      %819 = vst [vmem:[#allocation2 + $0x160] sm:$0xff] %v771
      %820 = vst [vmem:[#allocation2 + $0x168] sm:$0xff] %v772
      %821 = vst [vmem:[#allocation2 + $0x170] sm:$0xff] %v773
      %822 = vst [vmem:[#allocation2 + $0x178] sm:$0xff] %v774
      %v823 = vld [vmem:[#allocation2 + $0x80] sm:$0xff]
      %v824 = vld [vmem:[#allocation2 + $0x88] sm:$0xff]
      %v825 = vld [vmem:[#allocation2 + $0x90] sm:$0xff]
      %v826 = vld [vmem:[#allocation2 + $0x98] sm:$0xff]
      %v827 = vld [vmem:[#allocation2 + $0x100] sm:$0xff]
      %v828 = vld [vmem:[#allocation2 + $0x108] sm:$0xff]
      %v829 = vld [vmem:[#allocation2 + $0x110] sm:$0xff]
      %v830 = vld [vmem:[#allocation2 + $0x118] sm:$0xff]
      %v831 = vld [vmem:[#allocation2] sm:$0xf]
      %v832 = vld [vmem:[#allocation2 + $0x8] sm:$0xf]
      %v833 = vld [vmem:[#allocation2 + $0x10] sm:$0xf]
      %v834 = vld [vmem:[#allocation2 + $0x18] sm:$0xf]
      %v839 = vunpack.c.l.b16 %v823
      %v840 = vunpack.c.h.b16 %v823
      %v841 = vunpack.c.l.b16 %v824
      %v842 = vunpack.c.h.b16 %v824
      %v843 = vunpack.c.l.b16 %v825
      %v844 = vunpack.c.h.b16 %v825
      %v845 = vunpack.c.l.b16 %v826
      %v846 = vunpack.c.h.b16 %v826
      %v847 = vpack.c.b16 %v841, %v839
      %v848 = vpack.c.b16 %v842, %v840
      %v849 = vpack.c.b16 %v845, %v843
      %v850 = vpack.c.b16 %v846, %v844
      %855 = vxpose.binary.xlu0.c.b16.start [1/16] %v848, %v847, 128
      %856 = vxpose.binary.xlu0.c.b16.cont [2/16] %v850, %v849, 128
      %857 = vxpose.binary.xlu0.c.b16.cont [3/16] 0, 0, 128
      %858 = vxpose.binary.xlu0.c.b16.cont [4/16] 0, 0, 128
      %859 = vxpose.binary.xlu0.c.b16.cont [5/16] 0, 0, 128
      %860 = vxpose.binary.xlu0.c.b16.cont [6/16] 0, 0, 128
      %861 = vxpose.binary.xlu0.c.b16.cont [7/16] 0, 0, 128
      %862 = vxpose.binary.xlu0.c.b16.end [8/16] 0, 0, 128
      %v863 = vpop.trf.xlu0
      %v864 = vpop.trf.xlu0
      %v865 = vpop.trf.xlu0
      %v866 = vpop.trf.xlu0
      %v867 = vpop.trf.xlu0
      %v868 = vpop.trf.xlu0
      %v869 = vpop.trf.xlu0
      %v870 = vpop.trf.xlu0
      %v871 = vpop.trf.xlu0
      %v872 = vpop.trf.xlu0
      %v873 = vpop.trf.xlu0
      %v874 = vpop.trf.xlu0
      %v875 = vpop.trf.xlu0
      %v876 = vpop.trf.xlu0
      %v877 = vpop.trf.xlu0
      %v878 = vpop.trf.xlu0
      %v883 = vunpack.c.l.b16 %v831
      %v884 = vunpack.c.l.b16 %v832
      %v885 = vunpack.c.l.b16 %v833
      %v886 = vunpack.c.l.b16 %v834
      %v887 = vpack.c.b16 %v884, %v883
      %v888 = vpack.c.b16 %v886, %v885
      %vm891 = vcmask 261120
      %v893 = vsel %vm891, %v863, 0
      %v896 = vsel %vm891, %v865, 0
      %v899 = vsel %vm891, %v867, 0
      %v902 = vsel %vm891, %v869, 0
      %v905 = vsel %vm891, %v871, 0
      %v908 = vsel %vm891, %v873, 0
      %v911 = vsel %vm891, %v875, 0
      %v914 = vsel %vm891, %v877, 0
      %v917 = vsel %vm891, %v864, 0
      %v920 = vsel %vm891, %v866, 0
      %v923 = vsel %vm891, %v868, 0
      %v926 = vsel %vm891, %v870, 0
      %v929 = vsel %vm891, %v872, 0
      %v932 = vsel %vm891, %v874, 0
      %v935 = vsel %vm891, %v876, 0
      %v938 = vsel %vm891, %v878, 0
      %940 = vmatpush.bf16.msra.mxu0 0
      %941 = vmatpush.bf16.msra.mxu0 0
      %942 = vmatpush.bf16.msra.mxu0 0
      %943 = vmatpush.bf16.msra.mxu0 0
      %944 = vmatpush.bf16.msra.mxu0 0
      %945 = vmatpush.bf16.msra.mxu0 0
      %946 = vmatpush.bf16.msra.mxu0 %v888
      %947 = vmatpush.bf16.msra.mxu0 %v887
      %948 = vmatmul.bf16.gmra.mxu0 %v893
      %v949 = vpop.f32.mrf.mxu0
      %v950 = vadd.f32 0.0, %v949
      %v951 = vpop.f32.mrf.mxu0
      %v952 = vadd.f32 0.0, %v951
      %953 = vmatmul.bf16.gmra.mxu0 %v896
      %v954 = vpop.f32.mrf.mxu0
      %v955 = vadd.f32 0.0, %v954
      %v956 = vpop.f32.mrf.mxu0
      %v957 = vadd.f32 0.0, %v956
      %958 = vmatmul.bf16.gmra.mxu0 %v899
      %v959 = vpop.f32.mrf.mxu0
      %v960 = vadd.f32 0.0, %v959
      %v961 = vpop.f32.mrf.mxu0
      %v962 = vadd.f32 0.0, %v961
      %963 = vmatmul.bf16.gmra.mxu0 %v902
      %v964 = vpop.f32.mrf.mxu0
      %v965 = vadd.f32 0.0, %v964
      %v966 = vpop.f32.mrf.mxu0
      %v967 = vadd.f32 0.0, %v966
      %968 = vmatmul.bf16.gmra.mxu0 %v905
      %v969 = vpop.f32.mrf.mxu0
      %v970 = vadd.f32 0.0, %v969
      %v971 = vpop.f32.mrf.mxu0
      %v972 = vadd.f32 0.0, %v971
      %973 = vmatmul.bf16.gmra.mxu0 %v908
      %v974 = vpop.f32.mrf.mxu0
      %v975 = vadd.f32 0.0, %v974
      %v976 = vpop.f32.mrf.mxu0
      %v977 = vadd.f32 0.0, %v976
      %978 = vmatmul.bf16.gmra.mxu0 %v911
      %v979 = vpop.f32.mrf.mxu0
      %v980 = vadd.f32 0.0, %v979
      %v981 = vpop.f32.mrf.mxu0
      %v982 = vadd.f32 0.0, %v981
      %983 = vmatmul.bf16.gmra.mxu0 %v914
      %v984 = vpop.f32.mrf.mxu0
      %v985 = vadd.f32 0.0, %v984
      %v986 = vpop.f32.mrf.mxu0
      %v987 = vadd.f32 0.0, %v986
      %988 = vmatmul.bf16.gmra.mxu0 %v917
      %v989 = vpop.f32.mrf.mxu0
      %v990 = vadd.f32 0.0, %v989
      %v991 = vpop.f32.mrf.mxu0
      %v992 = vadd.f32 0.0, %v991
      %993 = vmatmul.bf16.gmra.mxu0 %v920
      %v994 = vpop.f32.mrf.mxu0
      %v995 = vadd.f32 0.0, %v994
      %v996 = vpop.f32.mrf.mxu0
      %v997 = vadd.f32 0.0, %v996
      %998 = vmatmul.bf16.gmra.mxu0 %v923
      %v999 = vpop.f32.mrf.mxu0
      %v1000 = vadd.f32 0.0, %v999
      %v1001 = vpop.f32.mrf.mxu0
      %v1002 = vadd.f32 0.0, %v1001
      %1003 = vmatmul.bf16.gmra.mxu0 %v926
      %v1004 = vpop.f32.mrf.mxu0
      %v1005 = vadd.f32 0.0, %v1004
      %v1006 = vpop.f32.mrf.mxu0
      %v1007 = vadd.f32 0.0, %v1006
      %1008 = vmatmul.bf16.gmra.mxu0 %v929
      %v1009 = vpop.f32.mrf.mxu0
      %v1010 = vadd.f32 0.0, %v1009
      %v1011 = vpop.f32.mrf.mxu0
      %v1012 = vadd.f32 0.0, %v1011
      %1013 = vmatmul.bf16.gmra.mxu0 %v932
      %v1014 = vpop.f32.mrf.mxu0
      %v1015 = vadd.f32 0.0, %v1014
      %v1016 = vpop.f32.mrf.mxu0
      %v1017 = vadd.f32 0.0, %v1016
      %1018 = vmatmul.bf16.gmra.mxu0 %v935
      %v1019 = vpop.f32.mrf.mxu0
      %v1020 = vadd.f32 0.0, %v1019
      %v1021 = vpop.f32.mrf.mxu0
      %v1022 = vadd.f32 0.0, %v1021
      %1023 = vmatmul.bf16.gmra.mxu0 %v938
      %v1024 = vpop.f32.mrf.mxu0
      %v1025 = vadd.f32 0.0, %v1024
      %v1026 = vpop.f32.mrf.mxu0
      %v1027 = vadd.f32 0.0, %v1026
      %1028 = vdwg.mxu0
      %v1029 = vmax.f32 %v950, %v960
      %v1030 = vmax.f32 %v952, %v962
      %v1031 = vmax.f32 %v955, %v965
      %v1032 = vmax.f32 %v957, %v967
      %v1033 = vmax.f32 %v1029, %v970
      %v1034 = vmax.f32 %v1030, %v972
      %v1035 = vmax.f32 %v1031, %v975
      %v1036 = vmax.f32 %v1032, %v977
      %v1037 = vmax.f32 %v1033, %v980
      %v1038 = vmax.f32 %v1034, %v982
      %v1039 = vmax.f32 %v1035, %v985
      %v1040 = vmax.f32 %v1036, %v987
      %v1041 = vmax.f32 %v1037, %v990
      %v1042 = vmax.f32 %v1038, %v992
      %v1043 = vmax.f32 %v1039, %v995
      %v1044 = vmax.f32 %v1040, %v997
      %v1045 = vmax.f32 %v1041, %v1000
      %v1046 = vmax.f32 %v1042, %v1002
      %v1047 = vmax.f32 %v1043, %v1005
      %v1048 = vmax.f32 %v1044, %v1007
      %v1049 = vmax.f32 %v1045, %v1010
      %v1050 = vmax.f32 %v1046, %v1012
      %v1051 = vmax.f32 %v1047, %v1015
      %v1052 = vmax.f32 %v1048, %v1017
      %v1053 = vmax.f32 %v1049, %v1020
      %v1054 = vmax.f32 %v1050, %v1022
      %v1055 = vmax.f32 %v1051, %v1025
      %v1056 = vmax.f32 %v1052, %v1027
      %v1057 = vmax.f32 %v1053, %v1054
      %v1058 = vmax.f32 %v1055, %v1056
      %v1059 = vmax.f32 %v1057, %v1058
      %v1060 = vrot.slane %v1059, 4
      %v1061 = vmax.f32 %v1059, %v1060
      %v1062 = vrot.slane %v1061, 2
      %v1063 = vmax.f32 %v1061, %v1062
      %v1064 = vrot.slane %v1063, 1
      %v1065 = vmax.f32 %v1063, %v1064
      %v1066 = vsub.f32 %v950, %v1065
      %v1067 = vsub.f32 %v952, %v1065
      %v1068 = vsub.f32 %v955, %v1065
      %v1069 = vsub.f32 %v957, %v1065
      %v1070 = vsub.f32 %v960, %v1065
      %v1071 = vsub.f32 %v962, %v1065
      %v1072 = vsub.f32 %v965, %v1065
      %v1073 = vsub.f32 %v967, %v1065
      %v1074 = vsub.f32 %v970, %v1065
      %v1075 = vsub.f32 %v972, %v1065
      %v1076 = vsub.f32 %v975, %v1065
      %v1077 = vsub.f32 %v977, %v1065
      %v1078 = vsub.f32 %v980, %v1065
      %v1079 = vsub.f32 %v982, %v1065
      %v1080 = vsub.f32 %v985, %v1065
      %v1081 = vsub.f32 %v987, %v1065
      %v1082 = vsub.f32 %v990, %v1065
      %v1083 = vsub.f32 %v992, %v1065
      %v1084 = vsub.f32 %v995, %v1065
      %v1085 = vsub.f32 %v997, %v1065
      %v1086 = vsub.f32 %v1000, %v1065
      %v1087 = vsub.f32 %v1002, %v1065
      %v1088 = vsub.f32 %v1005, %v1065
      %v1089 = vsub.f32 %v1007, %v1065
      %v1090 = vsub.f32 %v1010, %v1065
      %v1091 = vsub.f32 %v1012, %v1065
      %v1092 = vsub.f32 %v1015, %v1065
      %v1093 = vsub.f32 %v1017, %v1065
      %v1094 = vsub.f32 %v1020, %v1065
      %v1095 = vsub.f32 %v1022, %v1065
      %v1096 = vsub.f32 %v1025, %v1065
      %v1097 = vsub.f32 %v1027, %v1065
      %v1098 = vmul.f32 %v1066, 1.442695
      %v1099 = vpow.pop %v1098
      %v1100 = vmul.f32 %v1067, 1.442695
      %v1101 = vpow.pop %v1100
      %v1102 = vmul.f32 %v1068, 1.442695
      %v1103 = vpow.pop %v1102
      %v1104 = vmul.f32 %v1069, 1.442695
      %v1105 = vpow.pop %v1104
      %v1106 = vmul.f32 %v1070, 1.442695
      %v1107 = vpow.pop %v1106
      %v1108 = vmul.f32 %v1071, 1.442695
      %v1109 = vpow.pop %v1108
      %v1110 = vmul.f32 %v1072, 1.442695
      %v1111 = vpow.pop %v1110
      %v1112 = vmul.f32 %v1073, 1.442695
      %v1113 = vpow.pop %v1112
      %v1114 = vmul.f32 %v1074, 1.442695
      %v1115 = vpow.pop %v1114
      %v1116 = vmul.f32 %v1075, 1.442695
      %v1117 = vpow.pop %v1116
      %v1118 = vmul.f32 %v1076, 1.442695
      %v1119 = vpow.pop %v1118
      %v1120 = vmul.f32 %v1077, 1.442695
      %v1121 = vpow.pop %v1120
      %v1122 = vmul.f32 %v1078, 1.442695
      %v1123 = vpow.pop %v1122
      %v1124 = vmul.f32 %v1079, 1.442695
      %v1125 = vpow.pop %v1124
      %v1126 = vmul.f32 %v1080, 1.442695
      %v1127 = vpow.pop %v1126
      %v1128 = vmul.f32 %v1081, 1.442695
      %v1129 = vpow.pop %v1128
      %v1130 = vmul.f32 %v1082, 1.442695
      %v1131 = vpow.pop %v1130
      %v1132 = vmul.f32 %v1083, 1.442695
      %v1133 = vpow.pop %v1132
      %v1134 = vmul.f32 %v1084, 1.442695
      %v1135 = vpow.pop %v1134
      %v1136 = vmul.f32 %v1085, 1.442695
      %v1137 = vpow.pop %v1136
      %v1138 = vmul.f32 %v1086, 1.442695
      %v1139 = vpow.pop %v1138
      %v1140 = vmul.f32 %v1087, 1.442695
      %v1141 = vpow.pop %v1140
      %v1142 = vmul.f32 %v1088, 1.442695
      %v1143 = vpow.pop %v1142
      %v1144 = vmul.f32 %v1089, 1.442695
      %v1145 = vpow.pop %v1144
      %v1146 = vmul.f32 %v1090, 1.442695
      %v1147 = vpow.pop %v1146
      %v1148 = vmul.f32 %v1091, 1.442695
      %v1149 = vpow.pop %v1148
      %v1150 = vmul.f32 %v1092, 1.442695
      %v1151 = vpow.pop %v1150
      %v1152 = vmul.f32 %v1093, 1.442695
      %v1153 = vpow.pop %v1152
      %v1154 = vmul.f32 %v1094, 1.442695
      %v1155 = vpow.pop %v1154
      %v1156 = vmul.f32 %v1095, 1.442695
      %v1157 = vpow.pop %v1156
      %v1158 = vmul.f32 %v1096, 1.442695
      %v1159 = vpow.pop %v1158
      %v1160 = vmul.f32 %v1097, 1.442695
      %v1161 = vpow.pop %v1160
      %v1162 = vadd.f32 %v1099, %v1101
      %v1163 = vadd.f32 %v1162, %v1103
      %v1164 = vadd.f32 %v1163, %v1105
      %v1165 = vadd.f32 %v1164, %v1107
      %v1166 = vadd.f32 %v1165, %v1109
      %v1167 = vadd.f32 %v1166, %v1111
      %v1168 = vadd.f32 %v1167, %v1113
      %v1169 = vadd.f32 %v1168, %v1115
      %v1170 = vadd.f32 %v1169, %v1117
      %v1171 = vadd.f32 %v1170, %v1119
      %v1172 = vadd.f32 %v1171, %v1121
      %v1173 = vadd.f32 %v1172, %v1123
      %v1174 = vadd.f32 %v1173, %v1125
      %v1175 = vadd.f32 %v1174, %v1127
      %v1176 = vadd.f32 %v1175, %v1129
      %v1177 = vadd.f32 %v1176, %v1131
      %v1178 = vadd.f32 %v1177, %v1133
      %v1179 = vadd.f32 %v1178, %v1135
      %v1180 = vadd.f32 %v1179, %v1137
      %v1181 = vadd.f32 %v1180, %v1139
      %v1182 = vadd.f32 %v1181, %v1141
      %v1183 = vadd.f32 %v1182, %v1143
      %v1184 = vadd.f32 %v1183, %v1145
      %v1185 = vadd.f32 %v1184, %v1147
      %v1186 = vadd.f32 %v1185, %v1149
      %v1187 = vadd.f32 %v1186, %v1151
      %v1188 = vadd.f32 %v1187, %v1153
      %v1189 = vadd.f32 %v1188, %v1155
      %v1190 = vadd.f32 %v1189, %v1157
      %v1191 = vadd.f32 %v1190, %v1159
      %v1192 = vadd.f32 %v1191, %v1161
      %v1193 = vrot.slane %v1192, 4
      %v1194 = vadd.f32 %v1192, %v1193
      %v1195 = vrot.slane %v1194, 2
      %v1196 = vadd.f32 %v1194, %v1195
      %v1197 = vrot.slane %v1196, 1
      %v1198 = vadd.f32 %v1196, %v1197
      %v1199 = vrcp.pop %v1198
      %v1200 = vmul.f32 %v1198, %v1199
      %v1201 = vsub.f32 1.0, %v1200
      %v1202 = vmul.f32 %v1199, %v1201
      %v1203 = vadd.f32 %v1199, %v1202
      %vm1204 = vweird.f32 %v1198
      %vm1205 = vweird.f32 %v1199
      %vm1206 = vmor %vm1204, %vm1205
      %v1207 = vsel %vm1206, %v1199, %v1203
      %v1208 = vand.u32 2147483647, %v1198
      %vm1209 = vcmp.eq.f32.partialorder %v1208, 8.507059e+37
      %v1210 = vand.u32 %v1198, 2147483648
      %v1211 = vor.u32 1.1754944e-38, %v1210
      %v1212 = vsel %vm1209, %v1211, %v1207
      %v1213 = vmul.f32 %v1099, %v1212
      %v1214 = vmul.f32 %v1101, %v1212
      %v1215 = vmul.f32 %v1103, %v1212
      %v1216 = vmul.f32 %v1105, %v1212
      %v1217 = vmul.f32 %v1107, %v1212
      %v1218 = vmul.f32 %v1109, %v1212
      %v1219 = vmul.f32 %v1111, %v1212
      %v1220 = vmul.f32 %v1113, %v1212
      %v1221 = vmul.f32 %v1115, %v1212
      %v1222 = vmul.f32 %v1117, %v1212
      %v1223 = vmul.f32 %v1119, %v1212
      %v1224 = vmul.f32 %v1121, %v1212
      %v1225 = vmul.f32 %v1123, %v1212
      %v1226 = vmul.f32 %v1125, %v1212
      %v1227 = vmul.f32 %v1127, %v1212
      %v1228 = vmul.f32 %v1129, %v1212
      %v1229 = vmul.f32 %v1131, %v1212
      %v1230 = vmul.f32 %v1133, %v1212
      %v1231 = vmul.f32 %v1135, %v1212
      %v1232 = vmul.f32 %v1137, %v1212
      %v1233 = vmul.f32 %v1139, %v1212
      %v1234 = vmul.f32 %v1141, %v1212
      %v1235 = vmul.f32 %v1143, %v1212
      %v1236 = vmul.f32 %v1145, %v1212
      %v1237 = vmul.f32 %v1147, %v1212
      %v1238 = vmul.f32 %v1149, %v1212
      %v1239 = vmul.f32 %v1151, %v1212
      %v1240 = vmul.f32 %v1153, %v1212
      %v1241 = vmul.f32 %v1155, %v1212
      %v1242 = vmul.f32 %v1157, %v1212
      %v1243 = vmul.f32 %v1159, %v1212
      %v1244 = vmul.f32 %v1161, %v1212
      %v1245 = vpack.c.bf16 %v1214, %v1213
      %v1246 = vpack.c.bf16 %v1216, %v1215
      %v1247 = vpack.c.bf16 %v1218, %v1217
      %v1248 = vpack.c.bf16 %v1220, %v1219
      %v1249 = vpack.c.bf16 %v1222, %v1221
      %v1250 = vpack.c.bf16 %v1224, %v1223
      %v1251 = vpack.c.bf16 %v1226, %v1225
      %v1252 = vpack.c.bf16 %v1228, %v1227
      %v1253 = vpack.c.bf16 %v1230, %v1229
      %v1254 = vpack.c.bf16 %v1232, %v1231
      %v1255 = vpack.c.bf16 %v1234, %v1233
      %v1256 = vpack.c.bf16 %v1236, %v1235
      %v1257 = vpack.c.bf16 %v1238, %v1237
      %v1258 = vpack.c.bf16 %v1240, %v1239
      %v1259 = vpack.c.bf16 %v1242, %v1241
      %v1260 = vpack.c.bf16 %v1244, %v1243
      %v1265 = vunpack.c.l.b16 %v827
      %v1266 = vunpack.c.h.b16 %v827
      %v1267 = vunpack.c.l.b16 %v828
      %v1268 = vunpack.c.h.b16 %v828
      %v1269 = vunpack.c.l.b16 %v829
      %v1270 = vunpack.c.h.b16 %v829
      %v1271 = vunpack.c.l.b16 %v830
      %v1272 = vunpack.c.h.b16 %v830
      %v1273 = vpack.c.b16 %v1267, %v1265
      %v1274 = vpack.c.b16 %v1268, %v1266
      %v1275 = vpack.c.b16 %v1271, %v1269
      %v1276 = vpack.c.b16 %v1272, %v1270
      %1281 = vmatpush.bf16.msra.mxu0 %v1252
      %1282 = vmatpush.bf16.msra.mxu0 %v1251
      %1283 = vmatpush.bf16.msra.mxu0 %v1250
      %1284 = vmatpush.bf16.msra.mxu0 %v1249
      %1285 = vmatpush.bf16.msra.mxu0 %v1248
      %1286 = vmatpush.bf16.msra.mxu0 %v1247
      %1287 = vmatpush.bf16.msra.mxu0 %v1246
      %1288 = vmatpush.bf16.msra.mxu0 %v1245
      %1289 = vmatmul.bf16.gmra.mxu0 %v1273
      %v1290 = vpop.f32.mrf.mxu0
      %v1291 = vadd.f32 0.0, %v1290
      %v1292 = vpop.f32.mrf.mxu0
      %v1293 = vadd.f32 0.0, %v1292
      %1294 = vmatmul.bf16.gmra.mxu0 %v1275
      %v1295 = vpop.f32.mrf.mxu0
      %v1296 = vadd.f32 0.0, %v1295
      %v1297 = vpop.f32.mrf.mxu0
      %v1298 = vadd.f32 0.0, %v1297
      %1299 = vdwg.mxu0
      %1300 = vmatpush.bf16.msra.mxu0 %v1260
      %1301 = vmatpush.bf16.msra.mxu0 %v1259
      %1302 = vmatpush.bf16.msra.mxu0 %v1258
      %1303 = vmatpush.bf16.msra.mxu0 %v1257
      %1304 = vmatpush.bf16.msra.mxu0 %v1256
      %1305 = vmatpush.bf16.msra.mxu0 %v1255
      %1306 = vmatpush.bf16.msra.mxu0 %v1254
      %1307 = vmatpush.bf16.msra.mxu0 %v1253
      %1308 = vmatmul.bf16.gmra.mxu0 %v1274
      %v1309 = vpop.f32.mrf.mxu0
      %v1310 = vadd.f32 %v1291, %v1309
      %v1311 = vpop.f32.mrf.mxu0
      %v1312 = vadd.f32 %v1293, %v1311
      %1313 = vmatmul.bf16.gmra.mxu0 %v1276
      %v1314 = vpop.f32.mrf.mxu0
      %v1315 = vadd.f32 %v1296, %v1314
      %v1316 = vpop.f32.mrf.mxu0
      %v1317 = vadd.f32 %v1298, %v1316
      %1318 = vdwg.mxu0
      %v1319 = vpack.c.bf16 %v1310, %v1310
      %v1320 = vpack.c.bf16 %v1312, %v1312
      %v1321 = vpack.c.bf16 %v1315, %v1315
      %v1322 = vpack.c.bf16 %v1317, %v1317
      %1323 = vst [vmem:[#allocation3] sm:$0xf] %v1319
      %1324 = vst [vmem:[#allocation3 + $0x8] sm:$0xf] %v1320
      %1325 = vst [vmem:[#allocation3 + $0x10] sm:$0xf] %v1321
      %1326 = vst [vmem:[#allocation3 + $0x18] sm:$0xf] %v1322
      %v1327 = vld [vmem:[#allocation2 + $0x4] sm:$0xf]
      %v1328 = vld [vmem:[#allocation2 + $0xc] sm:$0xf]
      %v1329 = vld [vmem:[#allocation2 + $0x14] sm:$0xf]
      %v1330 = vld [vmem:[#allocation2 + $0x1c] sm:$0xf]
      %v1335 = vunpack.c.l.b16 %v1327
      %v1336 = vunpack.c.l.b16 %v1328
      %v1337 = vunpack.c.l.b16 %v1329
      %v1338 = vunpack.c.l.b16 %v1330
      %v1339 = vpack.c.b16 %v1336, %v1335
      %v1340 = vpack.c.b16 %v1338, %v1337
      %1343 = vmatpush.bf16.msra.mxu0 0
      %1344 = vmatpush.bf16.msra.mxu0 0
      %1345 = vmatpush.bf16.msra.mxu0 0
      %1346 = vmatpush.bf16.msra.mxu0 0
      %1347 = vmatpush.bf16.msra.mxu0 0
      %1348 = vmatpush.bf16.msra.mxu0 0
      %1349 = vmatpush.bf16.msra.mxu0 %v1340
      %1350 = vmatpush.bf16.msra.mxu0 %v1339
      %1351 = vmatmul.bf16.gmra.mxu0 %v893
      %v1352 = vpop.f32.mrf.mxu0
      %v1353 = vadd.f32 0.0, %v1352
      %v1354 = vpop.f32.mrf.mxu0
      %v1355 = vadd.f32 0.0, %v1354
      %1356 = vmatmul.bf16.gmra.mxu0 %v896
      %v1357 = vpop.f32.mrf.mxu0
      %v1358 = vadd.f32 0.0, %v1357
      %v1359 = vpop.f32.mrf.mxu0
      %v1360 = vadd.f32 0.0, %v1359
      %1361 = vmatmul.bf16.gmra.mxu0 %v899
      %v1362 = vpop.f32.mrf.mxu0
      %v1363 = vadd.f32 0.0, %v1362
      %v1364 = vpop.f32.mrf.mxu0
      %v1365 = vadd.f32 0.0, %v1364
      %1366 = vmatmul.bf16.gmra.mxu0 %v902
      %v1367 = vpop.f32.mrf.mxu0
      %v1368 = vadd.f32 0.0, %v1367
      %v1369 = vpop.f32.mrf.mxu0
      %v1370 = vadd.f32 0.0, %v1369
      %1371 = vmatmul.bf16.gmra.mxu0 %v905
      %v1372 = vpop.f32.mrf.mxu0
      %v1373 = vadd.f32 0.0, %v1372
      %v1374 = vpop.f32.mrf.mxu0
      %v1375 = vadd.f32 0.0, %v1374
      %1376 = vmatmul.bf16.gmra.mxu0 %v908
      %v1377 = vpop.f32.mrf.mxu0
      %v1378 = vadd.f32 0.0, %v1377
      %v1379 = vpop.f32.mrf.mxu0
      %v1380 = vadd.f32 0.0, %v1379
      %1381 = vmatmul.bf16.gmra.mxu0 %v911
      %v1382 = vpop.f32.mrf.mxu0
      %v1383 = vadd.f32 0.0, %v1382
      %v1384 = vpop.f32.mrf.mxu0
      %v1385 = vadd.f32 0.0, %v1384
      %1386 = vmatmul.bf16.gmra.mxu0 %v914
      %v1387 = vpop.f32.mrf.mxu0
      %v1388 = vadd.f32 0.0, %v1387
      %v1389 = vpop.f32.mrf.mxu0
      %v1390 = vadd.f32 0.0, %v1389
      %1391 = vmatmul.bf16.gmra.mxu0 %v917
      %v1392 = vpop.f32.mrf.mxu0
      %v1393 = vadd.f32 0.0, %v1392
      %v1394 = vpop.f32.mrf.mxu0
      %v1395 = vadd.f32 0.0, %v1394
      %1396 = vmatmul.bf16.gmra.mxu0 %v920
      %v1397 = vpop.f32.mrf.mxu0
      %v1398 = vadd.f32 0.0, %v1397
      %v1399 = vpop.f32.mrf.mxu0
      %v1400 = vadd.f32 0.0, %v1399
      %1401 = vmatmul.bf16.gmra.mxu0 %v923
      %v1402 = vpop.f32.mrf.mxu0
      %v1403 = vadd.f32 0.0, %v1402
      %v1404 = vpop.f32.mrf.mxu0
      %v1405 = vadd.f32 0.0, %v1404
      %1406 = vmatmul.bf16.gmra.mxu0 %v926
      %v1407 = vpop.f32.mrf.mxu0
      %v1408 = vadd.f32 0.0, %v1407
      %v1409 = vpop.f32.mrf.mxu0
      %v1410 = vadd.f32 0.0, %v1409
      %1411 = vmatmul.bf16.gmra.mxu0 %v929
      %v1412 = vpop.f32.mrf.mxu0
      %v1413 = vadd.f32 0.0, %v1412
      %v1414 = vpop.f32.mrf.mxu0
      %v1415 = vadd.f32 0.0, %v1414
      %1416 = vmatmul.bf16.gmra.mxu0 %v932
      %v1417 = vpop.f32.mrf.mxu0
      %v1418 = vadd.f32 0.0, %v1417
      %v1419 = vpop.f32.mrf.mxu0
      %v1420 = vadd.f32 0.0, %v1419
      %1421 = vmatmul.bf16.gmra.mxu0 %v935
      %v1422 = vpop.f32.mrf.mxu0
      %v1423 = vadd.f32 0.0, %v1422
      %v1424 = vpop.f32.mrf.mxu0
      %v1425 = vadd.f32 0.0, %v1424
      %1426 = vmatmul.bf16.gmra.mxu0 %v938
      %v1427 = vpop.f32.mrf.mxu0
      %v1428 = vadd.f32 0.0, %v1427
      %v1429 = vpop.f32.mrf.mxu0
      %v1430 = vadd.f32 0.0, %v1429
      %1431 = vdwg.mxu0
      %v1432 = vmax.f32 %v1353, %v1363
      %v1433 = vmax.f32 %v1355, %v1365
      %v1434 = vmax.f32 %v1358, %v1368
      %v1435 = vmax.f32 %v1360, %v1370
      %v1436 = vmax.f32 %v1432, %v1373
      %v1437 = vmax.f32 %v1433, %v1375
      %v1438 = vmax.f32 %v1434, %v1378
      %v1439 = vmax.f32 %v1435, %v1380
      %v1440 = vmax.f32 %v1436, %v1383
      %v1441 = vmax.f32 %v1437, %v1385
      %v1442 = vmax.f32 %v1438, %v1388
      %v1443 = vmax.f32 %v1439, %v1390
      %v1444 = vmax.f32 %v1440, %v1393
      %v1445 = vmax.f32 %v1441, %v1395
      %v1446 = vmax.f32 %v1442, %v1398
      %v1447 = vmax.f32 %v1443, %v1400
      %v1448 = vmax.f32 %v1444, %v1403
      %v1449 = vmax.f32 %v1445, %v1405
      %v1450 = vmax.f32 %v1446, %v1408
      %v1451 = vmax.f32 %v1447, %v1410
      %v1452 = vmax.f32 %v1448, %v1413
      %v1453 = vmax.f32 %v1449, %v1415
      %v1454 = vmax.f32 %v1450, %v1418
      %v1455 = vmax.f32 %v1451, %v1420
      %v1456 = vmax.f32 %v1452, %v1423
      %v1457 = vmax.f32 %v1453, %v1425
      %v1458 = vmax.f32 %v1454, %v1428
      %v1459 = vmax.f32 %v1455, %v1430
      %v1460 = vmax.f32 %v1456, %v1457
      %v1461 = vmax.f32 %v1458, %v1459
      %v1462 = vmax.f32 %v1460, %v1461
      %v1463 = vrot.slane %v1462, 4
      %v1464 = vmax.f32 %v1462, %v1463
      %v1465 = vrot.slane %v1464, 2
      %v1466 = vmax.f32 %v1464, %v1465
      %v1467 = vrot.slane %v1466, 1
      %v1468 = vmax.f32 %v1466, %v1467
      %v1469 = vsub.f32 %v1353, %v1468
      %v1470 = vsub.f32 %v1355, %v1468
      %v1471 = vsub.f32 %v1358, %v1468
      %v1472 = vsub.f32 %v1360, %v1468
      %v1473 = vsub.f32 %v1363, %v1468
      %v1474 = vsub.f32 %v1365, %v1468
      %v1475 = vsub.f32 %v1368, %v1468
      %v1476 = vsub.f32 %v1370, %v1468
      %v1477 = vsub.f32 %v1373, %v1468
      %v1478 = vsub.f32 %v1375, %v1468
      %v1479 = vsub.f32 %v1378, %v1468
      %v1480 = vsub.f32 %v1380, %v1468
      %v1481 = vsub.f32 %v1383, %v1468
      %v1482 = vsub.f32 %v1385, %v1468
      %v1483 = vsub.f32 %v1388, %v1468
      %v1484 = vsub.f32 %v1390, %v1468
      %v1485 = vsub.f32 %v1393, %v1468
      %v1486 = vsub.f32 %v1395, %v1468
      %v1487 = vsub.f32 %v1398, %v1468
      %v1488 = vsub.f32 %v1400, %v1468
      %v1489 = vsub.f32 %v1403, %v1468
      %v1490 = vsub.f32 %v1405, %v1468
      %v1491 = vsub.f32 %v1408, %v1468
      %v1492 = vsub.f32 %v1410, %v1468
      %v1493 = vsub.f32 %v1413, %v1468
      %v1494 = vsub.f32 %v1415, %v1468
      %v1495 = vsub.f32 %v1418, %v1468
      %v1496 = vsub.f32 %v1420, %v1468
      %v1497 = vsub.f32 %v1423, %v1468
      %v1498 = vsub.f32 %v1425, %v1468
      %v1499 = vsub.f32 %v1428, %v1468
      %v1500 = vsub.f32 %v1430, %v1468
      %v1501 = vmul.f32 %v1469, 1.442695
      %v1502 = vpow.pop %v1501
      %v1503 = vmul.f32 %v1470, 1.442695
      %v1504 = vpow.pop %v1503
      %v1505 = vmul.f32 %v1471, 1.442695
      %v1506 = vpow.pop %v1505
      %v1507 = vmul.f32 %v1472, 1.442695
      %v1508 = vpow.pop %v1507
      %v1509 = vmul.f32 %v1473, 1.442695
      %v1510 = vpow.pop %v1509
      %v1511 = vmul.f32 %v1474, 1.442695
      %v1512 = vpow.pop %v1511
      %v1513 = vmul.f32 %v1475, 1.442695
      %v1514 = vpow.pop %v1513
      %v1515 = vmul.f32 %v1476, 1.442695
      %v1516 = vpow.pop %v1515
      %v1517 = vmul.f32 %v1477, 1.442695
      %v1518 = vpow.pop %v1517
      %v1519 = vmul.f32 %v1478, 1.442695
      %v1520 = vpow.pop %v1519
      %v1521 = vmul.f32 %v1479, 1.442695
      %v1522 = vpow.pop %v1521
      %v1523 = vmul.f32 %v1480, 1.442695
      %v1524 = vpow.pop %v1523
      %v1525 = vmul.f32 %v1481, 1.442695
      %v1526 = vpow.pop %v1525
      %v1527 = vmul.f32 %v1482, 1.442695
      %v1528 = vpow.pop %v1527
      %v1529 = vmul.f32 %v1483, 1.442695
      %v1530 = vpow.pop %v1529
      %v1531 = vmul.f32 %v1484, 1.442695
      %v1532 = vpow.pop %v1531
      %v1533 = vmul.f32 %v1485, 1.442695
      %v1534 = vpow.pop %v1533
      %v1535 = vmul.f32 %v1486, 1.442695
      %v1536 = vpow.pop %v1535
      %v1537 = vmul.f32 %v1487, 1.442695
      %v1538 = vpow.pop %v1537
      %v1539 = vmul.f32 %v1488, 1.442695
      %v1540 = vpow.pop %v1539
      %v1541 = vmul.f32 %v1489, 1.442695
      %v1542 = vpow.pop %v1541
      %v1543 = vmul.f32 %v1490, 1.442695
      %v1544 = vpow.pop %v1543
      %v1545 = vmul.f32 %v1491, 1.442695
      %v1546 = vpow.pop %v1545
      %v1547 = vmul.f32 %v1492, 1.442695
      %v1548 = vpow.pop %v1547
      %v1549 = vmul.f32 %v1493, 1.442695
      %v1550 = vpow.pop %v1549
      %v1551 = vmul.f32 %v1494, 1.442695
      %v1552 = vpow.pop %v1551
      %v1553 = vmul.f32 %v1495, 1.442695
      %v1554 = vpow.pop %v1553
      %v1555 = vmul.f32 %v1496, 1.442695
      %v1556 = vpow.pop %v1555
      %v1557 = vmul.f32 %v1497, 1.442695
      %v1558 = vpow.pop %v1557
      %v1559 = vmul.f32 %v1498, 1.442695
      %v1560 = vpow.pop %v1559
      %v1561 = vmul.f32 %v1499, 1.442695
      %v1562 = vpow.pop %v1561
      %v1563 = vmul.f32 %v1500, 1.442695
      %v1564 = vpow.pop %v1563
      %v1565 = vadd.f32 %v1502, %v1504
      %v1566 = vadd.f32 %v1565, %v1506
      %v1567 = vadd.f32 %v1566, %v1508
      %v1568 = vadd.f32 %v1567, %v1510
      %v1569 = vadd.f32 %v1568, %v1512
      %v1570 = vadd.f32 %v1569, %v1514
      %v1571 = vadd.f32 %v1570, %v1516
      %v1572 = vadd.f32 %v1571, %v1518
      %v1573 = vadd.f32 %v1572, %v1520
      %v1574 = vadd.f32 %v1573, %v1522
      %v1575 = vadd.f32 %v1574, %v1524
      %v1576 = vadd.f32 %v1575, %v1526
      %v1577 = vadd.f32 %v1576, %v1528
      %v1578 = vadd.f32 %v1577, %v1530
      %v1579 = vadd.f32 %v1578, %v1532
      %v1580 = vadd.f32 %v1579, %v1534
      %v1581 = vadd.f32 %v1580, %v1536
      %v1582 = vadd.f32 %v1581, %v1538
      %v1583 = vadd.f32 %v1582, %v1540
      %v1584 = vadd.f32 %v1583, %v1542
      %v1585 = vadd.f32 %v1584, %v1544
      %v1586 = vadd.f32 %v1585, %v1546
      %v1587 = vadd.f32 %v1586, %v1548
      %v1588 = vadd.f32 %v1587, %v1550
      %v1589 = vadd.f32 %v1588, %v1552
      %v1590 = vadd.f32 %v1589, %v1554
      %v1591 = vadd.f32 %v1590, %v1556
      %v1592 = vadd.f32 %v1591, %v1558
      %v1593 = vadd.f32 %v1592, %v1560
      %v1594 = vadd.f32 %v1593, %v1562
      %v1595 = vadd.f32 %v1594, %v1564
      %v1596 = vrot.slane %v1595, 4
      %v1597 = vadd.f32 %v1595, %v1596
      %v1598 = vrot.slane %v1597, 2
      %v1599 = vadd.f32 %v1597, %v1598
      %v1600 = vrot.slane %v1599, 1
      %v1601 = vadd.f32 %v1599, %v1600
      %v1602 = vrcp.pop %v1601
      %v1603 = vmul.f32 %v1601, %v1602
      %v1604 = vsub.f32 1.0, %v1603
      %v1605 = vmul.f32 %v1602, %v1604
      %v1606 = vadd.f32 %v1602, %v1605
      %vm1607 = vweird.f32 %v1601
      %vm1608 = vweird.f32 %v1602
      %vm1609 = vmor %vm1607, %vm1608
      %v1610 = vsel %vm1609, %v1602, %v1606
      %v1611 = vand.u32 2147483647, %v1601
      %vm1612 = vcmp.eq.f32.partialorder %v1611, 8.507059e+37
      %v1613 = vand.u32 %v1601, 2147483648
      %v1614 = vor.u32 1.1754944e-38, %v1613
      %v1615 = vsel %vm1612, %v1614, %v1610
      %v1616 = vmul.f32 %v1502, %v1615
      %v1617 = vmul.f32 %v1504, %v1615
      %v1618 = vmul.f32 %v1506, %v1615
      %v1619 = vmul.f32 %v1508, %v1615
      %v1620 = vmul.f32 %v1510, %v1615
      %v1621 = vmul.f32 %v1512, %v1615
      %v1622 = vmul.f32 %v1514, %v1615
      %v1623 = vmul.f32 %v1516, %v1615
      %v1624 = vmul.f32 %v1518, %v1615
      %v1625 = vmul.f32 %v1520, %v1615
      %v1626 = vmul.f32 %v1522, %v1615
      %v1627 = vmul.f32 %v1524, %v1615
      %v1628 = vmul.f32 %v1526, %v1615
      %v1629 = vmul.f32 %v1528, %v1615
      %v1630 = vmul.f32 %v1530, %v1615
      %v1631 = vmul.f32 %v1532, %v1615
      %v1632 = vmul.f32 %v1534, %v1615
      %v1633 = vmul.f32 %v1536, %v1615
      %v1634 = vmul.f32 %v1538, %v1615
      %v1635 = vmul.f32 %v1540, %v1615
      %v1636 = vmul.f32 %v1542, %v1615
      %v1637 = vmul.f32 %v1544, %v1615
      %v1638 = vmul.f32 %v1546, %v1615
      %v1639 = vmul.f32 %v1548, %v1615
      %v1640 = vmul.f32 %v1550, %v1615
      %v1641 = vmul.f32 %v1552, %v1615
      %v1642 = vmul.f32 %v1554, %v1615
      %v1643 = vmul.f32 %v1556, %v1615
      %v1644 = vmul.f32 %v1558, %v1615
      %v1645 = vmul.f32 %v1560, %v1615
      %v1646 = vmul.f32 %v1562, %v1615
      %v1647 = vmul.f32 %v1564, %v1615
      %v1648 = vpack.c.bf16 %v1617, %v1616
      %v1649 = vpack.c.bf16 %v1619, %v1618
      %v1650 = vpack.c.bf16 %v1621, %v1620
      %v1651 = vpack.c.bf16 %v1623, %v1622
      %v1652 = vpack.c.bf16 %v1625, %v1624
      %v1653 = vpack.c.bf16 %v1627, %v1626
      %v1654 = vpack.c.bf16 %v1629, %v1628
      %v1655 = vpack.c.bf16 %v1631, %v1630
      %v1656 = vpack.c.bf16 %v1633, %v1632
      %v1657 = vpack.c.bf16 %v1635, %v1634
      %v1658 = vpack.c.bf16 %v1637, %v1636
      %v1659 = vpack.c.bf16 %v1639, %v1638
      %v1660 = vpack.c.bf16 %v1641, %v1640
      %v1661 = vpack.c.bf16 %v1643, %v1642
      %v1662 = vpack.c.bf16 %v1645, %v1644
      %v1663 = vpack.c.bf16 %v1647, %v1646
      %1664 = vmatpush.bf16.msra.mxu0 %v1655
      %1665 = vmatpush.bf16.msra.mxu0 %v1654
      %1666 = vmatpush.bf16.msra.mxu0 %v1653
      %1667 = vmatpush.bf16.msra.mxu0 %v1652
      %1668 = vmatpush.bf16.msra.mxu0 %v1651
      %1669 = vmatpush.bf16.msra.mxu0 %v1650
      %1670 = vmatpush.bf16.msra.mxu0 %v1649
      %1671 = vmatpush.bf16.msra.mxu0 %v1648
      %1672 = vmatmul.bf16.gmra.mxu0 %v1273
      %v1673 = vpop.f32.mrf.mxu0
      %v1674 = vadd.f32 0.0, %v1673
      %v1675 = vpop.f32.mrf.mxu0
      %v1676 = vadd.f32 0.0, %v1675
      %1677 = vmatmul.bf16.gmra.mxu0 %v1275
      %v1678 = vpop.f32.mrf.mxu0
      %v1679 = vadd.f32 0.0, %v1678
      %v1680 = vpop.f32.mrf.mxu0
      %v1681 = vadd.f32 0.0, %v1680
      %1682 = vdwg.mxu0
      %1683 = vmatpush.bf16.msra.mxu0 %v1663
      %1684 = vmatpush.bf16.msra.mxu0 %v1662
      %1685 = vmatpush.bf16.msra.mxu0 %v1661
      %1686 = vmatpush.bf16.msra.mxu0 %v1660
      %1687 = vmatpush.bf16.msra.mxu0 %v1659
      %1688 = vmatpush.bf16.msra.mxu0 %v1658
      %1689 = vmatpush.bf16.msra.mxu0 %v1657
      %1690 = vmatpush.bf16.msra.mxu0 %v1656
      %1691 = vmatmul.bf16.gmra.mxu0 %v1274
      %v1692 = vpop.f32.mrf.mxu0
      %v1693 = vadd.f32 %v1674, %v1692
      %v1694 = vpop.f32.mrf.mxu0
      %v1695 = vadd.f32 %v1676, %v1694
      %1696 = vmatmul.bf16.gmra.mxu0 %v1276
      %v1697 = vpop.f32.mrf.mxu0
      %v1698 = vadd.f32 %v1679, %v1697
      %v1699 = vpop.f32.mrf.mxu0
      %v1700 = vadd.f32 %v1681, %v1699
      %1701 = vdwg.mxu0
      %v1702 = vpack.c.bf16 %v1693, %v1693
      %v1703 = vpack.c.bf16 %v1695, %v1695
      %v1704 = vpack.c.bf16 %v1698, %v1698
      %v1705 = vpack.c.bf16 %v1700, %v1700
      %1706 = vst [vmem:[#allocation3 + $0x4] sm:$0xf] %v1702
      %1707 = vst [vmem:[#allocation3 + $0xc] sm:$0xf] %v1703
      %1708 = vst [vmem:[#allocation3 + $0x14] sm:$0xf] %v1704
      %1709 = vst [vmem:[#allocation3 + $0x1c] sm:$0xf] %v1705
      %v1710 = vld [vmem:[#allocation2 + $0xa0] sm:$0xff]
      %v1711 = vld [vmem:[#allocation2 + $0xa8] sm:$0xff]
      %v1712 = vld [vmem:[#allocation2 + $0xb0] sm:$0xff]
      %v1713 = vld [vmem:[#allocation2 + $0xb8] sm:$0xff]
      %v1714 = vld [vmem:[#allocation2 + $0x120] sm:$0xff]
      %v1715 = vld [vmem:[#allocation2 + $0x128] sm:$0xff]
      %v1716 = vld [vmem:[#allocation2 + $0x130] sm:$0xff]
      %v1717 = vld [vmem:[#allocation2 + $0x138] sm:$0xff]
      %v1718 = vld [vmem:[#allocation2 + $0x20] sm:$0xf]
      %v1719 = vld [vmem:[#allocation2 + $0x28] sm:$0xf]
      %v1720 = vld [vmem:[#allocation2 + $0x30] sm:$0xf]
      %v1721 = vld [vmem:[#allocation2 + $0x38] sm:$0xf]
      %v1726 = vunpack.c.l.b16 %v1710
      %v1727 = vunpack.c.h.b16 %v1710
      %v1728 = vunpack.c.l.b16 %v1711
      %v1729 = vunpack.c.h.b16 %v1711
      %v1730 = vunpack.c.l.b16 %v1712
      %v1731 = vunpack.c.h.b16 %v1712
      %v1732 = vunpack.c.l.b16 %v1713
      %v1733 = vunpack.c.h.b16 %v1713
      %v1734 = vpack.c.b16 %v1728, %v1726
      %v1735 = vpack.c.b16 %v1729, %v1727
      %v1736 = vpack.c.b16 %v1732, %v1730
      %v1737 = vpack.c.b16 %v1733, %v1731
      %1742 = vxpose.binary.xlu0.c.b16.start [1/16] %v1735, %v1734, 128
      %1743 = vxpose.binary.xlu0.c.b16.cont [2/16] %v1737, %v1736, 128
      %1744 = vxpose.binary.xlu0.c.b16.cont [3/16] 0, 0, 128
      %1745 = vxpose.binary.xlu0.c.b16.cont [4/16] 0, 0, 128
      %1746 = vxpose.binary.xlu0.c.b16.cont [5/16] 0, 0, 128
      %1747 = vxpose.binary.xlu0.c.b16.cont [6/16] 0, 0, 128
      %1748 = vxpose.binary.xlu0.c.b16.cont [7/16] 0, 0, 128
      %1749 = vxpose.binary.xlu0.c.b16.end [8/16] 0, 0, 128
      %v1750 = vpop.trf.xlu0
      %v1751 = vpop.trf.xlu0
      %v1752 = vpop.trf.xlu0
      %v1753 = vpop.trf.xlu0
      %v1754 = vpop.trf.xlu0
      %v1755 = vpop.trf.xlu0
      %v1756 = vpop.trf.xlu0
      %v1757 = vpop.trf.xlu0
      %v1758 = vpop.trf.xlu0
      %v1759 = vpop.trf.xlu0
      %v1760 = vpop.trf.xlu0
      %v1761 = vpop.trf.xlu0
      %v1762 = vpop.trf.xlu0
      %v1763 = vpop.trf.xlu0
      %v1764 = vpop.trf.xlu0
      %v1765 = vpop.trf.xlu0
      %v1770 = vunpack.c.l.b16 %v1718
      %v1771 = vunpack.c.l.b16 %v1719
      %v1772 = vunpack.c.l.b16 %v1720
      %v1773 = vunpack.c.l.b16 %v1721
      %v1774 = vpack.c.b16 %v1771, %v1770
      %v1775 = vpack.c.b16 %v1773, %v1772
      %v1779 = vsel %vm891, %v1750, 0
      %v1782 = vsel %vm891, %v1752, 0
      %v1785 = vsel %vm891, %v1754, 0
      %v1788 = vsel %vm891, %v1756, 0
      %v1791 = vsel %vm891, %v1758, 0
      %v1794 = vsel %vm891, %v1760, 0
      %v1797 = vsel %vm891, %v1762, 0
      %v1800 = vsel %vm891, %v1764, 0
      %v1803 = vsel %vm891, %v1751, 0
      %v1806 = vsel %vm891, %v1753, 0
      %v1809 = vsel %vm891, %v1755, 0
      %v1812 = vsel %vm891, %v1757, 0
      %v1815 = vsel %vm891, %v1759, 0
      %v1818 = vsel %vm891, %v1761, 0
      %v1821 = vsel %vm891, %v1763, 0
      %v1824 = vsel %vm891, %v1765, 0
      %1826 = vmatpush.bf16.msra.mxu0 0
      %1827 = vmatpush.bf16.msra.mxu0 0
      %1828 = vmatpush.bf16.msra.mxu0 0
      %1829 = vmatpush.bf16.msra.mxu0 0
      %1830 = vmatpush.bf16.msra.mxu0 0
      %1831 = vmatpush.bf16.msra.mxu0 0
      %1832 = vmatpush.bf16.msra.mxu0 %v1775
      %1833 = vmatpush.bf16.msra.mxu0 %v1774
      %1834 = vmatmul.bf16.gmra.mxu0 %v1779
      %v1835 = vpop.f32.mrf.mxu0
      %v1836 = vadd.f32 0.0, %v1835
      %v1837 = vpop.f32.mrf.mxu0
      %v1838 = vadd.f32 0.0, %v1837
      %1839 = vmatmul.bf16.gmra.mxu0 %v1782
      %v1840 = vpop.f32.mrf.mxu0
      %v1841 = vadd.f32 0.0, %v1840
      %v1842 = vpop.f32.mrf.mxu0
      %v1843 = vadd.f32 0.0, %v1842
      %1844 = vmatmul.bf16.gmra.mxu0 %v1785
      %v1845 = vpop.f32.mrf.mxu0
      %v1846 = vadd.f32 0.0, %v1845
      %v1847 = vpop.f32.mrf.mxu0
      %v1848 = vadd.f32 0.0, %v1847
      %1849 = vmatmul.bf16.gmra.mxu0 %v1788
      %v1850 = vpop.f32.mrf.mxu0
      %v1851 = vadd.f32 0.0, %v1850
      %v1852 = vpop.f32.mrf.mxu0
      %v1853 = vadd.f32 0.0, %v1852
      %1854 = vmatmul.bf16.gmra.mxu0 %v1791
      %v1855 = vpop.f32.mrf.mxu0
      %v1856 = vadd.f32 0.0, %v1855
      %v1857 = vpop.f32.mrf.mxu0
      %v1858 = vadd.f32 0.0, %v1857
      %1859 = vmatmul.bf16.gmra.mxu0 %v1794
      %v1860 = vpop.f32.mrf.mxu0
      %v1861 = vadd.f32 0.0, %v1860
      %v1862 = vpop.f32.mrf.mxu0
      %v1863 = vadd.f32 0.0, %v1862
      %1864 = vmatmul.bf16.gmra.mxu0 %v1797
      %v1865 = vpop.f32.mrf.mxu0
      %v1866 = vadd.f32 0.0, %v1865
      %v1867 = vpop.f32.mrf.mxu0
      %v1868 = vadd.f32 0.0, %v1867
      %1869 = vmatmul.bf16.gmra.mxu0 %v1800
      %v1870 = vpop.f32.mrf.mxu0
      %v1871 = vadd.f32 0.0, %v1870
      %v1872 = vpop.f32.mrf.mxu0
      %v1873 = vadd.f32 0.0, %v1872
      %1874 = vmatmul.bf16.gmra.mxu0 %v1803
      %v1875 = vpop.f32.mrf.mxu0
      %v1876 = vadd.f32 0.0, %v1875
      %v1877 = vpop.f32.mrf.mxu0
      %v1878 = vadd.f32 0.0, %v1877
      %1879 = vmatmul.bf16.gmra.mxu0 %v1806
      %v1880 = vpop.f32.mrf.mxu0
      %v1881 = vadd.f32 0.0, %v1880
      %v1882 = vpop.f32.mrf.mxu0
      %v1883 = vadd.f32 0.0, %v1882
      %1884 = vmatmul.bf16.gmra.mxu0 %v1809
      %v1885 = vpop.f32.mrf.mxu0
      %v1886 = vadd.f32 0.0, %v1885
      %v1887 = vpop.f32.mrf.mxu0
      %v1888 = vadd.f32 0.0, %v1887
      %1889 = vmatmul.bf16.gmra.mxu0 %v1812
      %v1890 = vpop.f32.mrf.mxu0
      %v1891 = vadd.f32 0.0, %v1890
      %v1892 = vpop.f32.mrf.mxu0
      %v1893 = vadd.f32 0.0, %v1892
      %1894 = vmatmul.bf16.gmra.mxu0 %v1815
      %v1895 = vpop.f32.mrf.mxu0
      %v1896 = vadd.f32 0.0, %v1895
      %v1897 = vpop.f32.mrf.mxu0
      %v1898 = vadd.f32 0.0, %v1897
      %1899 = vmatmul.bf16.gmra.mxu0 %v1818
      %v1900 = vpop.f32.mrf.mxu0
      %v1901 = vadd.f32 0.0, %v1900
      %v1902 = vpop.f32.mrf.mxu0
      %v1903 = vadd.f32 0.0, %v1902
      %1904 = vmatmul.bf16.gmra.mxu0 %v1821
      %v1905 = vpop.f32.mrf.mxu0
      %v1906 = vadd.f32 0.0, %v1905
      %v1907 = vpop.f32.mrf.mxu0
      %v1908 = vadd.f32 0.0, %v1907
      %1909 = vmatmul.bf16.gmra.mxu0 %v1824
      %v1910 = vpop.f32.mrf.mxu0
      %v1911 = vadd.f32 0.0, %v1910
      %v1912 = vpop.f32.mrf.mxu0
      %v1913 = vadd.f32 0.0, %v1912
      %1914 = vdwg.mxu0
      %v1915 = vmax.f32 %v1836, %v1846
      %v1916 = vmax.f32 %v1838, %v1848
      %v1917 = vmax.f32 %v1841, %v1851
      %v1918 = vmax.f32 %v1843, %v1853
      %v1919 = vmax.f32 %v1915, %v1856
      %v1920 = vmax.f32 %v1916, %v1858
      %v1921 = vmax.f32 %v1917, %v1861
      %v1922 = vmax.f32 %v1918, %v1863
      %v1923 = vmax.f32 %v1919, %v1866
      %v1924 = vmax.f32 %v1920, %v1868
      %v1925 = vmax.f32 %v1921, %v1871
      %v1926 = vmax.f32 %v1922, %v1873
      %v1927 = vmax.f32 %v1923, %v1876
      %v1928 = vmax.f32 %v1924, %v1878
      %v1929 = vmax.f32 %v1925, %v1881
      %v1930 = vmax.f32 %v1926, %v1883
      %v1931 = vmax.f32 %v1927, %v1886
      %v1932 = vmax.f32 %v1928, %v1888
      %v1933 = vmax.f32 %v1929, %v1891
      %v1934 = vmax.f32 %v1930, %v1893
      %v1935 = vmax.f32 %v1931, %v1896
      %v1936 = vmax.f32 %v1932, %v1898
      %v1937 = vmax.f32 %v1933, %v1901
      %v1938 = vmax.f32 %v1934, %v1903
      %v1939 = vmax.f32 %v1935, %v1906
      %v1940 = vmax.f32 %v1936, %v1908
      %v1941 = vmax.f32 %v1937, %v1911
      %v1942 = vmax.f32 %v1938, %v1913
      %v1943 = vmax.f32 %v1939, %v1940
      %v1944 = vmax.f32 %v1941, %v1942
      %v1945 = vmax.f32 %v1943, %v1944
      %v1946 = vrot.slane %v1945, 4
      %v1947 = vmax.f32 %v1945, %v1946
      %v1948 = vrot.slane %v1947, 2
      %v1949 = vmax.f32 %v1947, %v1948
      %v1950 = vrot.slane %v1949, 1
      %v1951 = vmax.f32 %v1949, %v1950
      %v1952 = vsub.f32 %v1836, %v1951
      %v1953 = vsub.f32 %v1838, %v1951
      %v1954 = vsub.f32 %v1841, %v1951
      %v1955 = vsub.f32 %v1843, %v1951
      %v1956 = vsub.f32 %v1846, %v1951
      %v1957 = vsub.f32 %v1848, %v1951
      %v1958 = vsub.f32 %v1851, %v1951
      %v1959 = vsub.f32 %v1853, %v1951
      %v1960 = vsub.f32 %v1856, %v1951
      %v1961 = vsub.f32 %v1858, %v1951
      %v1962 = vsub.f32 %v1861, %v1951
      %v1963 = vsub.f32 %v1863, %v1951
      %v1964 = vsub.f32 %v1866, %v1951
      %v1965 = vsub.f32 %v1868, %v1951
      %v1966 = vsub.f32 %v1871, %v1951
      %v1967 = vsub.f32 %v1873, %v1951
      %v1968 = vsub.f32 %v1876, %v1951
      %v1969 = vsub.f32 %v1878, %v1951
      %v1970 = vsub.f32 %v1881, %v1951
      %v1971 = vsub.f32 %v1883, %v1951
      %v1972 = vsub.f32 %v1886, %v1951
      %v1973 = vsub.f32 %v1888, %v1951
      %v1974 = vsub.f32 %v1891, %v1951
      %v1975 = vsub.f32 %v1893, %v1951
      %v1976 = vsub.f32 %v1896, %v1951
      %v1977 = vsub.f32 %v1898, %v1951
      %v1978 = vsub.f32 %v1901, %v1951
      %v1979 = vsub.f32 %v1903, %v1951
      %v1980 = vsub.f32 %v1906, %v1951
      %v1981 = vsub.f32 %v1908, %v1951
      %v1982 = vsub.f32 %v1911, %v1951
      %v1983 = vsub.f32 %v1913, %v1951
      %v1984 = vmul.f32 %v1952, 1.442695
      %v1985 = vpow.pop %v1984
      %v1986 = vmul.f32 %v1953, 1.442695
      %v1987 = vpow.pop %v1986
      %v1988 = vmul.f32 %v1954, 1.442695
      %v1989 = vpow.pop %v1988
      %v1990 = vmul.f32 %v1955, 1.442695
      %v1991 = vpow.pop %v1990
      %v1992 = vmul.f32 %v1956, 1.442695
      %v1993 = vpow.pop %v1992
      %v1994 = vmul.f32 %v1957, 1.442695
      %v1995 = vpow.pop %v1994
      %v1996 = vmul.f32 %v1958, 1.442695
      %v1997 = vpow.pop %v1996
      %v1998 = vmul.f32 %v1959, 1.442695
      %v1999 = vpow.pop %v1998
      %v2000 = vmul.f32 %v1960, 1.442695
      %v2001 = vpow.pop %v2000
      %v2002 = vmul.f32 %v1961, 1.442695
      %v2003 = vpow.pop %v2002
      %v2004 = vmul.f32 %v1962, 1.442695
      %v2005 = vpow.pop %v2004
      %v2006 = vmul.f32 %v1963, 1.442695
      %v2007 = vpow.pop %v2006
      %v2008 = vmul.f32 %v1964, 1.442695
      %v2009 = vpow.pop %v2008
      %v2010 = vmul.f32 %v1965, 1.442695
      %v2011 = vpow.pop %v2010
      %v2012 = vmul.f32 %v1966, 1.442695
      %v2013 = vpow.pop %v2012
      %v2014 = vmul.f32 %v1967, 1.442695
      %v2015 = vpow.pop %v2014
      %v2016 = vmul.f32 %v1968, 1.442695
      %v2017 = vpow.pop %v2016
      %v2018 = vmul.f32 %v1969, 1.442695
      %v2019 = vpow.pop %v2018
      %v2020 = vmul.f32 %v1970, 1.442695
      %v2021 = vpow.pop %v2020
      %v2022 = vmul.f32 %v1971, 1.442695
      %v2023 = vpow.pop %v2022
      %v2024 = vmul.f32 %v1972, 1.442695
      %v2025 = vpow.pop %v2024
      %v2026 = vmul.f32 %v1973, 1.442695
      %v2027 = vpow.pop %v2026
      %v2028 = vmul.f32 %v1974, 1.442695
      %v2029 = vpow.pop %v2028
      %v2030 = vmul.f32 %v1975, 1.442695
      %v2031 = vpow.pop %v2030
      %v2032 = vmul.f32 %v1976, 1.442695
      %v2033 = vpow.pop %v2032
      %v2034 = vmul.f32 %v1977, 1.442695
      %v2035 = vpow.pop %v2034
      %v2036 = vmul.f32 %v1978, 1.442695
      %v2037 = vpow.pop %v2036
      %v2038 = vmul.f32 %v1979, 1.442695
      %v2039 = vpow.pop %v2038
      %v2040 = vmul.f32 %v1980, 1.442695
      %v2041 = vpow.pop %v2040
      %v2042 = vmul.f32 %v1981, 1.442695
      %v2043 = vpow.pop %v2042
      %v2044 = vmul.f32 %v1982, 1.442695
      %v2045 = vpow.pop %v2044
      %v2046 = vmul.f32 %v1983, 1.442695
      %v2047 = vpow.pop %v2046
      %v2048 = vadd.f32 %v1985, %v1987
      %v2049 = vadd.f32 %v2048, %v1989
      %v2050 = vadd.f32 %v2049, %v1991
      %v2051 = vadd.f32 %v2050, %v1993
      %v2052 = vadd.f32 %v2051, %v1995
      %v2053 = vadd.f32 %v2052, %v1997
      %v2054 = vadd.f32 %v2053, %v1999
      %v2055 = vadd.f32 %v2054, %v2001
      %v2056 = vadd.f32 %v2055, %v2003
      %v2057 = vadd.f32 %v2056, %v2005
      %v2058 = vadd.f32 %v2057, %v2007
      %v2059 = vadd.f32 %v2058, %v2009
      %v2060 = vadd.f32 %v2059, %v2011
      %v2061 = vadd.f32 %v2060, %v2013
      %v2062 = vadd.f32 %v2061, %v2015
      %v2063 = vadd.f32 %v2062, %v2017
      %v2064 = vadd.f32 %v2063, %v2019
      %v2065 = vadd.f32 %v2064, %v2021
      %v2066 = vadd.f32 %v2065, %v2023
      %v2067 = vadd.f32 %v2066, %v2025
      %v2068 = vadd.f32 %v2067, %v2027
      %v2069 = vadd.f32 %v2068, %v2029
      %v2070 = vadd.f32 %v2069, %v2031
      %v2071 = vadd.f32 %v2070, %v2033
      %v2072 = vadd.f32 %v2071, %v2035
      %v2073 = vadd.f32 %v2072, %v2037
      %v2074 = vadd.f32 %v2073, %v2039
      %v2075 = vadd.f32 %v2074, %v2041
      %v2076 = vadd.f32 %v2075, %v2043
      %v2077 = vadd.f32 %v2076, %v2045
      %v2078 = vadd.f32 %v2077, %v2047
      %v2079 = vrot.slane %v2078, 4
      %v2080 = vadd.f32 %v2078, %v2079
      %v2081 = vrot.slane %v2080, 2
      %v2082 = vadd.f32 %v2080, %v2081
      %v2083 = vrot.slane %v2082, 1
      %v2084 = vadd.f32 %v2082, %v2083
      %v2085 = vrcp.pop %v2084
      %v2086 = vmul.f32 %v2084, %v2085
      %v2087 = vsub.f32 1.0, %v2086
      %v2088 = vmul.f32 %v2085, %v2087
      %v2089 = vadd.f32 %v2085, %v2088
      %vm2090 = vweird.f32 %v2084
      %vm2091 = vweird.f32 %v2085
      %vm2092 = vmor %vm2090, %vm2091
      %v2093 = vsel %vm2092, %v2085, %v2089
      %v2094 = vand.u32 2147483647, %v2084
      %vm2095 = vcmp.eq.f32.partialorder %v2094, 8.507059e+37
      %v2096 = vand.u32 %v2084, 2147483648
      %v2097 = vor.u32 1.1754944e-38, %v2096
      %v2098 = vsel %vm2095, %v2097, %v2093
      %v2099 = vmul.f32 %v1985, %v2098
      %v2100 = vmul.f32 %v1987, %v2098
      %v2101 = vmul.f32 %v1989, %v2098
      %v2102 = vmul.f32 %v1991, %v2098
      %v2103 = vmul.f32 %v1993, %v2098
      %v2104 = vmul.f32 %v1995, %v2098
      %v2105 = vmul.f32 %v1997, %v2098
      %v2106 = vmul.f32 %v1999, %v2098
      %v2107 = vmul.f32 %v2001, %v2098
      %v2108 = vmul.f32 %v2003, %v2098
      %v2109 = vmul.f32 %v2005, %v2098
      %v2110 = vmul.f32 %v2007, %v2098
      %v2111 = vmul.f32 %v2009, %v2098
      %v2112 = vmul.f32 %v2011, %v2098
      %v2113 = vmul.f32 %v2013, %v2098
      %v2114 = vmul.f32 %v2015, %v2098
      %v2115 = vmul.f32 %v2017, %v2098
      %v2116 = vmul.f32 %v2019, %v2098
      %v2117 = vmul.f32 %v2021, %v2098
      %v2118 = vmul.f32 %v2023, %v2098
      %v2119 = vmul.f32 %v2025, %v2098
      %v2120 = vmul.f32 %v2027, %v2098
      %v2121 = vmul.f32 %v2029, %v2098
      %v2122 = vmul.f32 %v2031, %v2098
      %v2123 = vmul.f32 %v2033, %v2098
      %v2124 = vmul.f32 %v2035, %v2098
      %v2125 = vmul.f32 %v2037, %v2098
      %v2126 = vmul.f32 %v2039, %v2098
      %v2127 = vmul.f32 %v2041, %v2098
      %v2128 = vmul.f32 %v2043, %v2098
      %v2129 = vmul.f32 %v2045, %v2098
      %v2130 = vmul.f32 %v2047, %v2098
      %v2131 = vpack.c.bf16 %v2100, %v2099
      %v2132 = vpack.c.bf16 %v2102, %v2101
      %v2133 = vpack.c.bf16 %v2104, %v2103
      %v2134 = vpack.c.bf16 %v2106, %v2105
      %v2135 = vpack.c.bf16 %v2108, %v2107
      %v2136 = vpack.c.bf16 %v2110, %v2109
      %v2137 = vpack.c.bf16 %v2112, %v2111
      %v2138 = vpack.c.bf16 %v2114, %v2113
      %v2139 = vpack.c.bf16 %v2116, %v2115
      %v2140 = vpack.c.bf16 %v2118, %v2117
      %v2141 = vpack.c.bf16 %v2120, %v2119
      %v2142 = vpack.c.bf16 %v2122, %v2121
      %v2143 = vpack.c.bf16 %v2124, %v2123
      %v2144 = vpack.c.bf16 %v2126, %v2125
      %v2145 = vpack.c.bf16 %v2128, %v2127
      %v2146 = vpack.c.bf16 %v2130, %v2129
      %v2151 = vunpack.c.l.b16 %v1714
      %v2152 = vunpack.c.h.b16 %v1714
      %v2153 = vunpack.c.l.b16 %v1715
      %v2154 = vunpack.c.h.b16 %v1715
      %v2155 = vunpack.c.l.b16 %v1716
      %v2156 = vunpack.c.h.b16 %v1716
      %v2157 = vunpack.c.l.b16 %v1717
      %v2158 = vunpack.c.h.b16 %v1717
      %v2159 = vpack.c.b16 %v2153, %v2151
      %v2160 = vpack.c.b16 %v2154, %v2152
      %v2161 = vpack.c.b16 %v2157, %v2155
      %v2162 = vpack.c.b16 %v2158, %v2156
      %2167 = vmatpush.bf16.msra.mxu0 %v2138
      %2168 = vmatpush.bf16.msra.mxu0 %v2137
      %2169 = vmatpush.bf16.msra.mxu0 %v2136
      %2170 = vmatpush.bf16.msra.mxu0 %v2135
      %2171 = vmatpush.bf16.msra.mxu0 %v2134
      %2172 = vmatpush.bf16.msra.mxu0 %v2133
      %2173 = vmatpush.bf16.msra.mxu0 %v2132
      %2174 = vmatpush.bf16.msra.mxu0 %v2131
      %2175 = vmatmul.bf16.gmra.mxu0 %v2159
      %v2176 = vpop.f32.mrf.mxu0
      %v2177 = vadd.f32 0.0, %v2176
      %v2178 = vpop.f32.mrf.mxu0
      %v2179 = vadd.f32 0.0, %v2178
      %2180 = vmatmul.bf16.gmra.mxu0 %v2161
      %v2181 = vpop.f32.mrf.mxu0
      %v2182 = vadd.f32 0.0, %v2181
      %v2183 = vpop.f32.mrf.mxu0
      %v2184 = vadd.f32 0.0, %v2183
      %2185 = vdwg.mxu0
      %2186 = vmatpush.bf16.msra.mxu0 %v2146
      %2187 = vmatpush.bf16.msra.mxu0 %v2145
      %2188 = vmatpush.bf16.msra.mxu0 %v2144
      %2189 = vmatpush.bf16.msra.mxu0 %v2143
      %2190 = vmatpush.bf16.msra.mxu0 %v2142
      %2191 = vmatpush.bf16.msra.mxu0 %v2141
      %2192 = vmatpush.bf16.msra.mxu0 %v2140
      %2193 = vmatpush.bf16.msra.mxu0 %v2139
      %2194 = vmatmul.bf16.gmra.mxu0 %v2160
      %v2195 = vpop.f32.mrf.mxu0
      %v2196 = vadd.f32 %v2177, %v2195
      %v2197 = vpop.f32.mrf.mxu0
      %v2198 = vadd.f32 %v2179, %v2197
      %2199 = vmatmul.bf16.gmra.mxu0 %v2162
      %v2200 = vpop.f32.mrf.mxu0
      %v2201 = vadd.f32 %v2182, %v2200
      %v2202 = vpop.f32.mrf.mxu0
      %v2203 = vadd.f32 %v2184, %v2202
      %2204 = vdwg.mxu0
      %v2205 = vpack.c.bf16 %v2196, %v2196
      %v2206 = vpack.c.bf16 %v2198, %v2198
      %v2207 = vpack.c.bf16 %v2201, %v2201
      %v2208 = vpack.c.bf16 %v2203, %v2203
      %2209 = vst [vmem:[#allocation3 + $0x20] sm:$0xf] %v2205
      %2210 = vst [vmem:[#allocation3 + $0x28] sm:$0xf] %v2206
      %2211 = vst [vmem:[#allocation3 + $0x30] sm:$0xf] %v2207
      %2212 = vst [vmem:[#allocation3 + $0x38] sm:$0xf] %v2208
      %v2213 = vld [vmem:[#allocation2 + $0x24] sm:$0xf]
      %v2214 = vld [vmem:[#allocation2 + $0x2c] sm:$0xf]
      %v2215 = vld [vmem:[#allocation2 + $0x34] sm:$0xf]
      %v2216 = vld [vmem:[#allocation2 + $0x3c] sm:$0xf]
      %v2221 = vunpack.c.l.b16 %v2213
      %v2222 = vunpack.c.l.b16 %v2214
      %v2223 = vunpack.c.l.b16 %v2215
      %v2224 = vunpack.c.l.b16 %v2216
      %v2225 = vpack.c.b16 %v2222, %v2221
      %v2226 = vpack.c.b16 %v2224, %v2223
      %2229 = vmatpush.bf16.msra.mxu0 0
      %2230 = vmatpush.bf16.msra.mxu0 0
      %2231 = vmatpush.bf16.msra.mxu0 0
      %2232 = vmatpush.bf16.msra.mxu0 0
      %2233 = vmatpush.bf16.msra.mxu0 0
      %2234 = vmatpush.bf16.msra.mxu0 0
      %2235 = vmatpush.bf16.msra.mxu0 %v2226
      %2236 = vmatpush.bf16.msra.mxu0 %v2225
      %2237 = vmatmul.bf16.gmra.mxu0 %v1779
      %v2238 = vpop.f32.mrf.mxu0
      %v2239 = vadd.f32 0.0, %v2238
      %v2240 = vpop.f32.mrf.mxu0
      %v2241 = vadd.f32 0.0, %v2240
      %2242 = vmatmul.bf16.gmra.mxu0 %v1782
      %v2243 = vpop.f32.mrf.mxu0
      %v2244 = vadd.f32 0.0, %v2243
      %v2245 = vpop.f32.mrf.mxu0
      %v2246 = vadd.f32 0.0, %v2245
      %2247 = vmatmul.bf16.gmra.mxu0 %v1785
      %v2248 = vpop.f32.mrf.mxu0
      %v2249 = vadd.f32 0.0, %v2248
      %v2250 = vpop.f32.mrf.mxu0
      %v2251 = vadd.f32 0.0, %v2250
      %2252 = vmatmul.bf16.gmra.mxu0 %v1788
      %v2253 = vpop.f32.mrf.mxu0
      %v2254 = vadd.f32 0.0, %v2253
      %v2255 = vpop.f32.mrf.mxu0
      %v2256 = vadd.f32 0.0, %v2255
      %2257 = vmatmul.bf16.gmra.mxu0 %v1791
      %v2258 = vpop.f32.mrf.mxu0
      %v2259 = vadd.f32 0.0, %v2258
      %v2260 = vpop.f32.mrf.mxu0
      %v2261 = vadd.f32 0.0, %v2260
      %2262 = vmatmul.bf16.gmra.mxu0 %v1794
      %v2263 = vpop.f32.mrf.mxu0
      %v2264 = vadd.f32 0.0, %v2263
      %v2265 = vpop.f32.mrf.mxu0
      %v2266 = vadd.f32 0.0, %v2265
      %2267 = vmatmul.bf16.gmra.mxu0 %v1797
      %v2268 = vpop.f32.mrf.mxu0
      %v2269 = vadd.f32 0.0, %v2268
      %v2270 = vpop.f32.mrf.mxu0
      %v2271 = vadd.f32 0.0, %v2270
      %2272 = vmatmul.bf16.gmra.mxu0 %v1800
      %v2273 = vpop.f32.mrf.mxu0
      %v2274 = vadd.f32 0.0, %v2273
      %v2275 = vpop.f32.mrf.mxu0
      %v2276 = vadd.f32 0.0, %v2275
      %2277 = vmatmul.bf16.gmra.mxu0 %v1803
      %v2278 = vpop.f32.mrf.mxu0
      %v2279 = vadd.f32 0.0, %v2278
      %v2280 = vpop.f32.mrf.mxu0
      %v2281 = vadd.f32 0.0, %v2280
      %2282 = vmatmul.bf16.gmra.mxu0 %v1806
      %v2283 = vpop.f32.mrf.mxu0
      %v2284 = vadd.f32 0.0, %v2283
      %v2285 = vpop.f32.mrf.mxu0
      %v2286 = vadd.f32 0.0, %v2285
      %2287 = vmatmul.bf16.gmra.mxu0 %v1809
      %v2288 = vpop.f32.mrf.mxu0
      %v2289 = vadd.f32 0.0, %v2288
      %v2290 = vpop.f32.mrf.mxu0
      %v2291 = vadd.f32 0.0, %v2290
      %2292 = vmatmul.bf16.gmra.mxu0 %v1812
      %v2293 = vpop.f32.mrf.mxu0
      %v2294 = vadd.f32 0.0, %v2293
      %v2295 = vpop.f32.mrf.mxu0
      %v2296 = vadd.f32 0.0, %v2295
      %2297 = vmatmul.bf16.gmra.mxu0 %v1815
      %v2298 = vpop.f32.mrf.mxu0
      %v2299 = vadd.f32 0.0, %v2298
      %v2300 = vpop.f32.mrf.mxu0
      %v2301 = vadd.f32 0.0, %v2300
      %2302 = vmatmul.bf16.gmra.mxu0 %v1818
      %v2303 = vpop.f32.mrf.mxu0
      %v2304 = vadd.f32 0.0, %v2303
      %v2305 = vpop.f32.mrf.mxu0
      %v2306 = vadd.f32 0.0, %v2305
      %2307 = vmatmul.bf16.gmra.mxu0 %v1821
      %v2308 = vpop.f32.mrf.mxu0
      %v2309 = vadd.f32 0.0, %v2308
      %v2310 = vpop.f32.mrf.mxu0
      %v2311 = vadd.f32 0.0, %v2310
      %2312 = vmatmul.bf16.gmra.mxu0 %v1824
      %v2313 = vpop.f32.mrf.mxu0
      %v2314 = vadd.f32 0.0, %v2313
      %v2315 = vpop.f32.mrf.mxu0
      %v2316 = vadd.f32 0.0, %v2315
      %2317 = vdwg.mxu0
      %v2318 = vmax.f32 %v2239, %v2249
      %v2319 = vmax.f32 %v2241, %v2251
      %v2320 = vmax.f32 %v2244, %v2254
      %v2321 = vmax.f32 %v2246, %v2256
      %v2322 = vmax.f32 %v2318, %v2259
      %v2323 = vmax.f32 %v2319, %v2261
      %v2324 = vmax.f32 %v2320, %v2264
      %v2325 = vmax.f32 %v2321, %v2266
      %v2326 = vmax.f32 %v2322, %v2269
      %v2327 = vmax.f32 %v2323, %v2271
      %v2328 = vmax.f32 %v2324, %v2274
      %v2329 = vmax.f32 %v2325, %v2276
      %v2330 = vmax.f32 %v2326, %v2279
      %v2331 = vmax.f32 %v2327, %v2281
      %v2332 = vmax.f32 %v2328, %v2284
      %v2333 = vmax.f32 %v2329, %v2286
      %v2334 = vmax.f32 %v2330, %v2289
      %v2335 = vmax.f32 %v2331, %v2291
      %v2336 = vmax.f32 %v2332, %v2294
      %v2337 = vmax.f32 %v2333, %v2296
      %v2338 = vmax.f32 %v2334, %v2299
      %v2339 = vmax.f32 %v2335, %v2301
      %v2340 = vmax.f32 %v2336, %v2304
      %v2341 = vmax.f32 %v2337, %v2306
      %v2342 = vmax.f32 %v2338, %v2309
      %v2343 = vmax.f32 %v2339, %v2311
      %v2344 = vmax.f32 %v2340, %v2314
      %v2345 = vmax.f32 %v2341, %v2316
      %v2346 = vmax.f32 %v2342, %v2343
      %v2347 = vmax.f32 %v2344, %v2345
      %v2348 = vmax.f32 %v2346, %v2347
      %v2349 = vrot.slane %v2348, 4
      %v2350 = vmax.f32 %v2348, %v2349
      %v2351 = vrot.slane %v2350, 2
      %v2352 = vmax.f32 %v2350, %v2351
      %v2353 = vrot.slane %v2352, 1
      %v2354 = vmax.f32 %v2352, %v2353
      %v2355 = vsub.f32 %v2239, %v2354
      %v2356 = vsub.f32 %v2241, %v2354
      %v2357 = vsub.f32 %v2244, %v2354
      %v2358 = vsub.f32 %v2246, %v2354
      %v2359 = vsub.f32 %v2249, %v2354
      %v2360 = vsub.f32 %v2251, %v2354
      %v2361 = vsub.f32 %v2254, %v2354
      %v2362 = vsub.f32 %v2256, %v2354
      %v2363 = vsub.f32 %v2259, %v2354
      %v2364 = vsub.f32 %v2261, %v2354
      %v2365 = vsub.f32 %v2264, %v2354
      %v2366 = vsub.f32 %v2266, %v2354
      %v2367 = vsub.f32 %v2269, %v2354
      %v2368 = vsub.f32 %v2271, %v2354
      %v2369 = vsub.f32 %v2274, %v2354
      %v2370 = vsub.f32 %v2276, %v2354
      %v2371 = vsub.f32 %v2279, %v2354
      %v2372 = vsub.f32 %v2281, %v2354
      %v2373 = vsub.f32 %v2284, %v2354
      %v2374 = vsub.f32 %v2286, %v2354
      %v2375 = vsub.f32 %v2289, %v2354
      %v2376 = vsub.f32 %v2291, %v2354
      %v2377 = vsub.f32 %v2294, %v2354
      %v2378 = vsub.f32 %v2296, %v2354
      %v2379 = vsub.f32 %v2299, %v2354
      %v2380 = vsub.f32 %v2301, %v2354
      %v2381 = vsub.f32 %v2304, %v2354
      %v2382 = vsub.f32 %v2306, %v2354
      %v2383 = vsub.f32 %v2309, %v2354
      %v2384 = vsub.f32 %v2311, %v2354
      %v2385 = vsub.f32 %v2314, %v2354
      %v2386 = vsub.f32 %v2316, %v2354
      %v2387 = vmul.f32 %v2355, 1.442695
      %v2388 = vpow.pop %v2387
      %v2389 = vmul.f32 %v2356, 1.442695
      %v2390 = vpow.pop %v2389
      %v2391 = vmul.f32 %v2357, 1.442695
      %v2392 = vpow.pop %v2391
      %v2393 = vmul.f32 %v2358, 1.442695
      %v2394 = vpow.pop %v2393
      %v2395 = vmul.f32 %v2359, 1.442695
      %v2396 = vpow.pop %v2395
      %v2397 = vmul.f32 %v2360, 1.442695
      %v2398 = vpow.pop %v2397
      %v2399 = vmul.f32 %v2361, 1.442695
      %v2400 = vpow.pop %v2399
      %v2401 = vmul.f32 %v2362, 1.442695
      %v2402 = vpow.pop %v2401
      %v2403 = vmul.f32 %v2363, 1.442695
      %v2404 = vpow.pop %v2403
      %v2405 = vmul.f32 %v2364, 1.442695
      %v2406 = vpow.pop %v2405
      %v2407 = vmul.f32 %v2365, 1.442695
      %v2408 = vpow.pop %v2407
      %v2409 = vmul.f32 %v2366, 1.442695
      %v2410 = vpow.pop %v2409
      %v2411 = vmul.f32 %v2367, 1.442695
      %v2412 = vpow.pop %v2411
      %v2413 = vmul.f32 %v2368, 1.442695
      %v2414 = vpow.pop %v2413
      %v2415 = vmul.f32 %v2369, 1.442695
      %v2416 = vpow.pop %v2415
      %v2417 = vmul.f32 %v2370, 1.442695
      %v2418 = vpow.pop %v2417
      %v2419 = vmul.f32 %v2371, 1.442695
      %v2420 = vpow.pop %v2419
      %v2421 = vmul.f32 %v2372, 1.442695
      %v2422 = vpow.pop %v2421
      %v2423 = vmul.f32 %v2373, 1.442695
      %v2424 = vpow.pop %v2423
      %v2425 = vmul.f32 %v2374, 1.442695
      %v2426 = vpow.pop %v2425
      %v2427 = vmul.f32 %v2375, 1.442695
      %v2428 = vpow.pop %v2427
      %v2429 = vmul.f32 %v2376, 1.442695
      %v2430 = vpow.pop %v2429
      %v2431 = vmul.f32 %v2377, 1.442695
      %v2432 = vpow.pop %v2431
      %v2433 = vmul.f32 %v2378, 1.442695
      %v2434 = vpow.pop %v2433
      %v2435 = vmul.f32 %v2379, 1.442695
      %v2436 = vpow.pop %v2435
      %v2437 = vmul.f32 %v2380, 1.442695
      %v2438 = vpow.pop %v2437
      %v2439 = vmul.f32 %v2381, 1.442695
      %v2440 = vpow.pop %v2439
      %v2441 = vmul.f32 %v2382, 1.442695
      %v2442 = vpow.pop %v2441
      %v2443 = vmul.f32 %v2383, 1.442695
      %v2444 = vpow.pop %v2443
      %v2445 = vmul.f32 %v2384, 1.442695
      %v2446 = vpow.pop %v2445
      %v2447 = vmul.f32 %v2385, 1.442695
      %v2448 = vpow.pop %v2447
      %v2449 = vmul.f32 %v2386, 1.442695
      %v2450 = vpow.pop %v2449
      %v2451 = vadd.f32 %v2388, %v2390
      %v2452 = vadd.f32 %v2451, %v2392
      %v2453 = vadd.f32 %v2452, %v2394
      %v2454 = vadd.f32 %v2453, %v2396
      %v2455 = vadd.f32 %v2454, %v2398
      %v2456 = vadd.f32 %v2455, %v2400
      %v2457 = vadd.f32 %v2456, %v2402
      %v2458 = vadd.f32 %v2457, %v2404
      %v2459 = vadd.f32 %v2458, %v2406
      %v2460 = vadd.f32 %v2459, %v2408
      %v2461 = vadd.f32 %v2460, %v2410
      %v2462 = vadd.f32 %v2461, %v2412
      %v2463 = vadd.f32 %v2462, %v2414
      %v2464 = vadd.f32 %v2463, %v2416
      %v2465 = vadd.f32 %v2464, %v2418
      %v2466 = vadd.f32 %v2465, %v2420
      %v2467 = vadd.f32 %v2466, %v2422
      %v2468 = vadd.f32 %v2467, %v2424
      %v2469 = vadd.f32 %v2468, %v2426
      %v2470 = vadd.f32 %v2469, %v2428
      %v2471 = vadd.f32 %v2470, %v2430
      %v2472 = vadd.f32 %v2471, %v2432
      %v2473 = vadd.f32 %v2472, %v2434
      %v2474 = vadd.f32 %v2473, %v2436
      %v2475 = vadd.f32 %v2474, %v2438
      %v2476 = vadd.f32 %v2475, %v2440
      %v2477 = vadd.f32 %v2476, %v2442
      %v2478 = vadd.f32 %v2477, %v2444
      %v2479 = vadd.f32 %v2478, %v2446
      %v2480 = vadd.f32 %v2479, %v2448
      %v2481 = vadd.f32 %v2480, %v2450
      %v2482 = vrot.slane %v2481, 4
      %v2483 = vadd.f32 %v2481, %v2482
      %v2484 = vrot.slane %v2483, 2
      %v2485 = vadd.f32 %v2483, %v2484
      %v2486 = vrot.slane %v2485, 1
      %v2487 = vadd.f32 %v2485, %v2486
      %v2488 = vrcp.pop %v2487
      %v2489 = vmul.f32 %v2487, %v2488
      %v2490 = vsub.f32 1.0, %v2489
      %v2491 = vmul.f32 %v2488, %v2490
      %v2492 = vadd.f32 %v2488, %v2491
      %vm2493 = vweird.f32 %v2487
      %vm2494 = vweird.f32 %v2488
      %vm2495 = vmor %vm2493, %vm2494
      %v2496 = vsel %vm2495, %v2488, %v2492
      %v2497 = vand.u32 2147483647, %v2487
      %vm2498 = vcmp.eq.f32.partialorder %v2497, 8.507059e+37
      %v2499 = vand.u32 %v2487, 2147483648
      %v2500 = vor.u32 1.1754944e-38, %v2499
      %v2501 = vsel %vm2498, %v2500, %v2496
      %v2502 = vmul.f32 %v2388, %v2501
      %v2503 = vmul.f32 %v2390, %v2501
      %v2504 = vmul.f32 %v2392, %v2501
      %v2505 = vmul.f32 %v2394, %v2501
      %v2506 = vmul.f32 %v2396, %v2501
      %v2507 = vmul.f32 %v2398, %v2501
      %v2508 = vmul.f32 %v2400, %v2501
      %v2509 = vmul.f32 %v2402, %v2501
      %v2510 = vmul.f32 %v2404, %v2501
      %v2511 = vmul.f32 %v2406, %v2501
      %v2512 = vmul.f32 %v2408, %v2501
      %v2513 = vmul.f32 %v2410, %v2501
      %v2514 = vmul.f32 %v2412, %v2501
      %v2515 = vmul.f32 %v2414, %v2501
      %v2516 = vmul.f32 %v2416, %v2501
      %v2517 = vmul.f32 %v2418, %v2501
      %v2518 = vmul.f32 %v2420, %v2501
      %v2519 = vmul.f32 %v2422, %v2501
      %v2520 = vmul.f32 %v2424, %v2501
      %v2521 = vmul.f32 %v2426, %v2501
      %v2522 = vmul.f32 %v2428, %v2501
      %v2523 = vmul.f32 %v2430, %v2501
      %v2524 = vmul.f32 %v2432, %v2501
      %v2525 = vmul.f32 %v2434, %v2501
      %v2526 = vmul.f32 %v2436, %v2501
      %v2527 = vmul.f32 %v2438, %v2501
      %v2528 = vmul.f32 %v2440, %v2501
      %v2529 = vmul.f32 %v2442, %v2501
      %v2530 = vmul.f32 %v2444, %v2501
      %v2531 = vmul.f32 %v2446, %v2501
      %v2532 = vmul.f32 %v2448, %v2501
      %v2533 = vmul.f32 %v2450, %v2501
      %v2534 = vpack.c.bf16 %v2503, %v2502
      %v2535 = vpack.c.bf16 %v2505, %v2504
      %v2536 = vpack.c.bf16 %v2507, %v2506
      %v2537 = vpack.c.bf16 %v2509, %v2508
      %v2538 = vpack.c.bf16 %v2511, %v2510
      %v2539 = vpack.c.bf16 %v2513, %v2512
      %v2540 = vpack.c.bf16 %v2515, %v2514
      %v2541 = vpack.c.bf16 %v2517, %v2516
      %v2542 = vpack.c.bf16 %v2519, %v2518
      %v2543 = vpack.c.bf16 %v2521, %v2520
      %v2544 = vpack.c.bf16 %v2523, %v2522
      %v2545 = vpack.c.bf16 %v2525, %v2524
      %v2546 = vpack.c.bf16 %v2527, %v2526
      %v2547 = vpack.c.bf16 %v2529, %v2528
      %v2548 = vpack.c.bf16 %v2531, %v2530
      %v2549 = vpack.c.bf16 %v2533, %v2532
      %2550 = vmatpush.bf16.msra.mxu0 %v2541
      %2551 = vmatpush.bf16.msra.mxu0 %v2540
      %2552 = vmatpush.bf16.msra.mxu0 %v2539
      %2553 = vmatpush.bf16.msra.mxu0 %v2538
      %2554 = vmatpush.bf16.msra.mxu0 %v2537
      %2555 = vmatpush.bf16.msra.mxu0 %v2536
      %2556 = vmatpush.bf16.msra.mxu0 %v2535
      %2557 = vmatpush.bf16.msra.mxu0 %v2534
      %2558 = vmatmul.bf16.gmra.mxu0 %v2159
      %v2559 = vpop.f32.mrf.mxu0
      %v2560 = vadd.f32 0.0, %v2559
      %v2561 = vpop.f32.mrf.mxu0
      %v2562 = vadd.f32 0.0, %v2561
      %2563 = vmatmul.bf16.gmra.mxu0 %v2161
      %v2564 = vpop.f32.mrf.mxu0
      %v2565 = vadd.f32 0.0, %v2564
      %v2566 = vpop.f32.mrf.mxu0
      %v2567 = vadd.f32 0.0, %v2566
      %2568 = vdwg.mxu0
      %2569 = vmatpush.bf16.msra.mxu0 %v2549
      %2570 = vmatpush.bf16.msra.mxu0 %v2548
      %2571 = vmatpush.bf16.msra.mxu0 %v2547
      %2572 = vmatpush.bf16.msra.mxu0 %v2546
      %2573 = vmatpush.bf16.msra.mxu0 %v2545
      %2574 = vmatpush.bf16.msra.mxu0 %v2544
      %2575 = vmatpush.bf16.msra.mxu0 %v2543
      %2576 = vmatpush.bf16.msra.mxu0 %v2542
      %2577 = vmatmul.bf16.gmra.mxu0 %v2160
      %v2578 = vpop.f32.mrf.mxu0
      %v2579 = vadd.f32 %v2560, %v2578
      %v2580 = vpop.f32.mrf.mxu0
      %v2581 = vadd.f32 %v2562, %v2580
      %2582 = vmatmul.bf16.gmra.mxu0 %v2162
      %v2583 = vpop.f32.mrf.mxu0
      %v2584 = vadd.f32 %v2565, %v2583
      %v2585 = vpop.f32.mrf.mxu0
      %v2586 = vadd.f32 %v2567, %v2585
      %2587 = vdwg.mxu0
      %v2588 = vpack.c.bf16 %v2579, %v2579
      %v2589 = vpack.c.bf16 %v2581, %v2581
      %v2590 = vpack.c.bf16 %v2584, %v2584
      %v2591 = vpack.c.bf16 %v2586, %v2586
      %2592 = vst [vmem:[#allocation3 + $0x24] sm:$0xf] %v2588
      %2593 = vst [vmem:[#allocation3 + $0x2c] sm:$0xf] %v2589
      %2594 = vst [vmem:[#allocation3 + $0x34] sm:$0xf] %v2590
      %2595 = vst [vmem:[#allocation3 + $0x3c] sm:$0xf] %v2591
      %v2596 = vld [vmem:[#allocation2 + $0xc0] sm:$0xff]
      %v2597 = vld [vmem:[#allocation2 + $0xc8] sm:$0xff]
      %v2598 = vld [vmem:[#allocation2 + $0xd0] sm:$0xff]
      %v2599 = vld [vmem:[#allocation2 + $0xd8] sm:$0xff]
      %v2600 = vld [vmem:[#allocation2 + $0x140] sm:$0xff]
      %v2601 = vld [vmem:[#allocation2 + $0x148] sm:$0xff]
      %v2602 = vld [vmem:[#allocation2 + $0x150] sm:$0xff]
      %v2603 = vld [vmem:[#allocation2 + $0x158] sm:$0xff]
      %v2604 = vld [vmem:[#allocation2 + $0x40] sm:$0xf]
      %v2605 = vld [vmem:[#allocation2 + $0x48] sm:$0xf]
      %v2606 = vld [vmem:[#allocation2 + $0x50] sm:$0xf]
      %v2607 = vld [vmem:[#allocation2 + $0x58] sm:$0xf]
      %v2612 = vunpack.c.l.b16 %v2596
      %v2613 = vunpack.c.h.b16 %v2596
      %v2614 = vunpack.c.l.b16 %v2597
      %v2615 = vunpack.c.h.b16 %v2597
      %v2616 = vunpack.c.l.b16 %v2598
      %v2617 = vunpack.c.h.b16 %v2598
      %v2618 = vunpack.c.l.b16 %v2599
      %v2619 = vunpack.c.h.b16 %v2599
      %v2620 = vpack.c.b16 %v2614, %v2612
      %v2621 = vpack.c.b16 %v2615, %v2613
      %v2622 = vpack.c.b16 %v2618, %v2616
      %v2623 = vpack.c.b16 %v2619, %v2617
      %2628 = vxpose.binary.xlu0.c.b16.start [1/16] %v2621, %v2620, 128
      %2629 = vxpose.binary.xlu0.c.b16.cont [2/16] %v2623, %v2622, 128
      %2630 = vxpose.binary.xlu0.c.b16.cont [3/16] 0, 0, 128
      %2631 = vxpose.binary.xlu0.c.b16.cont [4/16] 0, 0, 128
      %2632 = vxpose.binary.xlu0.c.b16.cont [5/16] 0, 0, 128
      %2633 = vxpose.binary.xlu0.c.b16.cont [6/16] 0, 0, 128
      %2634 = vxpose.binary.xlu0.c.b16.cont [7/16] 0, 0, 128
      %2635 = vxpose.binary.xlu0.c.b16.end [8/16] 0, 0, 128
      %v2636 = vpop.trf.xlu0
      %v2637 = vpop.trf.xlu0
      %v2638 = vpop.trf.xlu0
      %v2639 = vpop.trf.xlu0
      %v2640 = vpop.trf.xlu0
      %v2641 = vpop.trf.xlu0
      %v2642 = vpop.trf.xlu0
      %v2643 = vpop.trf.xlu0
      %v2644 = vpop.trf.xlu0
      %v2645 = vpop.trf.xlu0
      %v2646 = vpop.trf.xlu0
      %v2647 = vpop.trf.xlu0
      %v2648 = vpop.trf.xlu0
      %v2649 = vpop.trf.xlu0
      %v2650 = vpop.trf.xlu0
      %v2651 = vpop.trf.xlu0
      %v2656 = vunpack.c.l.b16 %v2604
      %v2657 = vunpack.c.l.b16 %v2605
      %v2658 = vunpack.c.l.b16 %v2606
      %v2659 = vunpack.c.l.b16 %v2607
      %v2660 = vpack.c.b16 %v2657, %v2656
      %v2661 = vpack.c.b16 %v2659, %v2658
      %v2665 = vsel %vm891, %v2636, 0
      %v2668 = vsel %vm891, %v2638, 0
      %v2671 = vsel %vm891, %v2640, 0
      %v2674 = vsel %vm891, %v2642, 0
      %v2677 = vsel %vm891, %v2644, 0
      %v2680 = vsel %vm891, %v2646, 0
      %v2683 = vsel %vm891, %v2648, 0
      %v2686 = vsel %vm891, %v2650, 0
      %v2689 = vsel %vm891, %v2637, 0
      %v2692 = vsel %vm891, %v2639, 0
      %v2695 = vsel %vm891, %v2641, 0
      %v2698 = vsel %vm891, %v2643, 0
      %v2701 = vsel %vm891, %v2645, 0
      %v2704 = vsel %vm891, %v2647, 0
      %v2707 = vsel %vm891, %v2649, 0
      %v2710 = vsel %vm891, %v2651, 0
      %2712 = vmatpush.bf16.msra.mxu0 0
      %2713 = vmatpush.bf16.msra.mxu0 0
      %2714 = vmatpush.bf16.msra.mxu0 0
      %2715 = vmatpush.bf16.msra.mxu0 0
      %2716 = vmatpush.bf16.msra.mxu0 0
      %2717 = vmatpush.bf16.msra.mxu0 0
      %2718 = vmatpush.bf16.msra.mxu0 %v2661
      %2719 = vmatpush.bf16.msra.mxu0 %v2660
      %2720 = vmatmul.bf16.gmra.mxu0 %v2665
      %v2721 = vpop.f32.mrf.mxu0
      %v2722 = vadd.f32 0.0, %v2721
      %v2723 = vpop.f32.mrf.mxu0
      %v2724 = vadd.f32 0.0, %v2723
      %2725 = vmatmul.bf16.gmra.mxu0 %v2668
      %v2726 = vpop.f32.mrf.mxu0
      %v2727 = vadd.f32 0.0, %v2726
      %v2728 = vpop.f32.mrf.mxu0
      %v2729 = vadd.f32 0.0, %v2728
      %2730 = vmatmul.bf16.gmra.mxu0 %v2671
      %v2731 = vpop.f32.mrf.mxu0
      %v2732 = vadd.f32 0.0, %v2731
      %v2733 = vpop.f32.mrf.mxu0
      %v2734 = vadd.f32 0.0, %v2733
      %2735 = vmatmul.bf16.gmra.mxu0 %v2674
      %v2736 = vpop.f32.mrf.mxu0
      %v2737 = vadd.f32 0.0, %v2736
      %v2738 = vpop.f32.mrf.mxu0
      %v2739 = vadd.f32 0.0, %v2738
      %2740 = vmatmul.bf16.gmra.mxu0 %v2677
      %v2741 = vpop.f32.mrf.mxu0
      %v2742 = vadd.f32 0.0, %v2741
      %v2743 = vpop.f32.mrf.mxu0
      %v2744 = vadd.f32 0.0, %v2743
      %2745 = vmatmul.bf16.gmra.mxu0 %v2680
      %v2746 = vpop.f32.mrf.mxu0
      %v2747 = vadd.f32 0.0, %v2746
      %v2748 = vpop.f32.mrf.mxu0
      %v2749 = vadd.f32 0.0, %v2748
      %2750 = vmatmul.bf16.gmra.mxu0 %v2683
      %v2751 = vpop.f32.mrf.mxu0
      %v2752 = vadd.f32 0.0, %v2751
      %v2753 = vpop.f32.mrf.mxu0
      %v2754 = vadd.f32 0.0, %v2753
      %2755 = vmatmul.bf16.gmra.mxu0 %v2686
      %v2756 = vpop.f32.mrf.mxu0
      %v2757 = vadd.f32 0.0, %v2756
      %v2758 = vpop.f32.mrf.mxu0
      %v2759 = vadd.f32 0.0, %v2758
      %2760 = vmatmul.bf16.gmra.mxu0 %v2689
      %v2761 = vpop.f32.mrf.mxu0
      %v2762 = vadd.f32 0.0, %v2761
      %v2763 = vpop.f32.mrf.mxu0
      %v2764 = vadd.f32 0.0, %v2763
      %2765 = vmatmul.bf16.gmra.mxu0 %v2692
      %v2766 = vpop.f32.mrf.mxu0
      %v2767 = vadd.f32 0.0, %v2766
      %v2768 = vpop.f32.mrf.mxu0
      %v2769 = vadd.f32 0.0, %v2768
      %2770 = vmatmul.bf16.gmra.mxu0 %v2695
      %v2771 = vpop.f32.mrf.mxu0
      %v2772 = vadd.f32 0.0, %v2771
      %v2773 = vpop.f32.mrf.mxu0
      %v2774 = vadd.f32 0.0, %v2773
      %2775 = vmatmul.bf16.gmra.mxu0 %v2698
      %v2776 = vpop.f32.mrf.mxu0
      %v2777 = vadd.f32 0.0, %v2776
      %v2778 = vpop.f32.mrf.mxu0
      %v2779 = vadd.f32 0.0, %v2778
      %2780 = vmatmul.bf16.gmra.mxu0 %v2701
      %v2781 = vpop.f32.mrf.mxu0
      %v2782 = vadd.f32 0.0, %v2781
      %v2783 = vpop.f32.mrf.mxu0
      %v2784 = vadd.f32 0.0, %v2783
      %2785 = vmatmul.bf16.gmra.mxu0 %v2704
      %v2786 = vpop.f32.mrf.mxu0
      %v2787 = vadd.f32 0.0, %v2786
      %v2788 = vpop.f32.mrf.mxu0
      %v2789 = vadd.f32 0.0, %v2788
      %2790 = vmatmul.bf16.gmra.mxu0 %v2707
      %v2791 = vpop.f32.mrf.mxu0
      %v2792 = vadd.f32 0.0, %v2791
      %v2793 = vpop.f32.mrf.mxu0
      %v2794 = vadd.f32 0.0, %v2793
      %2795 = vmatmul.bf16.gmra.mxu0 %v2710
      %v2796 = vpop.f32.mrf.mxu0
      %v2797 = vadd.f32 0.0, %v2796
      %v2798 = vpop.f32.mrf.mxu0
      %v2799 = vadd.f32 0.0, %v2798
      %2800 = vdwg.mxu0
      %v2801 = vmax.f32 %v2722, %v2732
      %v2802 = vmax.f32 %v2724, %v2734
      %v2803 = vmax.f32 %v2727, %v2737
      %v2804 = vmax.f32 %v2729, %v2739
      %v2805 = vmax.f32 %v2801, %v2742
      %v2806 = vmax.f32 %v2802, %v2744
      %v2807 = vmax.f32 %v2803, %v2747
      %v2808 = vmax.f32 %v2804, %v2749
      %v2809 = vmax.f32 %v2805, %v2752
      %v2810 = vmax.f32 %v2806, %v2754
      %v2811 = vmax.f32 %v2807, %v2757
      %v2812 = vmax.f32 %v2808, %v2759
      %v2813 = vmax.f32 %v2809, %v2762
      %v2814 = vmax.f32 %v2810, %v2764
      %v2815 = vmax.f32 %v2811, %v2767
      %v2816 = vmax.f32 %v2812, %v2769
      %v2817 = vmax.f32 %v2813, %v2772
      %v2818 = vmax.f32 %v2814, %v2774
      %v2819 = vmax.f32 %v2815, %v2777
      %v2820 = vmax.f32 %v2816, %v2779
      %v2821 = vmax.f32 %v2817, %v2782
      %v2822 = vmax.f32 %v2818, %v2784
      %v2823 = vmax.f32 %v2819, %v2787
      %v2824 = vmax.f32 %v2820, %v2789
      %v2825 = vmax.f32 %v2821, %v2792
      %v2826 = vmax.f32 %v2822, %v2794
      %v2827 = vmax.f32 %v2823, %v2797
      %v2828 = vmax.f32 %v2824, %v2799
      %v2829 = vmax.f32 %v2825, %v2826
      %v2830 = vmax.f32 %v2827, %v2828
      %v2831 = vmax.f32 %v2829, %v2830
      %v2832 = vrot.slane %v2831, 4
      %v2833 = vmax.f32 %v2831, %v2832
      %v2834 = vrot.slane %v2833, 2
      %v2835 = vmax.f32 %v2833, %v2834
      %v2836 = vrot.slane %v2835, 1
      %v2837 = vmax.f32 %v2835, %v2836
      %v2838 = vsub.f32 %v2722, %v2837
      %v2839 = vsub.f32 %v2724, %v2837
      %v2840 = vsub.f32 %v2727, %v2837
      %v2841 = vsub.f32 %v2729, %v2837
      %v2842 = vsub.f32 %v2732, %v2837
      %v2843 = vsub.f32 %v2734, %v2837
      %v2844 = vsub.f32 %v2737, %v2837
      %v2845 = vsub.f32 %v2739, %v2837
      %v2846 = vsub.f32 %v2742, %v2837
      %v2847 = vsub.f32 %v2744, %v2837
      %v2848 = vsub.f32 %v2747, %v2837
      %v2849 = vsub.f32 %v2749, %v2837
      %v2850 = vsub.f32 %v2752, %v2837
      %v2851 = vsub.f32 %v2754, %v2837
      %v2852 = vsub.f32 %v2757, %v2837
      %v2853 = vsub.f32 %v2759, %v2837
      %v2854 = vsub.f32 %v2762, %v2837
      %v2855 = vsub.f32 %v2764, %v2837
      %v2856 = vsub.f32 %v2767, %v2837
      %v2857 = vsub.f32 %v2769, %v2837
      %v2858 = vsub.f32 %v2772, %v2837
      %v2859 = vsub.f32 %v2774, %v2837
      %v2860 = vsub.f32 %v2777, %v2837
      %v2861 = vsub.f32 %v2779, %v2837
      %v2862 = vsub.f32 %v2782, %v2837
      %v2863 = vsub.f32 %v2784, %v2837
      %v2864 = vsub.f32 %v2787, %v2837
      %v2865 = vsub.f32 %v2789, %v2837
      %v2866 = vsub.f32 %v2792, %v2837
      %v2867 = vsub.f32 %v2794, %v2837
      %v2868 = vsub.f32 %v2797, %v2837
      %v2869 = vsub.f32 %v2799, %v2837
      %v2870 = vmul.f32 %v2838, 1.442695
      %v2871 = vpow.pop %v2870
      %v2872 = vmul.f32 %v2839, 1.442695
      %v2873 = vpow.pop %v2872
      %v2874 = vmul.f32 %v2840, 1.442695
      %v2875 = vpow.pop %v2874
      %v2876 = vmul.f32 %v2841, 1.442695
      %v2877 = vpow.pop %v2876
      %v2878 = vmul.f32 %v2842, 1.442695
      %v2879 = vpow.pop %v2878
      %v2880 = vmul.f32 %v2843, 1.442695
      %v2881 = vpow.pop %v2880
      %v2882 = vmul.f32 %v2844, 1.442695
      %v2883 = vpow.pop %v2882
      %v2884 = vmul.f32 %v2845, 1.442695
      %v2885 = vpow.pop %v2884
      %v2886 = vmul.f32 %v2846, 1.442695
      %v2887 = vpow.pop %v2886
      %v2888 = vmul.f32 %v2847, 1.442695
      %v2889 = vpow.pop %v2888
      %v2890 = vmul.f32 %v2848, 1.442695
      %v2891 = vpow.pop %v2890
      %v2892 = vmul.f32 %v2849, 1.442695
      %v2893 = vpow.pop %v2892
      %v2894 = vmul.f32 %v2850, 1.442695
      %v2895 = vpow.pop %v2894
      %v2896 = vmul.f32 %v2851, 1.442695
      %v2897 = vpow.pop %v2896
      %v2898 = vmul.f32 %v2852, 1.442695
      %v2899 = vpow.pop %v2898
      %v2900 = vmul.f32 %v2853, 1.442695
      %v2901 = vpow.pop %v2900
      %v2902 = vmul.f32 %v2854, 1.442695
      %v2903 = vpow.pop %v2902
      %v2904 = vmul.f32 %v2855, 1.442695
      %v2905 = vpow.pop %v2904
      %v2906 = vmul.f32 %v2856, 1.442695
      %v2907 = vpow.pop %v2906
      %v2908 = vmul.f32 %v2857, 1.442695
      %v2909 = vpow.pop %v2908
      %v2910 = vmul.f32 %v2858, 1.442695
      %v2911 = vpow.pop %v2910
      %v2912 = vmul.f32 %v2859, 1.442695
      %v2913 = vpow.pop %v2912
      %v2914 = vmul.f32 %v2860, 1.442695
      %v2915 = vpow.pop %v2914
      %v2916 = vmul.f32 %v2861, 1.442695
      %v2917 = vpow.pop %v2916
      %v2918 = vmul.f32 %v2862, 1.442695
      %v2919 = vpow.pop %v2918
      %v2920 = vmul.f32 %v2863, 1.442695
      %v2921 = vpow.pop %v2920
      %v2922 = vmul.f32 %v2864, 1.442695
      %v2923 = vpow.pop %v2922
      %v2924 = vmul.f32 %v2865, 1.442695
      %v2925 = vpow.pop %v2924
      %v2926 = vmul.f32 %v2866, 1.442695
      %v2927 = vpow.pop %v2926
      %v2928 = vmul.f32 %v2867, 1.442695
      %v2929 = vpow.pop %v2928
      %v2930 = vmul.f32 %v2868, 1.442695
      %v2931 = vpow.pop %v2930
      %v2932 = vmul.f32 %v2869, 1.442695
      %v2933 = vpow.pop %v2932
      %v2934 = vadd.f32 %v2871, %v2873
      %v2935 = vadd.f32 %v2934, %v2875
      %v2936 = vadd.f32 %v2935, %v2877
      %v2937 = vadd.f32 %v2936, %v2879
      %v2938 = vadd.f32 %v2937, %v2881
      %v2939 = vadd.f32 %v2938, %v2883
      %v2940 = vadd.f32 %v2939, %v2885
      %v2941 = vadd.f32 %v2940, %v2887
      %v2942 = vadd.f32 %v2941, %v2889
      %v2943 = vadd.f32 %v2942, %v2891
      %v2944 = vadd.f32 %v2943, %v2893
      %v2945 = vadd.f32 %v2944, %v2895
      %v2946 = vadd.f32 %v2945, %v2897
      %v2947 = vadd.f32 %v2946, %v2899
      %v2948 = vadd.f32 %v2947, %v2901
      %v2949 = vadd.f32 %v2948, %v2903
      %v2950 = vadd.f32 %v2949, %v2905
      %v2951 = vadd.f32 %v2950, %v2907
      %v2952 = vadd.f32 %v2951, %v2909
      %v2953 = vadd.f32 %v2952, %v2911
      %v2954 = vadd.f32 %v2953, %v2913
      %v2955 = vadd.f32 %v2954, %v2915
      %v2956 = vadd.f32 %v2955, %v2917
      %v2957 = vadd.f32 %v2956, %v2919
      %v2958 = vadd.f32 %v2957, %v2921
      %v2959 = vadd.f32 %v2958, %v2923
      %v2960 = vadd.f32 %v2959, %v2925
      %v2961 = vadd.f32 %v2960, %v2927
      %v2962 = vadd.f32 %v2961, %v2929
      %v2963 = vadd.f32 %v2962, %v2931
      %v2964 = vadd.f32 %v2963, %v2933
      %v2965 = vrot.slane %v2964, 4
      %v2966 = vadd.f32 %v2964, %v2965
      %v2967 = vrot.slane %v2966, 2
      %v2968 = vadd.f32 %v2966, %v2967
      %v2969 = vrot.slane %v2968, 1
      %v2970 = vadd.f32 %v2968, %v2969
      %v2971 = vrcp.pop %v2970
      %v2972 = vmul.f32 %v2970, %v2971
      %v2973 = vsub.f32 1.0, %v2972
      %v2974 = vmul.f32 %v2971, %v2973
      %v2975 = vadd.f32 %v2971, %v2974
      %vm2976 = vweird.f32 %v2970
      %vm2977 = vweird.f32 %v2971
      %vm2978 = vmor %vm2976, %vm2977
      %v2979 = vsel %vm2978, %v2971, %v2975
      %v2980 = vand.u32 2147483647, %v2970
      %vm2981 = vcmp.eq.f32.partialorder %v2980, 8.507059e+37
      %v2982 = vand.u32 %v2970, 2147483648
      %v2983 = vor.u32 1.1754944e-38, %v2982
      %v2984 = vsel %vm2981, %v2983, %v2979
      %v2985 = vmul.f32 %v2871, %v2984
      %v2986 = vmul.f32 %v2873, %v2984
      %v2987 = vmul.f32 %v2875, %v2984
      %v2988 = vmul.f32 %v2877, %v2984
      %v2989 = vmul.f32 %v2879, %v2984
      %v2990 = vmul.f32 %v2881, %v2984
      %v2991 = vmul.f32 %v2883, %v2984
      %v2992 = vmul.f32 %v2885, %v2984
      %v2993 = vmul.f32 %v2887, %v2984
      %v2994 = vmul.f32 %v2889, %v2984
      %v2995 = vmul.f32 %v2891, %v2984
      %v2996 = vmul.f32 %v2893, %v2984
      %v2997 = vmul.f32 %v2895, %v2984
      %v2998 = vmul.f32 %v2897, %v2984
      %v2999 = vmul.f32 %v2899, %v2984
      %v3000 = vmul.f32 %v2901, %v2984
      %v3001 = vmul.f32 %v2903, %v2984
      %v3002 = vmul.f32 %v2905, %v2984
      %v3003 = vmul.f32 %v2907, %v2984
      %v3004 = vmul.f32 %v2909, %v2984
      %v3005 = vmul.f32 %v2911, %v2984
      %v3006 = vmul.f32 %v2913, %v2984
      %v3007 = vmul.f32 %v2915, %v2984
      %v3008 = vmul.f32 %v2917, %v2984
      %v3009 = vmul.f32 %v2919, %v2984
      %v3010 = vmul.f32 %v2921, %v2984
      %v3011 = vmul.f32 %v2923, %v2984
      %v3012 = vmul.f32 %v2925, %v2984
      %v3013 = vmul.f32 %v2927, %v2984
      %v3014 = vmul.f32 %v2929, %v2984
      %v3015 = vmul.f32 %v2931, %v2984
      %v3016 = vmul.f32 %v2933, %v2984
      %v3017 = vpack.c.bf16 %v2986, %v2985
      %v3018 = vpack.c.bf16 %v2988, %v2987
      %v3019 = vpack.c.bf16 %v2990, %v2989
      %v3020 = vpack.c.bf16 %v2992, %v2991
      %v3021 = vpack.c.bf16 %v2994, %v2993
      %v3022 = vpack.c.bf16 %v2996, %v2995
      %v3023 = vpack.c.bf16 %v2998, %v2997
      %v3024 = vpack.c.bf16 %v3000, %v2999
      %v3025 = vpack.c.bf16 %v3002, %v3001
      %v3026 = vpack.c.bf16 %v3004, %v3003
      %v3027 = vpack.c.bf16 %v3006, %v3005
      %v3028 = vpack.c.bf16 %v3008, %v3007
      %v3029 = vpack.c.bf16 %v3010, %v3009
      %v3030 = vpack.c.bf16 %v3012, %v3011
      %v3031 = vpack.c.bf16 %v3014, %v3013
      %v3032 = vpack.c.bf16 %v3016, %v3015
      %v3037 = vunpack.c.l.b16 %v2600
      %v3038 = vunpack.c.h.b16 %v2600
      %v3039 = vunpack.c.l.b16 %v2601
      %v3040 = vunpack.c.h.b16 %v2601
      %v3041 = vunpack.c.l.b16 %v2602
      %v3042 = vunpack.c.h.b16 %v2602
      %v3043 = vunpack.c.l.b16 %v2603
      %v3044 = vunpack.c.h.b16 %v2603
      %v3045 = vpack.c.b16 %v3039, %v3037
      %v3046 = vpack.c.b16 %v3040, %v3038
      %v3047 = vpack.c.b16 %v3043, %v3041
      %v3048 = vpack.c.b16 %v3044, %v3042
      %3053 = vmatpush.bf16.msra.mxu0 %v3024
      %3054 = vmatpush.bf16.msra.mxu0 %v3023
      %3055 = vmatpush.bf16.msra.mxu0 %v3022
      %3056 = vmatpush.bf16.msra.mxu0 %v3021
      %3057 = vmatpush.bf16.msra.mxu0 %v3020
      %3058 = vmatpush.bf16.msra.mxu0 %v3019
      %3059 = vmatpush.bf16.msra.mxu0 %v3018
      %3060 = vmatpush.bf16.msra.mxu0 %v3017
      %3061 = vmatmul.bf16.gmra.mxu0 %v3045
      %v3062 = vpop.f32.mrf.mxu0
      %v3063 = vadd.f32 0.0, %v3062
      %v3064 = vpop.f32.mrf.mxu0
      %v3065 = vadd.f32 0.0, %v3064
      %3066 = vmatmul.bf16.gmra.mxu0 %v3047
      %v3067 = vpop.f32.mrf.mxu0
      %v3068 = vadd.f32 0.0, %v3067
      %v3069 = vpop.f32.mrf.mxu0
      %v3070 = vadd.f32 0.0, %v3069
      %3071 = vdwg.mxu0
      %3072 = vmatpush.bf16.msra.mxu0 %v3032
      %3073 = vmatpush.bf16.msra.mxu0 %v3031
      %3074 = vmatpush.bf16.msra.mxu0 %v3030
      %3075 = vmatpush.bf16.msra.mxu0 %v3029
      %3076 = vmatpush.bf16.msra.mxu0 %v3028
      %3077 = vmatpush.bf16.msra.mxu0 %v3027
      %3078 = vmatpush.bf16.msra.mxu0 %v3026
      %3079 = vmatpush.bf16.msra.mxu0 %v3025
      %3080 = vmatmul.bf16.gmra.mxu0 %v3046
      %v3081 = vpop.f32.mrf.mxu0
      %v3082 = vadd.f32 %v3063, %v3081
      %v3083 = vpop.f32.mrf.mxu0
      %v3084 = vadd.f32 %v3065, %v3083
      %3085 = vmatmul.bf16.gmra.mxu0 %v3048
      %v3086 = vpop.f32.mrf.mxu0
      %v3087 = vadd.f32 %v3068, %v3086
      %v3088 = vpop.f32.mrf.mxu0
      %v3089 = vadd.f32 %v3070, %v3088
      %3090 = vdwg.mxu0
      %v3091 = vpack.c.bf16 %v3082, %v3082
      %v3092 = vpack.c.bf16 %v3084, %v3084
      %v3093 = vpack.c.bf16 %v3087, %v3087
      %v3094 = vpack.c.bf16 %v3089, %v3089
      %3095 = vst [vmem:[#allocation3 + $0x40] sm:$0xf] %v3091
      %3096 = vst [vmem:[#allocation3 + $0x48] sm:$0xf] %v3092
      %3097 = vst [vmem:[#allocation3 + $0x50] sm:$0xf] %v3093
      %3098 = vst [vmem:[#allocation3 + $0x58] sm:$0xf] %v3094
      %v3099 = vld [vmem:[#allocation2 + $0x44] sm:$0xf]
      %v3100 = vld [vmem:[#allocation2 + $0x4c] sm:$0xf]
      %v3101 = vld [vmem:[#allocation2 + $0x54] sm:$0xf]
      %v3102 = vld [vmem:[#allocation2 + $0x5c] sm:$0xf]
      %v3107 = vunpack.c.l.b16 %v3099
      %v3108 = vunpack.c.l.b16 %v3100
      %v3109 = vunpack.c.l.b16 %v3101
      %v3110 = vunpack.c.l.b16 %v3102
      %v3111 = vpack.c.b16 %v3108, %v3107
      %v3112 = vpack.c.b16 %v3110, %v3109
      %3115 = vmatpush.bf16.msra.mxu0 0
      %3116 = vmatpush.bf16.msra.mxu0 0
      %3117 = vmatpush.bf16.msra.mxu0 0
      %3118 = vmatpush.bf16.msra.mxu0 0
      %3119 = vmatpush.bf16.msra.mxu0 0
      %3120 = vmatpush.bf16.msra.mxu0 0
      %3121 = vmatpush.bf16.msra.mxu0 %v3112
      %3122 = vmatpush.bf16.msra.mxu0 %v3111
      %3123 = vmatmul.bf16.gmra.mxu0 %v2665
      %v3124 = vpop.f32.mrf.mxu0
      %v3125 = vadd.f32 0.0, %v3124
      %v3126 = vpop.f32.mrf.mxu0
      %v3127 = vadd.f32 0.0, %v3126
      %3128 = vmatmul.bf16.gmra.mxu0 %v2668
      %v3129 = vpop.f32.mrf.mxu0
      %v3130 = vadd.f32 0.0, %v3129
      %v3131 = vpop.f32.mrf.mxu0
      %v3132 = vadd.f32 0.0, %v3131
      %3133 = vmatmul.bf16.gmra.mxu0 %v2671
      %v3134 = vpop.f32.mrf.mxu0
      %v3135 = vadd.f32 0.0, %v3134
      %v3136 = vpop.f32.mrf.mxu0
      %v3137 = vadd.f32 0.0, %v3136
      %3138 = vmatmul.bf16.gmra.mxu0 %v2674
      %v3139 = vpop.f32.mrf.mxu0
      %v3140 = vadd.f32 0.0, %v3139
      %v3141 = vpop.f32.mrf.mxu0
      %v3142 = vadd.f32 0.0, %v3141
      %3143 = vmatmul.bf16.gmra.mxu0 %v2677
      %v3144 = vpop.f32.mrf.mxu0
      %v3145 = vadd.f32 0.0, %v3144
      %v3146 = vpop.f32.mrf.mxu0
      %v3147 = vadd.f32 0.0, %v3146
      %3148 = vmatmul.bf16.gmra.mxu0 %v2680
      %v3149 = vpop.f32.mrf.mxu0
      %v3150 = vadd.f32 0.0, %v3149
      %v3151 = vpop.f32.mrf.mxu0
      %v3152 = vadd.f32 0.0, %v3151
      %3153 = vmatmul.bf16.gmra.mxu0 %v2683
      %v3154 = vpop.f32.mrf.mxu0
      %v3155 = vadd.f32 0.0, %v3154
      %v3156 = vpop.f32.mrf.mxu0
      %v3157 = vadd.f32 0.0, %v3156
      %3158 = vmatmul.bf16.gmra.mxu0 %v2686
      %v3159 = vpop.f32.mrf.mxu0
      %v3160 = vadd.f32 0.0, %v3159
      %v3161 = vpop.f32.mrf.mxu0
      %v3162 = vadd.f32 0.0, %v3161
      %3163 = vmatmul.bf16.gmra.mxu0 %v2689
      %v3164 = vpop.f32.mrf.mxu0
      %v3165 = vadd.f32 0.0, %v3164
      %v3166 = vpop.f32.mrf.mxu0
      %v3167 = vadd.f32 0.0, %v3166
      %3168 = vmatmul.bf16.gmra.mxu0 %v2692
      %v3169 = vpop.f32.mrf.mxu0
      %v3170 = vadd.f32 0.0, %v3169
      %v3171 = vpop.f32.mrf.mxu0
      %v3172 = vadd.f32 0.0, %v3171
      %3173 = vmatmul.bf16.gmra.mxu0 %v2695
      %v3174 = vpop.f32.mrf.mxu0
      %v3175 = vadd.f32 0.0, %v3174
      %v3176 = vpop.f32.mrf.mxu0
      %v3177 = vadd.f32 0.0, %v3176
      %3178 = vmatmul.bf16.gmra.mxu0 %v2698
      %v3179 = vpop.f32.mrf.mxu0
      %v3180 = vadd.f32 0.0, %v3179
      %v3181 = vpop.f32.mrf.mxu0
      %v3182 = vadd.f32 0.0, %v3181
      %3183 = vmatmul.bf16.gmra.mxu0 %v2701
      %v3184 = vpop.f32.mrf.mxu0
      %v3185 = vadd.f32 0.0, %v3184
      %v3186 = vpop.f32.mrf.mxu0
      %v3187 = vadd.f32 0.0, %v3186
      %3188 = vmatmul.bf16.gmra.mxu0 %v2704
      %v3189 = vpop.f32.mrf.mxu0
      %v3190 = vadd.f32 0.0, %v3189
      %v3191 = vpop.f32.mrf.mxu0
      %v3192 = vadd.f32 0.0, %v3191
      %3193 = vmatmul.bf16.gmra.mxu0 %v2707
      %v3194 = vpop.f32.mrf.mxu0
      %v3195 = vadd.f32 0.0, %v3194
      %v3196 = vpop.f32.mrf.mxu0
      %v3197 = vadd.f32 0.0, %v3196
      %3198 = vmatmul.bf16.gmra.mxu0 %v2710
      %v3199 = vpop.f32.mrf.mxu0
      %v3200 = vadd.f32 0.0, %v3199
      %v3201 = vpop.f32.mrf.mxu0
      %v3202 = vadd.f32 0.0, %v3201
      %3203 = vdwg.mxu0
      %v3204 = vmax.f32 %v3125, %v3135
      %v3205 = vmax.f32 %v3127, %v3137
      %v3206 = vmax.f32 %v3130, %v3140
      %v3207 = vmax.f32 %v3132, %v3142
      %v3208 = vmax.f32 %v3204, %v3145
      %v3209 = vmax.f32 %v3205, %v3147
      %v3210 = vmax.f32 %v3206, %v3150
      %v3211 = vmax.f32 %v3207, %v3152
      %v3212 = vmax.f32 %v3208, %v3155
      %v3213 = vmax.f32 %v3209, %v3157
      %v3214 = vmax.f32 %v3210, %v3160
      %v3215 = vmax.f32 %v3211, %v3162
      %v3216 = vmax.f32 %v3212, %v3165
      %v3217 = vmax.f32 %v3213, %v3167
      %v3218 = vmax.f32 %v3214, %v3170
      %v3219 = vmax.f32 %v3215, %v3172
      %v3220 = vmax.f32 %v3216, %v3175
      %v3221 = vmax.f32 %v3217, %v3177
      %v3222 = vmax.f32 %v3218, %v3180
      %v3223 = vmax.f32 %v3219, %v3182
      %v3224 = vmax.f32 %v3220, %v3185
      %v3225 = vmax.f32 %v3221, %v3187
      %v3226 = vmax.f32 %v3222, %v3190
      %v3227 = vmax.f32 %v3223, %v3192
      %v3228 = vmax.f32 %v3224, %v3195
      %v3229 = vmax.f32 %v3225, %v3197
      %v3230 = vmax.f32 %v3226, %v3200
      %v3231 = vmax.f32 %v3227, %v3202
      %v3232 = vmax.f32 %v3228, %v3229
      %v3233 = vmax.f32 %v3230, %v3231
      %v3234 = vmax.f32 %v3232, %v3233
      %v3235 = vrot.slane %v3234, 4
      %v3236 = vmax.f32 %v3234, %v3235
      %v3237 = vrot.slane %v3236, 2
      %v3238 = vmax.f32 %v3236, %v3237
      %v3239 = vrot.slane %v3238, 1
      %v3240 = vmax.f32 %v3238, %v3239
      %v3241 = vsub.f32 %v3125, %v3240
      %v3242 = vsub.f32 %v3127, %v3240
      %v3243 = vsub.f32 %v3130, %v3240
      %v3244 = vsub.f32 %v3132, %v3240
      %v3245 = vsub.f32 %v3135, %v3240
      %v3246 = vsub.f32 %v3137, %v3240
      %v3247 = vsub.f32 %v3140, %v3240
      %v3248 = vsub.f32 %v3142, %v3240
      %v3249 = vsub.f32 %v3145, %v3240
      %v3250 = vsub.f32 %v3147, %v3240
      %v3251 = vsub.f32 %v3150, %v3240
      %v3252 = vsub.f32 %v3152, %v3240
      %v3253 = vsub.f32 %v3155, %v3240
      %v3254 = vsub.f32 %v3157, %v3240
      %v3255 = vsub.f32 %v3160, %v3240
      %v3256 = vsub.f32 %v3162, %v3240
      %v3257 = vsub.f32 %v3165, %v3240
      %v3258 = vsub.f32 %v3167, %v3240
      %v3259 = vsub.f32 %v3170, %v3240
      %v3260 = vsub.f32 %v3172, %v3240
      %v3261 = vsub.f32 %v3175, %v3240
      %v3262 = vsub.f32 %v3177, %v3240
      %v3263 = vsub.f32 %v3180, %v3240
      %v3264 = vsub.f32 %v3182, %v3240
      %v3265 = vsub.f32 %v3185, %v3240
      %v3266 = vsub.f32 %v3187, %v3240
      %v3267 = vsub.f32 %v3190, %v3240
      %v3268 = vsub.f32 %v3192, %v3240
      %v3269 = vsub.f32 %v3195, %v3240
      %v3270 = vsub.f32 %v3197, %v3240
      %v3271 = vsub.f32 %v3200, %v3240
      %v3272 = vsub.f32 %v3202, %v3240
      %v3273 = vmul.f32 %v3241, 1.442695
      %v3274 = vpow.pop %v3273
      %v3275 = vmul.f32 %v3242, 1.442695
      %v3276 = vpow.pop %v3275
      %v3277 = vmul.f32 %v3243, 1.442695
      %v3278 = vpow.pop %v3277
      %v3279 = vmul.f32 %v3244, 1.442695
      %v3280 = vpow.pop %v3279
      %v3281 = vmul.f32 %v3245, 1.442695
      %v3282 = vpow.pop %v3281
      %v3283 = vmul.f32 %v3246, 1.442695
      %v3284 = vpow.pop %v3283
      %v3285 = vmul.f32 %v3247, 1.442695
      %v3286 = vpow.pop %v3285
      %v3287 = vmul.f32 %v3248, 1.442695
      %v3288 = vpow.pop %v3287
      %v3289 = vmul.f32 %v3249, 1.442695
      %v3290 = vpow.pop %v3289
      %v3291 = vmul.f32 %v3250, 1.442695
      %v3292 = vpow.pop %v3291
      %v3293 = vmul.f32 %v3251, 1.442695
      %v3294 = vpow.pop %v3293
      %v3295 = vmul.f32 %v3252, 1.442695
      %v3296 = vpow.pop %v3295
      %v3297 = vmul.f32 %v3253, 1.442695
      %v3298 = vpow.pop %v3297
      %v3299 = vmul.f32 %v3254, 1.442695
      %v3300 = vpow.pop %v3299
      %v3301 = vmul.f32 %v3255, 1.442695
      %v3302 = vpow.pop %v3301
      %v3303 = vmul.f32 %v3256, 1.442695
      %v3304 = vpow.pop %v3303
      %v3305 = vmul.f32 %v3257, 1.442695
      %v3306 = vpow.pop %v3305
      %v3307 = vmul.f32 %v3258, 1.442695
      %v3308 = vpow.pop %v3307
      %v3309 = vmul.f32 %v3259, 1.442695
      %v3310 = vpow.pop %v3309
      %v3311 = vmul.f32 %v3260, 1.442695
      %v3312 = vpow.pop %v3311
      %v3313 = vmul.f32 %v3261, 1.442695
      %v3314 = vpow.pop %v3313
      %v3315 = vmul.f32 %v3262, 1.442695
      %v3316 = vpow.pop %v3315
      %v3317 = vmul.f32 %v3263, 1.442695
      %v3318 = vpow.pop %v3317
      %v3319 = vmul.f32 %v3264, 1.442695
      %v3320 = vpow.pop %v3319
      %v3321 = vmul.f32 %v3265, 1.442695
      %v3322 = vpow.pop %v3321
      %v3323 = vmul.f32 %v3266, 1.442695
      %v3324 = vpow.pop %v3323
      %v3325 = vmul.f32 %v3267, 1.442695
      %v3326 = vpow.pop %v3325
      %v3327 = vmul.f32 %v3268, 1.442695
      %v3328 = vpow.pop %v3327
      %v3329 = vmul.f32 %v3269, 1.442695
      %v3330 = vpow.pop %v3329
      %v3331 = vmul.f32 %v3270, 1.442695
      %v3332 = vpow.pop %v3331
      %v3333 = vmul.f32 %v3271, 1.442695
      %v3334 = vpow.pop %v3333
      %v3335 = vmul.f32 %v3272, 1.442695
      %v3336 = vpow.pop %v3335
      %v3337 = vadd.f32 %v3274, %v3276
      %v3338 = vadd.f32 %v3337, %v3278
      %v3339 = vadd.f32 %v3338, %v3280
      %v3340 = vadd.f32 %v3339, %v3282
      %v3341 = vadd.f32 %v3340, %v3284
      %v3342 = vadd.f32 %v3341, %v3286
      %v3343 = vadd.f32 %v3342, %v3288
      %v3344 = vadd.f32 %v3343, %v3290
      %v3345 = vadd.f32 %v3344, %v3292
      %v3346 = vadd.f32 %v3345, %v3294
      %v3347 = vadd.f32 %v3346, %v3296
      %v3348 = vadd.f32 %v3347, %v3298
      %v3349 = vadd.f32 %v3348, %v3300
      %v3350 = vadd.f32 %v3349, %v3302
      %v3351 = vadd.f32 %v3350, %v3304
      %v3352 = vadd.f32 %v3351, %v3306
      %v3353 = vadd.f32 %v3352, %v3308
      %v3354 = vadd.f32 %v3353, %v3310
      %v3355 = vadd.f32 %v3354, %v3312
      %v3356 = vadd.f32 %v3355, %v3314
      %v3357 = vadd.f32 %v3356, %v3316
      %v3358 = vadd.f32 %v3357, %v3318
      %v3359 = vadd.f32 %v3358, %v3320
      %v3360 = vadd.f32 %v3359, %v3322
      %v3361 = vadd.f32 %v3360, %v3324
      %v3362 = vadd.f32 %v3361, %v3326
      %v3363 = vadd.f32 %v3362, %v3328
      %v3364 = vadd.f32 %v3363, %v3330
      %v3365 = vadd.f32 %v3364, %v3332
      %v3366 = vadd.f32 %v3365, %v3334
      %v3367 = vadd.f32 %v3366, %v3336
      %v3368 = vrot.slane %v3367, 4
      %v3369 = vadd.f32 %v3367, %v3368
      %v3370 = vrot.slane %v3369, 2
      %v3371 = vadd.f32 %v3369, %v3370
      %v3372 = vrot.slane %v3371, 1
      %v3373 = vadd.f32 %v3371, %v3372
      %v3374 = vrcp.pop %v3373
      %v3375 = vmul.f32 %v3373, %v3374
      %v3376 = vsub.f32 1.0, %v3375
      %v3377 = vmul.f32 %v3374, %v3376
      %v3378 = vadd.f32 %v3374, %v3377
      %vm3379 = vweird.f32 %v3373
      %vm3380 = vweird.f32 %v3374
      %vm3381 = vmor %vm3379, %vm3380
      %v3382 = vsel %vm3381, %v3374, %v3378
      %v3383 = vand.u32 2147483647, %v3373
      %vm3384 = vcmp.eq.f32.partialorder %v3383, 8.507059e+37
      %v3385 = vand.u32 %v3373, 2147483648
      %v3386 = vor.u32 1.1754944e-38, %v3385
      %v3387 = vsel %vm3384, %v3386, %v3382
      %v3388 = vmul.f32 %v3274, %v3387
      %v3389 = vmul.f32 %v3276, %v3387
      %v3390 = vmul.f32 %v3278, %v3387
      %v3391 = vmul.f32 %v3280, %v3387
      %v3392 = vmul.f32 %v3282, %v3387
      %v3393 = vmul.f32 %v3284, %v3387
      %v3394 = vmul.f32 %v3286, %v3387
      %v3395 = vmul.f32 %v3288, %v3387
      %v3396 = vmul.f32 %v3290, %v3387
      %v3397 = vmul.f32 %v3292, %v3387
      %v3398 = vmul.f32 %v3294, %v3387
      %v3399 = vmul.f32 %v3296, %v3387
      %v3400 = vmul.f32 %v3298, %v3387
      %v3401 = vmul.f32 %v3300, %v3387
      %v3402 = vmul.f32 %v3302, %v3387
      %v3403 = vmul.f32 %v3304, %v3387
      %v3404 = vmul.f32 %v3306, %v3387
      %v3405 = vmul.f32 %v3308, %v3387
      %v3406 = vmul.f32 %v3310, %v3387
      %v3407 = vmul.f32 %v3312, %v3387
      %v3408 = vmul.f32 %v3314, %v3387
      %v3409 = vmul.f32 %v3316, %v3387
      %v3410 = vmul.f32 %v3318, %v3387
      %v3411 = vmul.f32 %v3320, %v3387
      %v3412 = vmul.f32 %v3322, %v3387
      %v3413 = vmul.f32 %v3324, %v3387
      %v3414 = vmul.f32 %v3326, %v3387
      %v3415 = vmul.f32 %v3328, %v3387
      %v3416 = vmul.f32 %v3330, %v3387
      %v3417 = vmul.f32 %v3332, %v3387
      %v3418 = vmul.f32 %v3334, %v3387
      %v3419 = vmul.f32 %v3336, %v3387
      %v3420 = vpack.c.bf16 %v3389, %v3388
      %v3421 = vpack.c.bf16 %v3391, %v3390
      %v3422 = vpack.c.bf16 %v3393, %v3392
      %v3423 = vpack.c.bf16 %v3395, %v3394
      %v3424 = vpack.c.bf16 %v3397, %v3396
      %v3425 = vpack.c.bf16 %v3399, %v3398
      %v3426 = vpack.c.bf16 %v3401, %v3400
      %v3427 = vpack.c.bf16 %v3403, %v3402
      %v3428 = vpack.c.bf16 %v3405, %v3404
      %v3429 = vpack.c.bf16 %v3407, %v3406
      %v3430 = vpack.c.bf16 %v3409, %v3408
      %v3431 = vpack.c.bf16 %v3411, %v3410
      %v3432 = vpack.c.bf16 %v3413, %v3412
      %v3433 = vpack.c.bf16 %v3415, %v3414
      %v3434 = vpack.c.bf16 %v3417, %v3416
      %v3435 = vpack.c.bf16 %v3419, %v3418
      %3436 = vmatpush.bf16.msra.mxu0 %v3427
      %3437 = vmatpush.bf16.msra.mxu0 %v3426
      %3438 = vmatpush.bf16.msra.mxu0 %v3425
      %3439 = vmatpush.bf16.msra.mxu0 %v3424
      %3440 = vmatpush.bf16.msra.mxu0 %v3423
      %3441 = vmatpush.bf16.msra.mxu0 %v3422
      %3442 = vmatpush.bf16.msra.mxu0 %v3421
      %3443 = vmatpush.bf16.msra.mxu0 %v3420
      %3444 = vmatmul.bf16.gmra.mxu0 %v3045
      %v3445 = vpop.f32.mrf.mxu0
      %v3446 = vadd.f32 0.0, %v3445
      %v3447 = vpop.f32.mrf.mxu0
      %v3448 = vadd.f32 0.0, %v3447
      %3449 = vmatmul.bf16.gmra.mxu0 %v3047
      %v3450 = vpop.f32.mrf.mxu0
      %v3451 = vadd.f32 0.0, %v3450
      %v3452 = vpop.f32.mrf.mxu0
      %v3453 = vadd.f32 0.0, %v3452
      %3454 = vdwg.mxu0
      %3455 = vmatpush.bf16.msra.mxu0 %v3435
      %3456 = vmatpush.bf16.msra.mxu0 %v3434
      %3457 = vmatpush.bf16.msra.mxu0 %v3433
      %3458 = vmatpush.bf16.msra.mxu0 %v3432
      %3459 = vmatpush.bf16.msra.mxu0 %v3431
      %3460 = vmatpush.bf16.msra.mxu0 %v3430
      %3461 = vmatpush.bf16.msra.mxu0 %v3429
      %3462 = vmatpush.bf16.msra.mxu0 %v3428
      %3463 = vmatmul.bf16.gmra.mxu0 %v3046
      %v3464 = vpop.f32.mrf.mxu0
      %v3465 = vadd.f32 %v3446, %v3464
      %v3466 = vpop.f32.mrf.mxu0
      %v3467 = vadd.f32 %v3448, %v3466
      %3468 = vmatmul.bf16.gmra.mxu0 %v3048
      %v3469 = vpop.f32.mrf.mxu0
      %v3470 = vadd.f32 %v3451, %v3469
      %v3471 = vpop.f32.mrf.mxu0
      %v3472 = vadd.f32 %v3453, %v3471
      %3473 = vdwg.mxu0
      %v3474 = vpack.c.bf16 %v3465, %v3465
      %v3475 = vpack.c.bf16 %v3467, %v3467
      %v3476 = vpack.c.bf16 %v3470, %v3470
      %v3477 = vpack.c.bf16 %v3472, %v3472
      %3478 = vst [vmem:[#allocation3 + $0x44] sm:$0xf] %v3474
      %3479 = vst [vmem:[#allocation3 + $0x4c] sm:$0xf] %v3475
      %3480 = vst [vmem:[#allocation3 + $0x54] sm:$0xf] %v3476
      %3481 = vst [vmem:[#allocation3 + $0x5c] sm:$0xf] %v3477
      %v3482 = vld [vmem:[#allocation2 + $0xe0] sm:$0xff]
      %v3483 = vld [vmem:[#allocation2 + $0xe8] sm:$0xff]
      %v3484 = vld [vmem:[#allocation2 + $0xf0] sm:$0xff]
      %v3485 = vld [vmem:[#allocation2 + $0xf8] sm:$0xff]
      %v3486 = vld [vmem:[#allocation2 + $0x160] sm:$0xff]
      %v3487 = vld [vmem:[#allocation2 + $0x168] sm:$0xff]
      %v3488 = vld [vmem:[#allocation2 + $0x170] sm:$0xff]
      %v3489 = vld [vmem:[#allocation2 + $0x178] sm:$0xff]
      %v3490 = vld [vmem:[#allocation2 + $0x60] sm:$0xf]
      %v3491 = vld [vmem:[#allocation2 + $0x68] sm:$0xf]
      %v3492 = vld [vmem:[#allocation2 + $0x70] sm:$0xf]
      %v3493 = vld [vmem:[#allocation2 + $0x78] sm:$0xf]
      %v3498 = vunpack.c.l.b16 %v3482
      %v3499 = vunpack.c.h.b16 %v3482
      %v3500 = vunpack.c.l.b16 %v3483
      %v3501 = vunpack.c.h.b16 %v3483
      %v3502 = vunpack.c.l.b16 %v3484
      %v3503 = vunpack.c.h.b16 %v3484
      %v3504 = vunpack.c.l.b16 %v3485
      %v3505 = vunpack.c.h.b16 %v3485
      %v3506 = vpack.c.b16 %v3500, %v3498
      %v3507 = vpack.c.b16 %v3501, %v3499
      %v3508 = vpack.c.b16 %v3504, %v3502
      %v3509 = vpack.c.b16 %v3505, %v3503
      %3514 = vxpose.binary.xlu0.c.b16.start [1/16] %v3507, %v3506, 128
      %3515 = vxpose.binary.xlu0.c.b16.cont [2/16] %v3509, %v3508, 128
      %3516 = vxpose.binary.xlu0.c.b16.cont [3/16] 0, 0, 128
      %3517 = vxpose.binary.xlu0.c.b16.cont [4/16] 0, 0, 128
      %3518 = vxpose.binary.xlu0.c.b16.cont [5/16] 0, 0, 128
      %3519 = vxpose.binary.xlu0.c.b16.cont [6/16] 0, 0, 128
      %3520 = vxpose.binary.xlu0.c.b16.cont [7/16] 0, 0, 128
      %3521 = vxpose.binary.xlu0.c.b16.end [8/16] 0, 0, 128
      %v3522 = vpop.trf.xlu0
      %v3523 = vpop.trf.xlu0
      %v3524 = vpop.trf.xlu0
      %v3525 = vpop.trf.xlu0
      %v3526 = vpop.trf.xlu0
      %v3527 = vpop.trf.xlu0
      %v3528 = vpop.trf.xlu0
      %v3529 = vpop.trf.xlu0
      %v3530 = vpop.trf.xlu0
      %v3531 = vpop.trf.xlu0
      %v3532 = vpop.trf.xlu0
      %v3533 = vpop.trf.xlu0
      %v3534 = vpop.trf.xlu0
      %v3535 = vpop.trf.xlu0
      %v3536 = vpop.trf.xlu0
      %v3537 = vpop.trf.xlu0
      %v3542 = vunpack.c.l.b16 %v3490
      %v3543 = vunpack.c.l.b16 %v3491
      %v3544 = vunpack.c.l.b16 %v3492
      %v3545 = vunpack.c.l.b16 %v3493
      %v3546 = vpack.c.b16 %v3543, %v3542
      %v3547 = vpack.c.b16 %v3545, %v3544
      %v3551 = vsel %vm891, %v3522, 0
      %v3554 = vsel %vm891, %v3524, 0
      %v3557 = vsel %vm891, %v3526, 0
      %v3560 = vsel %vm891, %v3528, 0
      %v3563 = vsel %vm891, %v3530, 0
      %v3566 = vsel %vm891, %v3532, 0
      %v3569 = vsel %vm891, %v3534, 0
      %v3572 = vsel %vm891, %v3536, 0
      %v3575 = vsel %vm891, %v3523, 0
      %v3578 = vsel %vm891, %v3525, 0
      %v3581 = vsel %vm891, %v3527, 0
      %v3584 = vsel %vm891, %v3529, 0
      %v3587 = vsel %vm891, %v3531, 0
      %v3590 = vsel %vm891, %v3533, 0
      %v3593 = vsel %vm891, %v3535, 0
      %v3596 = vsel %vm891, %v3537, 0
      %3598 = vmatpush.bf16.msra.mxu0 0
      %3599 = vmatpush.bf16.msra.mxu0 0
      %3600 = vmatpush.bf16.msra.mxu0 0
      %3601 = vmatpush.bf16.msra.mxu0 0
      %3602 = vmatpush.bf16.msra.mxu0 0
      %3603 = vmatpush.bf16.msra.mxu0 0
      %3604 = vmatpush.bf16.msra.mxu0 %v3547
      %3605 = vmatpush.bf16.msra.mxu0 %v3546
      %3606 = vmatmul.bf16.gmra.mxu0 %v3551
      %v3607 = vpop.f32.mrf.mxu0
      %v3608 = vadd.f32 0.0, %v3607
      %v3609 = vpop.f32.mrf.mxu0
      %v3610 = vadd.f32 0.0, %v3609
      %3611 = vmatmul.bf16.gmra.mxu0 %v3554
      %v3612 = vpop.f32.mrf.mxu0
      %v3613 = vadd.f32 0.0, %v3612
      %v3614 = vpop.f32.mrf.mxu0
      %v3615 = vadd.f32 0.0, %v3614
      %3616 = vmatmul.bf16.gmra.mxu0 %v3557
      %v3617 = vpop.f32.mrf.mxu0
      %v3618 = vadd.f32 0.0, %v3617
      %v3619 = vpop.f32.mrf.mxu0
      %v3620 = vadd.f32 0.0, %v3619
      %3621 = vmatmul.bf16.gmra.mxu0 %v3560
      %v3622 = vpop.f32.mrf.mxu0
      %v3623 = vadd.f32 0.0, %v3622
      %v3624 = vpop.f32.mrf.mxu0
      %v3625 = vadd.f32 0.0, %v3624
      %3626 = vmatmul.bf16.gmra.mxu0 %v3563
      %v3627 = vpop.f32.mrf.mxu0
      %v3628 = vadd.f32 0.0, %v3627
      %v3629 = vpop.f32.mrf.mxu0
      %v3630 = vadd.f32 0.0, %v3629
      %3631 = vmatmul.bf16.gmra.mxu0 %v3566
      %v3632 = vpop.f32.mrf.mxu0
      %v3633 = vadd.f32 0.0, %v3632
      %v3634 = vpop.f32.mrf.mxu0
      %v3635 = vadd.f32 0.0, %v3634
      %3636 = vmatmul.bf16.gmra.mxu0 %v3569
      %v3637 = vpop.f32.mrf.mxu0
      %v3638 = vadd.f32 0.0, %v3637
      %v3639 = vpop.f32.mrf.mxu0
      %v3640 = vadd.f32 0.0, %v3639
      %3641 = vmatmul.bf16.gmra.mxu0 %v3572
      %v3642 = vpop.f32.mrf.mxu0
      %v3643 = vadd.f32 0.0, %v3642
      %v3644 = vpop.f32.mrf.mxu0
      %v3645 = vadd.f32 0.0, %v3644
      %3646 = vmatmul.bf16.gmra.mxu0 %v3575
      %v3647 = vpop.f32.mrf.mxu0
      %v3648 = vadd.f32 0.0, %v3647
      %v3649 = vpop.f32.mrf.mxu0
      %v3650 = vadd.f32 0.0, %v3649
      %3651 = vmatmul.bf16.gmra.mxu0 %v3578
      %v3652 = vpop.f32.mrf.mxu0
      %v3653 = vadd.f32 0.0, %v3652
      %v3654 = vpop.f32.mrf.mxu0
      %v3655 = vadd.f32 0.0, %v3654
      %3656 = vmatmul.bf16.gmra.mxu0 %v3581
      %v3657 = vpop.f32.mrf.mxu0
      %v3658 = vadd.f32 0.0, %v3657
      %v3659 = vpop.f32.mrf.mxu0
      %v3660 = vadd.f32 0.0, %v3659
      %3661 = vmatmul.bf16.gmra.mxu0 %v3584
      %v3662 = vpop.f32.mrf.mxu0
      %v3663 = vadd.f32 0.0, %v3662
      %v3664 = vpop.f32.mrf.mxu0
      %v3665 = vadd.f32 0.0, %v3664
      %3666 = vmatmul.bf16.gmra.mxu0 %v3587
      %v3667 = vpop.f32.mrf.mxu0
      %v3668 = vadd.f32 0.0, %v3667
      %v3669 = vpop.f32.mrf.mxu0
      %v3670 = vadd.f32 0.0, %v3669
      %3671 = vmatmul.bf16.gmra.mxu0 %v3590
      %v3672 = vpop.f32.mrf.mxu0
      %v3673 = vadd.f32 0.0, %v3672
      %v3674 = vpop.f32.mrf.mxu0
      %v3675 = vadd.f32 0.0, %v3674
      %3676 = vmatmul.bf16.gmra.mxu0 %v3593
      %v3677 = vpop.f32.mrf.mxu0
      %v3678 = vadd.f32 0.0, %v3677
      %v3679 = vpop.f32.mrf.mxu0
      %v3680 = vadd.f32 0.0, %v3679
      %3681 = vmatmul.bf16.gmra.mxu0 %v3596
      %v3682 = vpop.f32.mrf.mxu0
      %v3683 = vadd.f32 0.0, %v3682
      %v3684 = vpop.f32.mrf.mxu0
      %v3685 = vadd.f32 0.0, %v3684
      %3686 = vdwg.mxu0
      %v3687 = vmax.f32 %v3608, %v3618
      %v3688 = vmax.f32 %v3610, %v3620
      %v3689 = vmax.f32 %v3613, %v3623
      %v3690 = vmax.f32 %v3615, %v3625
      %v3691 = vmax.f32 %v3687, %v3628
      %v3692 = vmax.f32 %v3688, %v3630
      %v3693 = vmax.f32 %v3689, %v3633
      %v3694 = vmax.f32 %v3690, %v3635
      %v3695 = vmax.f32 %v3691, %v3638
      %v3696 = vmax.f32 %v3692, %v3640
      %v3697 = vmax.f32 %v3693, %v3643
      %v3698 = vmax.f32 %v3694, %v3645
      %v3699 = vmax.f32 %v3695, %v3648
      %v3700 = vmax.f32 %v3696, %v3650
      %v3701 = vmax.f32 %v3697, %v3653
      %v3702 = vmax.f32 %v3698, %v3655
      %v3703 = vmax.f32 %v3699, %v3658
      %v3704 = vmax.f32 %v3700, %v3660
      %v3705 = vmax.f32 %v3701, %v3663
      %v3706 = vmax.f32 %v3702, %v3665
      %v3707 = vmax.f32 %v3703, %v3668
      %v3708 = vmax.f32 %v3704, %v3670
      %v3709 = vmax.f32 %v3705, %v3673
      %v3710 = vmax.f32 %v3706, %v3675
      %v3711 = vmax.f32 %v3707, %v3678
      %v3712 = vmax.f32 %v3708, %v3680
      %v3713 = vmax.f32 %v3709, %v3683
      %v3714 = vmax.f32 %v3710, %v3685
      %v3715 = vmax.f32 %v3711, %v3712
      %v3716 = vmax.f32 %v3713, %v3714
      %v3717 = vmax.f32 %v3715, %v3716
      %v3718 = vrot.slane %v3717, 4
      %v3719 = vmax.f32 %v3717, %v3718
      %v3720 = vrot.slane %v3719, 2
      %v3721 = vmax.f32 %v3719, %v3720
      %v3722 = vrot.slane %v3721, 1
      %v3723 = vmax.f32 %v3721, %v3722
      %v3724 = vsub.f32 %v3608, %v3723
      %v3725 = vsub.f32 %v3610, %v3723
      %v3726 = vsub.f32 %v3613, %v3723
      %v3727 = vsub.f32 %v3615, %v3723
      %v3728 = vsub.f32 %v3618, %v3723
      %v3729 = vsub.f32 %v3620, %v3723
      %v3730 = vsub.f32 %v3623, %v3723
      %v3731 = vsub.f32 %v3625, %v3723
      %v3732 = vsub.f32 %v3628, %v3723
      %v3733 = vsub.f32 %v3630, %v3723
      %v3734 = vsub.f32 %v3633, %v3723
      %v3735 = vsub.f32 %v3635, %v3723
      %v3736 = vsub.f32 %v3638, %v3723
      %v3737 = vsub.f32 %v3640, %v3723
      %v3738 = vsub.f32 %v3643, %v3723
      %v3739 = vsub.f32 %v3645, %v3723
      %v3740 = vsub.f32 %v3648, %v3723
      %v3741 = vsub.f32 %v3650, %v3723
      %v3742 = vsub.f32 %v3653, %v3723
      %v3743 = vsub.f32 %v3655, %v3723
      %v3744 = vsub.f32 %v3658, %v3723
      %v3745 = vsub.f32 %v3660, %v3723
      %v3746 = vsub.f32 %v3663, %v3723
      %v3747 = vsub.f32 %v3665, %v3723
      %v3748 = vsub.f32 %v3668, %v3723
      %v3749 = vsub.f32 %v3670, %v3723
      %v3750 = vsub.f32 %v3673, %v3723
      %v3751 = vsub.f32 %v3675, %v3723
      %v3752 = vsub.f32 %v3678, %v3723
      %v3753 = vsub.f32 %v3680, %v3723
      %v3754 = vsub.f32 %v3683, %v3723
      %v3755 = vsub.f32 %v3685, %v3723
      %v3756 = vmul.f32 %v3724, 1.442695
      %v3757 = vpow.pop %v3756
      %v3758 = vmul.f32 %v3725, 1.442695
      %v3759 = vpow.pop %v3758
      %v3760 = vmul.f32 %v3726, 1.442695
      %v3761 = vpow.pop %v3760
      %v3762 = vmul.f32 %v3727, 1.442695
      %v3763 = vpow.pop %v3762
      %v3764 = vmul.f32 %v3728, 1.442695
      %v3765 = vpow.pop %v3764
      %v3766 = vmul.f32 %v3729, 1.442695
      %v3767 = vpow.pop %v3766
      %v3768 = vmul.f32 %v3730, 1.442695
      %v3769 = vpow.pop %v3768
      %v3770 = vmul.f32 %v3731, 1.442695
      %v3771 = vpow.pop %v3770
      %v3772 = vmul.f32 %v3732, 1.442695
      %v3773 = vpow.pop %v3772
      %v3774 = vmul.f32 %v3733, 1.442695
      %v3775 = vpow.pop %v3774
      %v3776 = vmul.f32 %v3734, 1.442695
      %v3777 = vpow.pop %v3776
      %v3778 = vmul.f32 %v3735, 1.442695
      %v3779 = vpow.pop %v3778
      %v3780 = vmul.f32 %v3736, 1.442695
      %v3781 = vpow.pop %v3780
      %v3782 = vmul.f32 %v3737, 1.442695
      %v3783 = vpow.pop %v3782
      %v3784 = vmul.f32 %v3738, 1.442695
      %v3785 = vpow.pop %v3784
      %v3786 = vmul.f32 %v3739, 1.442695
      %v3787 = vpow.pop %v3786
      %v3788 = vmul.f32 %v3740, 1.442695
      %v3789 = vpow.pop %v3788
      %v3790 = vmul.f32 %v3741, 1.442695
      %v3791 = vpow.pop %v3790
      %v3792 = vmul.f32 %v3742, 1.442695
      %v3793 = vpow.pop %v3792
      %v3794 = vmul.f32 %v3743, 1.442695
      %v3795 = vpow.pop %v3794
      %v3796 = vmul.f32 %v3744, 1.442695
      %v3797 = vpow.pop %v3796
      %v3798 = vmul.f32 %v3745, 1.442695
      %v3799 = vpow.pop %v3798
      %v3800 = vmul.f32 %v3746, 1.442695
      %v3801 = vpow.pop %v3800
      %v3802 = vmul.f32 %v3747, 1.442695
      %v3803 = vpow.pop %v3802
      %v3804 = vmul.f32 %v3748, 1.442695
      %v3805 = vpow.pop %v3804
      %v3806 = vmul.f32 %v3749, 1.442695
      %v3807 = vpow.pop %v3806
      %v3808 = vmul.f32 %v3750, 1.442695
      %v3809 = vpow.pop %v3808
      %v3810 = vmul.f32 %v3751, 1.442695
      %v3811 = vpow.pop %v3810
      %v3812 = vmul.f32 %v3752, 1.442695
      %v3813 = vpow.pop %v3812
      %v3814 = vmul.f32 %v3753, 1.442695
      %v3815 = vpow.pop %v3814
      %v3816 = vmul.f32 %v3754, 1.442695
      %v3817 = vpow.pop %v3816
      %v3818 = vmul.f32 %v3755, 1.442695
      %v3819 = vpow.pop %v3818
      %v3820 = vadd.f32 %v3757, %v3759
      %v3821 = vadd.f32 %v3820, %v3761
      %v3822 = vadd.f32 %v3821, %v3763
      %v3823 = vadd.f32 %v3822, %v3765
      %v3824 = vadd.f32 %v3823, %v3767
      %v3825 = vadd.f32 %v3824, %v3769
      %v3826 = vadd.f32 %v3825, %v3771
      %v3827 = vadd.f32 %v3826, %v3773
      %v3828 = vadd.f32 %v3827, %v3775
      %v3829 = vadd.f32 %v3828, %v3777
      %v3830 = vadd.f32 %v3829, %v3779
      %v3831 = vadd.f32 %v3830, %v3781
      %v3832 = vadd.f32 %v3831, %v3783
      %v3833 = vadd.f32 %v3832, %v3785
      %v3834 = vadd.f32 %v3833, %v3787
      %v3835 = vadd.f32 %v3834, %v3789
      %v3836 = vadd.f32 %v3835, %v3791
      %v3837 = vadd.f32 %v3836, %v3793
      %v3838 = vadd.f32 %v3837, %v3795
      %v3839 = vadd.f32 %v3838, %v3797
      %v3840 = vadd.f32 %v3839, %v3799
      %v3841 = vadd.f32 %v3840, %v3801
      %v3842 = vadd.f32 %v3841, %v3803
      %v3843 = vadd.f32 %v3842, %v3805
      %v3844 = vadd.f32 %v3843, %v3807
      %v3845 = vadd.f32 %v3844, %v3809
      %v3846 = vadd.f32 %v3845, %v3811
      %v3847 = vadd.f32 %v3846, %v3813
      %v3848 = vadd.f32 %v3847, %v3815
      %v3849 = vadd.f32 %v3848, %v3817
      %v3850 = vadd.f32 %v3849, %v3819
      %v3851 = vrot.slane %v3850, 4
      %v3852 = vadd.f32 %v3850, %v3851
      %v3853 = vrot.slane %v3852, 2
      %v3854 = vadd.f32 %v3852, %v3853
      %v3855 = vrot.slane %v3854, 1
      %v3856 = vadd.f32 %v3854, %v3855
      %v3857 = vrcp.pop %v3856
      %v3858 = vmul.f32 %v3856, %v3857
      %v3859 = vsub.f32 1.0, %v3858
      %v3860 = vmul.f32 %v3857, %v3859
      %v3861 = vadd.f32 %v3857, %v3860
      %vm3862 = vweird.f32 %v3856
      %vm3863 = vweird.f32 %v3857
      %vm3864 = vmor %vm3862, %vm3863
      %v3865 = vsel %vm3864, %v3857, %v3861
      %v3866 = vand.u32 2147483647, %v3856
      %vm3867 = vcmp.eq.f32.partialorder %v3866, 8.507059e+37
      %v3868 = vand.u32 %v3856, 2147483648
      %v3869 = vor.u32 1.1754944e-38, %v3868
      %v3870 = vsel %vm3867, %v3869, %v3865
      %v3871 = vmul.f32 %v3757, %v3870
      %v3872 = vmul.f32 %v3759, %v3870
      %v3873 = vmul.f32 %v3761, %v3870
      %v3874 = vmul.f32 %v3763, %v3870
      %v3875 = vmul.f32 %v3765, %v3870
      %v3876 = vmul.f32 %v3767, %v3870
      %v3877 = vmul.f32 %v3769, %v3870
      %v3878 = vmul.f32 %v3771, %v3870
      %v3879 = vmul.f32 %v3773, %v3870
      %v3880 = vmul.f32 %v3775, %v3870
      %v3881 = vmul.f32 %v3777, %v3870
      %v3882 = vmul.f32 %v3779, %v3870
      %v3883 = vmul.f32 %v3781, %v3870
      %v3884 = vmul.f32 %v3783, %v3870
      %v3885 = vmul.f32 %v3785, %v3870
      %v3886 = vmul.f32 %v3787, %v3870
      %v3887 = vmul.f32 %v3789, %v3870
      %v3888 = vmul.f32 %v3791, %v3870
      %v3889 = vmul.f32 %v3793, %v3870
      %v3890 = vmul.f32 %v3795, %v3870
      %v3891 = vmul.f32 %v3797, %v3870
      %v3892 = vmul.f32 %v3799, %v3870
      %v3893 = vmul.f32 %v3801, %v3870
      %v3894 = vmul.f32 %v3803, %v3870
      %v3895 = vmul.f32 %v3805, %v3870
      %v3896 = vmul.f32 %v3807, %v3870
      %v3897 = vmul.f32 %v3809, %v3870
      %v3898 = vmul.f32 %v3811, %v3870
      %v3899 = vmul.f32 %v3813, %v3870
      %v3900 = vmul.f32 %v3815, %v3870
      %v3901 = vmul.f32 %v3817, %v3870
      %v3902 = vmul.f32 %v3819, %v3870
      %v3903 = vpack.c.bf16 %v3872, %v3871
      %v3904 = vpack.c.bf16 %v3874, %v3873
      %v3905 = vpack.c.bf16 %v3876, %v3875
      %v3906 = vpack.c.bf16 %v3878, %v3877
      %v3907 = vpack.c.bf16 %v3880, %v3879
      %v3908 = vpack.c.bf16 %v3882, %v3881
      %v3909 = vpack.c.bf16 %v3884, %v3883
      %v3910 = vpack.c.bf16 %v3886, %v3885
      %v3911 = vpack.c.bf16 %v3888, %v3887
      %v3912 = vpack.c.bf16 %v3890, %v3889
      %v3913 = vpack.c.bf16 %v3892, %v3891
      %v3914 = vpack.c.bf16 %v3894, %v3893
      %v3915 = vpack.c.bf16 %v3896, %v3895
      %v3916 = vpack.c.bf16 %v3898, %v3897
      %v3917 = vpack.c.bf16 %v3900, %v3899
      %v3918 = vpack.c.bf16 %v3902, %v3901
      %v3923 = vunpack.c.l.b16 %v3486
      %v3924 = vunpack.c.h.b16 %v3486
      %v3925 = vunpack.c.l.b16 %v3487
      %v3926 = vunpack.c.h.b16 %v3487
      %v3927 = vunpack.c.l.b16 %v3488
      %v3928 = vunpack.c.h.b16 %v3488
      %v3929 = vunpack.c.l.b16 %v3489
      %v3930 = vunpack.c.h.b16 %v3489
      %v3931 = vpack.c.b16 %v3925, %v3923
      %v3932 = vpack.c.b16 %v3926, %v3924
      %v3933 = vpack.c.b16 %v3929, %v3927
      %v3934 = vpack.c.b16 %v3930, %v3928
      %3939 = vmatpush.bf16.msra.mxu0 %v3910
      %3940 = vmatpush.bf16.msra.mxu0 %v3909
      %3941 = vmatpush.bf16.msra.mxu0 %v3908
      %3942 = vmatpush.bf16.msra.mxu0 %v3907
      %3943 = vmatpush.bf16.msra.mxu0 %v3906
      %3944 = vmatpush.bf16.msra.mxu0 %v3905
      %3945 = vmatpush.bf16.msra.mxu0 %v3904
      %3946 = vmatpush.bf16.msra.mxu0 %v3903
      %3947 = vmatmul.bf16.gmra.mxu0 %v3931
      %v3948 = vpop.f32.mrf.mxu0
      %v3949 = vadd.f32 0.0, %v3948
      %v3950 = vpop.f32.mrf.mxu0
      %v3951 = vadd.f32 0.0, %v3950
      %3952 = vmatmul.bf16.gmra.mxu0 %v3933
      %v3953 = vpop.f32.mrf.mxu0
      %v3954 = vadd.f32 0.0, %v3953
      %v3955 = vpop.f32.mrf.mxu0
      %v3956 = vadd.f32 0.0, %v3955
      %3957 = vdwg.mxu0
      %3958 = vmatpush.bf16.msra.mxu0 %v3918
      %3959 = vmatpush.bf16.msra.mxu0 %v3917
      %3960 = vmatpush.bf16.msra.mxu0 %v3916
      %3961 = vmatpush.bf16.msra.mxu0 %v3915
      %3962 = vmatpush.bf16.msra.mxu0 %v3914
      %3963 = vmatpush.bf16.msra.mxu0 %v3913
      %3964 = vmatpush.bf16.msra.mxu0 %v3912
      %3965 = vmatpush.bf16.msra.mxu0 %v3911
      %3966 = vmatmul.bf16.gmra.mxu0 %v3932
      %v3967 = vpop.f32.mrf.mxu0
      %v3968 = vadd.f32 %v3949, %v3967
      %v3969 = vpop.f32.mrf.mxu0
      %v3970 = vadd.f32 %v3951, %v3969
      %3971 = vmatmul.bf16.gmra.mxu0 %v3934
      %v3972 = vpop.f32.mrf.mxu0
      %v3973 = vadd.f32 %v3954, %v3972
      %v3974 = vpop.f32.mrf.mxu0
      %v3975 = vadd.f32 %v3956, %v3974
      %3976 = vdwg.mxu0
      %v3977 = vpack.c.bf16 %v3968, %v3968
      %v3978 = vpack.c.bf16 %v3970, %v3970
      %v3979 = vpack.c.bf16 %v3973, %v3973
      %v3980 = vpack.c.bf16 %v3975, %v3975
      %3981 = vst [vmem:[#allocation3 + $0x60] sm:$0xf] %v3977
      %3982 = vst [vmem:[#allocation3 + $0x68] sm:$0xf] %v3978
      %3983 = vst [vmem:[#allocation3 + $0x70] sm:$0xf] %v3979
      %3984 = vst [vmem:[#allocation3 + $0x78] sm:$0xf] %v3980
      %v3985 = vld [vmem:[#allocation2 + $0x64] sm:$0xf]
      %v3986 = vld [vmem:[#allocation2 + $0x6c] sm:$0xf]
      %v3987 = vld [vmem:[#allocation2 + $0x74] sm:$0xf]
      %v3988 = vld [vmem:[#allocation2 + $0x7c] sm:$0xf]
      %v3993 = vunpack.c.l.b16 %v3985
      %v3994 = vunpack.c.l.b16 %v3986
      %v3995 = vunpack.c.l.b16 %v3987
      %v3996 = vunpack.c.l.b16 %v3988
      %v3997 = vpack.c.b16 %v3994, %v3993
      %v3998 = vpack.c.b16 %v3996, %v3995
      %4001 = vmatpush.bf16.msra.mxu0 0
      %4002 = vmatpush.bf16.msra.mxu0 0
      %4003 = vmatpush.bf16.msra.mxu0 0
      %4004 = vmatpush.bf16.msra.mxu0 0
      %4005 = vmatpush.bf16.msra.mxu0 0
      %4006 = vmatpush.bf16.msra.mxu0 0
      %4007 = vmatpush.bf16.msra.mxu0 %v3998
      %4008 = vmatpush.bf16.msra.mxu0 %v3997
      %4009 = vmatmul.bf16.gmra.mxu0 %v3551
      %v4010 = vpop.f32.mrf.mxu0
      %v4011 = vadd.f32 0.0, %v4010
      %v4012 = vpop.f32.mrf.mxu0
      %v4013 = vadd.f32 0.0, %v4012
      %4014 = vmatmul.bf16.gmra.mxu0 %v3554
      %v4015 = vpop.f32.mrf.mxu0
      %v4016 = vadd.f32 0.0, %v4015
      %v4017 = vpop.f32.mrf.mxu0
      %v4018 = vadd.f32 0.0, %v4017
      %4019 = vmatmul.bf16.gmra.mxu0 %v3557
      %v4020 = vpop.f32.mrf.mxu0
      %v4021 = vadd.f32 0.0, %v4020
      %v4022 = vpop.f32.mrf.mxu0
      %v4023 = vadd.f32 0.0, %v4022
      %4024 = vmatmul.bf16.gmra.mxu0 %v3560
      %v4025 = vpop.f32.mrf.mxu0
      %v4026 = vadd.f32 0.0, %v4025
      %v4027 = vpop.f32.mrf.mxu0
      %v4028 = vadd.f32 0.0, %v4027
      %4029 = vmatmul.bf16.gmra.mxu0 %v3563
      %v4030 = vpop.f32.mrf.mxu0
      %v4031 = vadd.f32 0.0, %v4030
      %v4032 = vpop.f32.mrf.mxu0
      %v4033 = vadd.f32 0.0, %v4032
      %4034 = vmatmul.bf16.gmra.mxu0 %v3566
      %v4035 = vpop.f32.mrf.mxu0
      %v4036 = vadd.f32 0.0, %v4035
      %v4037 = vpop.f32.mrf.mxu0
      %v4038 = vadd.f32 0.0, %v4037
      %4039 = vmatmul.bf16.gmra.mxu0 %v3569
      %v4040 = vpop.f32.mrf.mxu0
      %v4041 = vadd.f32 0.0, %v4040
      %v4042 = vpop.f32.mrf.mxu0
      %v4043 = vadd.f32 0.0, %v4042
      %4044 = vmatmul.bf16.gmra.mxu0 %v3572
      %v4045 = vpop.f32.mrf.mxu0
      %v4046 = vadd.f32 0.0, %v4045
      %v4047 = vpop.f32.mrf.mxu0
      %v4048 = vadd.f32 0.0, %v4047
      %4049 = vmatmul.bf16.gmra.mxu0 %v3575
      %v4050 = vpop.f32.mrf.mxu0
      %v4051 = vadd.f32 0.0, %v4050
      %v4052 = vpop.f32.mrf.mxu0
      %v4053 = vadd.f32 0.0, %v4052
      %4054 = vmatmul.bf16.gmra.mxu0 %v3578
      %v4055 = vpop.f32.mrf.mxu0
      %v4056 = vadd.f32 0.0, %v4055
      %v4057 = vpop.f32.mrf.mxu0
      %v4058 = vadd.f32 0.0, %v4057
      %4059 = vmatmul.bf16.gmra.mxu0 %v3581
      %v4060 = vpop.f32.mrf.mxu0
      %v4061 = vadd.f32 0.0, %v4060
      %v4062 = vpop.f32.mrf.mxu0
      %v4063 = vadd.f32 0.0, %v4062
      %4064 = vmatmul.bf16.gmra.mxu0 %v3584
      %v4065 = vpop.f32.mrf.mxu0
      %v4066 = vadd.f32 0.0, %v4065
      %v4067 = vpop.f32.mrf.mxu0
      %v4068 = vadd.f32 0.0, %v4067
      %4069 = vmatmul.bf16.gmra.mxu0 %v3587
      %v4070 = vpop.f32.mrf.mxu0
      %v4071 = vadd.f32 0.0, %v4070
      %v4072 = vpop.f32.mrf.mxu0
      %v4073 = vadd.f32 0.0, %v4072
      %4074 = vmatmul.bf16.gmra.mxu0 %v3590
      %v4075 = vpop.f32.mrf.mxu0
      %v4076 = vadd.f32 0.0, %v4075
      %v4077 = vpop.f32.mrf.mxu0
      %v4078 = vadd.f32 0.0, %v4077
      %4079 = vmatmul.bf16.gmra.mxu0 %v3593
      %v4080 = vpop.f32.mrf.mxu0
      %v4081 = vadd.f32 0.0, %v4080
      %v4082 = vpop.f32.mrf.mxu0
      %v4083 = vadd.f32 0.0, %v4082
      %4084 = vmatmul.bf16.gmra.mxu0 %v3596
      %v4085 = vpop.f32.mrf.mxu0
      %v4086 = vadd.f32 0.0, %v4085
      %v4087 = vpop.f32.mrf.mxu0
      %v4088 = vadd.f32 0.0, %v4087
      %4089 = vdwg.mxu0
      %v4090 = vmax.f32 %v4011, %v4021
      %v4091 = vmax.f32 %v4013, %v4023
      %v4092 = vmax.f32 %v4016, %v4026
      %v4093 = vmax.f32 %v4018, %v4028
      %v4094 = vmax.f32 %v4090, %v4031
      %v4095 = vmax.f32 %v4091, %v4033
      %v4096 = vmax.f32 %v4092, %v4036
      %v4097 = vmax.f32 %v4093, %v4038
      %v4098 = vmax.f32 %v4094, %v4041
      %v4099 = vmax.f32 %v4095, %v4043
      %v4100 = vmax.f32 %v4096, %v4046
      %v4101 = vmax.f32 %v4097, %v4048
      %v4102 = vmax.f32 %v4098, %v4051
      %v4103 = vmax.f32 %v4099, %v4053
      %v4104 = vmax.f32 %v4100, %v4056
      %v4105 = vmax.f32 %v4101, %v4058
      %v4106 = vmax.f32 %v4102, %v4061
      %v4107 = vmax.f32 %v4103, %v4063
      %v4108 = vmax.f32 %v4104, %v4066
      %v4109 = vmax.f32 %v4105, %v4068
      %v4110 = vmax.f32 %v4106, %v4071
      %v4111 = vmax.f32 %v4107, %v4073
      %v4112 = vmax.f32 %v4108, %v4076
      %v4113 = vmax.f32 %v4109, %v4078
      %v4114 = vmax.f32 %v4110, %v4081
      %v4115 = vmax.f32 %v4111, %v4083
      %v4116 = vmax.f32 %v4112, %v4086
      %v4117 = vmax.f32 %v4113, %v4088
      %v4118 = vmax.f32 %v4114, %v4115
      %v4119 = vmax.f32 %v4116, %v4117
      %v4120 = vmax.f32 %v4118, %v4119
      %v4121 = vrot.slane %v4120, 4
      %v4122 = vmax.f32 %v4120, %v4121
      %v4123 = vrot.slane %v4122, 2
      %v4124 = vmax.f32 %v4122, %v4123
      %v4125 = vrot.slane %v4124, 1
      %v4126 = vmax.f32 %v4124, %v4125
      %v4127 = vsub.f32 %v4011, %v4126
      %v4128 = vsub.f32 %v4013, %v4126
      %v4129 = vsub.f32 %v4016, %v4126
      %v4130 = vsub.f32 %v4018, %v4126
      %v4131 = vsub.f32 %v4021, %v4126
      %v4132 = vsub.f32 %v4023, %v4126
      %v4133 = vsub.f32 %v4026, %v4126
      %v4134 = vsub.f32 %v4028, %v4126
      %v4135 = vsub.f32 %v4031, %v4126
      %v4136 = vsub.f32 %v4033, %v4126
      %v4137 = vsub.f32 %v4036, %v4126
      %v4138 = vsub.f32 %v4038, %v4126
      %v4139 = vsub.f32 %v4041, %v4126
      %v4140 = vsub.f32 %v4043, %v4126
      %v4141 = vsub.f32 %v4046, %v4126
      %v4142 = vsub.f32 %v4048, %v4126
      %v4143 = vsub.f32 %v4051, %v4126
      %v4144 = vsub.f32 %v4053, %v4126
      %v4145 = vsub.f32 %v4056, %v4126
      %v4146 = vsub.f32 %v4058, %v4126
      %v4147 = vsub.f32 %v4061, %v4126
      %v4148 = vsub.f32 %v4063, %v4126
      %v4149 = vsub.f32 %v4066, %v4126
      %v4150 = vsub.f32 %v4068, %v4126
      %v4151 = vsub.f32 %v4071, %v4126
      %v4152 = vsub.f32 %v4073, %v4126
      %v4153 = vsub.f32 %v4076, %v4126
      %v4154 = vsub.f32 %v4078, %v4126
      %v4155 = vsub.f32 %v4081, %v4126
      %v4156 = vsub.f32 %v4083, %v4126
      %v4157 = vsub.f32 %v4086, %v4126
      %v4158 = vsub.f32 %v4088, %v4126
      %v4159 = vmul.f32 %v4127, 1.442695
      %v4160 = vpow.pop %v4159
      %v4161 = vmul.f32 %v4128, 1.442695
      %v4162 = vpow.pop %v4161
      %v4163 = vmul.f32 %v4129, 1.442695
      %v4164 = vpow.pop %v4163
      %v4165 = vmul.f32 %v4130, 1.442695
      %v4166 = vpow.pop %v4165
      %v4167 = vmul.f32 %v4131, 1.442695
      %v4168 = vpow.pop %v4167
      %v4169 = vmul.f32 %v4132, 1.442695
      %v4170 = vpow.pop %v4169
      %v4171 = vmul.f32 %v4133, 1.442695
      %v4172 = vpow.pop %v4171
      %v4173 = vmul.f32 %v4134, 1.442695
      %v4174 = vpow.pop %v4173
      %v4175 = vmul.f32 %v4135, 1.442695
      %v4176 = vpow.pop %v4175
      %v4177 = vmul.f32 %v4136, 1.442695
      %v4178 = vpow.pop %v4177
      %v4179 = vmul.f32 %v4137, 1.442695
      %v4180 = vpow.pop %v4179
      %v4181 = vmul.f32 %v4138, 1.442695
      %v4182 = vpow.pop %v4181
      %v4183 = vmul.f32 %v4139, 1.442695
      %v4184 = vpow.pop %v4183
      %v4185 = vmul.f32 %v4140, 1.442695
      %v4186 = vpow.pop %v4185
      %v4187 = vmul.f32 %v4141, 1.442695
      %v4188 = vpow.pop %v4187
      %v4189 = vmul.f32 %v4142, 1.442695
      %v4190 = vpow.pop %v4189
      %v4191 = vmul.f32 %v4143, 1.442695
      %v4192 = vpow.pop %v4191
      %v4193 = vmul.f32 %v4144, 1.442695
      %v4194 = vpow.pop %v4193
      %v4195 = vmul.f32 %v4145, 1.442695
      %v4196 = vpow.pop %v4195
      %v4197 = vmul.f32 %v4146, 1.442695
      %v4198 = vpow.pop %v4197
      %v4199 = vmul.f32 %v4147, 1.442695
      %v4200 = vpow.pop %v4199
      %v4201 = vmul.f32 %v4148, 1.442695
      %v4202 = vpow.pop %v4201
      %v4203 = vmul.f32 %v4149, 1.442695
      %v4204 = vpow.pop %v4203
      %v4205 = vmul.f32 %v4150, 1.442695
      %v4206 = vpow.pop %v4205
      %v4207 = vmul.f32 %v4151, 1.442695
      %v4208 = vpow.pop %v4207
      %v4209 = vmul.f32 %v4152, 1.442695
      %v4210 = vpow.pop %v4209
      %v4211 = vmul.f32 %v4153, 1.442695
      %v4212 = vpow.pop %v4211
      %v4213 = vmul.f32 %v4154, 1.442695
      %v4214 = vpow.pop %v4213
      %v4215 = vmul.f32 %v4155, 1.442695
      %v4216 = vpow.pop %v4215
      %v4217 = vmul.f32 %v4156, 1.442695
      %v4218 = vpow.pop %v4217
      %v4219 = vmul.f32 %v4157, 1.442695
      %v4220 = vpow.pop %v4219
      %v4221 = vmul.f32 %v4158, 1.442695
      %v4222 = vpow.pop %v4221
      %v4223 = vadd.f32 %v4160, %v4162
      %v4224 = vadd.f32 %v4223, %v4164
      %v4225 = vadd.f32 %v4224, %v4166
      %v4226 = vadd.f32 %v4225, %v4168
      %v4227 = vadd.f32 %v4226, %v4170
      %v4228 = vadd.f32 %v4227, %v4172
      %v4229 = vadd.f32 %v4228, %v4174
      %v4230 = vadd.f32 %v4229, %v4176
      %v4231 = vadd.f32 %v4230, %v4178
      %v4232 = vadd.f32 %v4231, %v4180
      %v4233 = vadd.f32 %v4232, %v4182
      %v4234 = vadd.f32 %v4233, %v4184
      %v4235 = vadd.f32 %v4234, %v4186
      %v4236 = vadd.f32 %v4235, %v4188
      %v4237 = vadd.f32 %v4236, %v4190
      %v4238 = vadd.f32 %v4237, %v4192
      %v4239 = vadd.f32 %v4238, %v4194
      %v4240 = vadd.f32 %v4239, %v4196
      %v4241 = vadd.f32 %v4240, %v4198
      %v4242 = vadd.f32 %v4241, %v4200
      %v4243 = vadd.f32 %v4242, %v4202
      %v4244 = vadd.f32 %v4243, %v4204
      %v4245 = vadd.f32 %v4244, %v4206
      %v4246 = vadd.f32 %v4245, %v4208
      %v4247 = vadd.f32 %v4246, %v4210
      %v4248 = vadd.f32 %v4247, %v4212
      %v4249 = vadd.f32 %v4248, %v4214
      %v4250 = vadd.f32 %v4249, %v4216
      %v4251 = vadd.f32 %v4250, %v4218
      %v4252 = vadd.f32 %v4251, %v4220
      %v4253 = vadd.f32 %v4252, %v4222
      %v4254 = vrot.slane %v4253, 4
      %v4255 = vadd.f32 %v4253, %v4254
      %v4256 = vrot.slane %v4255, 2
      %v4257 = vadd.f32 %v4255, %v4256
      %v4258 = vrot.slane %v4257, 1
      %v4259 = vadd.f32 %v4257, %v4258
      %v4260 = vrcp.pop %v4259
      %v4261 = vmul.f32 %v4259, %v4260
      %v4262 = vsub.f32 1.0, %v4261
      %v4263 = vmul.f32 %v4260, %v4262
      %v4264 = vadd.f32 %v4260, %v4263
      %vm4265 = vweird.f32 %v4259
      %vm4266 = vweird.f32 %v4260
      %vm4267 = vmor %vm4265, %vm4266
      %v4268 = vsel %vm4267, %v4260, %v4264
      %v4269 = vand.u32 2147483647, %v4259
      %vm4270 = vcmp.eq.f32.partialorder %v4269, 8.507059e+37
      %v4271 = vand.u32 %v4259, 2147483648
      %v4272 = vor.u32 1.1754944e-38, %v4271
      %v4273 = vsel %vm4270, %v4272, %v4268
      %v4274 = vmul.f32 %v4160, %v4273
      %v4275 = vmul.f32 %v4162, %v4273
      %v4276 = vmul.f32 %v4164, %v4273
      %v4277 = vmul.f32 %v4166, %v4273
      %v4278 = vmul.f32 %v4168, %v4273
      %v4279 = vmul.f32 %v4170, %v4273
      %v4280 = vmul.f32 %v4172, %v4273
      %v4281 = vmul.f32 %v4174, %v4273
      %v4282 = vmul.f32 %v4176, %v4273
      %v4283 = vmul.f32 %v4178, %v4273
      %v4284 = vmul.f32 %v4180, %v4273
      %v4285 = vmul.f32 %v4182, %v4273
      %v4286 = vmul.f32 %v4184, %v4273
      %v4287 = vmul.f32 %v4186, %v4273
      %v4288 = vmul.f32 %v4188, %v4273
      %v4289 = vmul.f32 %v4190, %v4273
      %v4290 = vmul.f32 %v4192, %v4273
      %v4291 = vmul.f32 %v4194, %v4273
      %v4292 = vmul.f32 %v4196, %v4273
      %v4293 = vmul.f32 %v4198, %v4273
      %v4294 = vmul.f32 %v4200, %v4273
      %v4295 = vmul.f32 %v4202, %v4273
      %v4296 = vmul.f32 %v4204, %v4273
      %v4297 = vmul.f32 %v4206, %v4273
      %v4298 = vmul.f32 %v4208, %v4273
      %v4299 = vmul.f32 %v4210, %v4273
      %v4300 = vmul.f32 %v4212, %v4273
      %v4301 = vmul.f32 %v4214, %v4273
      %v4302 = vmul.f32 %v4216, %v4273
      %v4303 = vmul.f32 %v4218, %v4273
      %v4304 = vmul.f32 %v4220, %v4273
      %v4305 = vmul.f32 %v4222, %v4273
      %v4306 = vpack.c.bf16 %v4275, %v4274
      %v4307 = vpack.c.bf16 %v4277, %v4276
      %v4308 = vpack.c.bf16 %v4279, %v4278
      %v4309 = vpack.c.bf16 %v4281, %v4280
      %v4310 = vpack.c.bf16 %v4283, %v4282
      %v4311 = vpack.c.bf16 %v4285, %v4284
      %v4312 = vpack.c.bf16 %v4287, %v4286
      %v4313 = vpack.c.bf16 %v4289, %v4288
      %v4314 = vpack.c.bf16 %v4291, %v4290
      %v4315 = vpack.c.bf16 %v4293, %v4292
      %v4316 = vpack.c.bf16 %v4295, %v4294
      %v4317 = vpack.c.bf16 %v4297, %v4296
      %v4318 = vpack.c.bf16 %v4299, %v4298
      %v4319 = vpack.c.bf16 %v4301, %v4300
      %v4320 = vpack.c.bf16 %v4303, %v4302
      %v4321 = vpack.c.bf16 %v4305, %v4304
      %4322 = vmatpush.bf16.msra.mxu0 %v4313
      %4323 = vmatpush.bf16.msra.mxu0 %v4312
      %4324 = vmatpush.bf16.msra.mxu0 %v4311
      %4325 = vmatpush.bf16.msra.mxu0 %v4310
      %4326 = vmatpush.bf16.msra.mxu0 %v4309
      %4327 = vmatpush.bf16.msra.mxu0 %v4308
      %4328 = vmatpush.bf16.msra.mxu0 %v4307
      %4329 = vmatpush.bf16.msra.mxu0 %v4306
      %4330 = vmatmul.bf16.gmra.mxu0 %v3931
      %v4331 = vpop.f32.mrf.mxu0
      %v4332 = vadd.f32 0.0, %v4331
      %v4333 = vpop.f32.mrf.mxu0
      %v4334 = vadd.f32 0.0, %v4333
      %4335 = vmatmul.bf16.gmra.mxu0 %v3933
      %v4336 = vpop.f32.mrf.mxu0
      %v4337 = vadd.f32 0.0, %v4336
      %v4338 = vpop.f32.mrf.mxu0
      %v4339 = vadd.f32 0.0, %v4338
      %4340 = vdwg.mxu0
      %4341 = vmatpush.bf16.msra.mxu0 %v4321
      %4342 = vmatpush.bf16.msra.mxu0 %v4320
      %4343 = vmatpush.bf16.msra.mxu0 %v4319
      %4344 = vmatpush.bf16.msra.mxu0 %v4318
      %4345 = vmatpush.bf16.msra.mxu0 %v4317
      %4346 = vmatpush.bf16.msra.mxu0 %v4316
      %4347 = vmatpush.bf16.msra.mxu0 %v4315
      %4348 = vmatpush.bf16.msra.mxu0 %v4314
      %4349 = vmatmul.bf16.gmra.mxu0 %v3932
      %v4350 = vpop.f32.mrf.mxu0
      %v4351 = vadd.f32 %v4332, %v4350
      %v4352 = vpop.f32.mrf.mxu0
      %v4353 = vadd.f32 %v4334, %v4352
      %4354 = vmatmul.bf16.gmra.mxu0 %v3934
      %v4355 = vpop.f32.mrf.mxu0
      %v4356 = vadd.f32 %v4337, %v4355
      %v4357 = vpop.f32.mrf.mxu0
      %v4358 = vadd.f32 %v4339, %v4357
      %4359 = vdwg.mxu0
      %v4360 = vpack.c.bf16 %v4351, %v4351
      %v4361 = vpack.c.bf16 %v4353, %v4353
      %v4362 = vpack.c.bf16 %v4356, %v4356
      %v4363 = vpack.c.bf16 %v4358, %v4358
      %4364 = vst [vmem:[#allocation3 + $0x64] sm:$0xf] %v4360
      %4365 = vst [vmem:[#allocation3 + $0x6c] sm:$0xf] %v4361
      %4366 = vst [vmem:[#allocation3 + $0x74] sm:$0xf] %v4362
      %4367 = vst [vmem:[#allocation3 + $0x7c] sm:$0xf] %v4363
      %v4368 = vld [vmem:[%s2] sm:$0x3]
      %v4369 = vld [vmem:[#allocation3] sm:$0xff]
      %v4370 = vld [vmem:[#allocation3 + $0x8] sm:$0xff]
      %v4371 = vld [vmem:[#allocation3 + $0x10] sm:$0xff]
      %v4372 = vld [vmem:[#allocation3 + $0x18] sm:$0xff]
      %v4373 = vld [vmem:[#allocation3 + $0x20] sm:$0xff]
      %v4374 = vld [vmem:[#allocation3 + $0x28] sm:$0xff]
      %v4375 = vld [vmem:[#allocation3 + $0x30] sm:$0xff]
      %v4376 = vld [vmem:[#allocation3 + $0x38] sm:$0xff]
      %v4377 = vld [vmem:[#allocation3 + $0x40] sm:$0xff]
      %v4378 = vld [vmem:[#allocation3 + $0x48] sm:$0xff]
      %v4379 = vld [vmem:[#allocation3 + $0x50] sm:$0xff]
      %v4380 = vld [vmem:[#allocation3 + $0x58] sm:$0xff]
      %v4381 = vld [vmem:[#allocation3 + $0x60] sm:$0xff]
      %v4382 = vld [vmem:[#allocation3 + $0x68] sm:$0xff]
      %v4383 = vld [vmem:[#allocation3 + $0x70] sm:$0xff]
      %v4384 = vld [vmem:[#allocation3 + $0x78] sm:$0xff]
      %v4385 = vld [vmem:[%s3] sm:$0xf]
      %4387 = vset.pattern.permute.xlu0 0
      %4388 = vperm.xlu0 %4387, %v4385
      %v4389 = vpop.permute.xlu0 %4388
      %v4407 = vunpack.c.l.b16 %v4369
      %v4408 = vunpack.c.h.b16 %v4369
      %v4409 = vunpack.c.l.b16 %v4370
      %v4410 = vunpack.c.h.b16 %v4370
      %v4411 = vunpack.c.l.b16 %v4371
      %v4412 = vunpack.c.h.b16 %v4371
      %v4413 = vunpack.c.l.b16 %v4372
      %v4414 = vunpack.c.h.b16 %v4372
      %v4415 = vunpack.c.l.b16 %v4373
      %v4416 = vunpack.c.h.b16 %v4373
      %v4417 = vunpack.c.l.b16 %v4374
      %v4418 = vunpack.c.h.b16 %v4374
      %v4419 = vunpack.c.l.b16 %v4375
      %v4420 = vunpack.c.h.b16 %v4375
      %v4421 = vunpack.c.l.b16 %v4376
      %v4422 = vunpack.c.h.b16 %v4376
      %v4423 = vunpack.c.l.b16 %v4377
      %v4424 = vunpack.c.h.b16 %v4377
      %v4425 = vunpack.c.l.b16 %v4378
      %v4426 = vunpack.c.h.b16 %v4378
      %v4427 = vunpack.c.l.b16 %v4379
      %v4428 = vunpack.c.h.b16 %v4379
      %v4429 = vunpack.c.l.b16 %v4380
      %v4430 = vunpack.c.h.b16 %v4380
      %v4431 = vunpack.c.l.b16 %v4381
      %v4432 = vunpack.c.h.b16 %v4381
      %v4433 = vunpack.c.l.b16 %v4382
      %v4434 = vunpack.c.h.b16 %v4382
      %v4435 = vunpack.c.l.b16 %v4383
      %v4436 = vunpack.c.h.b16 %v4383
      %v4437 = vunpack.c.l.b16 %v4384
      %v4438 = vunpack.c.h.b16 %v4384
      %v4439 = vpack.c.b16 %v4409, %v4407
      %v4440 = vpack.c.b16 %v4410, %v4408
      %v4441 = vpack.c.b16 %v4413, %v4411
      %v4442 = vpack.c.b16 %v4414, %v4412
      %v4443 = vpack.c.b16 %v4417, %v4415
      %v4444 = vpack.c.b16 %v4418, %v4416
      %v4445 = vpack.c.b16 %v4421, %v4419
      %v4446 = vpack.c.b16 %v4422, %v4420
      %v4447 = vpack.c.b16 %v4425, %v4423
      %v4448 = vpack.c.b16 %v4426, %v4424
      %v4449 = vpack.c.b16 %v4429, %v4427
      %v4450 = vpack.c.b16 %v4430, %v4428
      %v4451 = vpack.c.b16 %v4433, %v4431
      %v4452 = vpack.c.b16 %v4434, %v4432
      %v4453 = vpack.c.b16 %v4437, %v4435
      %v4454 = vpack.c.b16 %v4438, %v4436
      %4471 = vmatpush.bf16.msra.mxu0 %v4453
      %4472 = vmatpush.bf16.msra.mxu0 %v4451
      %4473 = vmatpush.bf16.msra.mxu0 %v4449
      %4474 = vmatpush.bf16.msra.mxu0 %v4447
      %4475 = vmatpush.bf16.msra.mxu0 %v4445
      %4476 = vmatpush.bf16.msra.mxu0 %v4443
      %4477 = vmatpush.bf16.msra.mxu0 %v4441
      %4478 = vmatpush.bf16.msra.mxu0 %v4439
      %4479 = vmatmul.bf16.gmra.mxu0 %v4368
      %v4480 = vpop.f32.mrf.mxu0
      %v4481 = vadd.f32 %v4389, %v4480
      %v4482 = vpop.f32.mrf.mxu0
      %4483 = vdwg.mxu0
      %4484 = vmatpush.bf16.msra.mxu0 %v4454
      %4485 = vmatpush.bf16.msra.mxu0 %v4452
      %4486 = vmatpush.bf16.msra.mxu0 %v4450
      %4487 = vmatpush.bf16.msra.mxu0 %v4448
      %4488 = vmatpush.bf16.msra.mxu0 %v4446
      %4489 = vmatpush.bf16.msra.mxu0 %v4444
      %4490 = vmatpush.bf16.msra.mxu0 %v4442
      %4491 = vmatpush.bf16.msra.mxu0 %v4440
      %4492 = vmatmul.bf16.gmra.mxu0 %v4368
      %v4493 = vpop.f32.mrf.mxu0
      %v4494 = vadd.f32 %v4389, %v4493
      %v4495 = vpop.f32.mrf.mxu0
      %4496 = vdwg.mxu0
      %v4499 = vrot.slane %v4494, 4
      %v4500 = vsel %vm400, %v4481, %v4499
      %4502 = vst [vmem:[%s199] sm:$0xff] %v4500
      %s4503 = smul.u32 2, %s15
      %p4504 = scmp.lt.s32.totalorder %s4503, 3
      %s4505 = scalar_select %p4504, %s4503, 3
      %s4506 = smul.addr %s4505, 4
      %s4507 = scalar_lea.vmem %s4, %s4506
      // Predicated region
      $region37: #{attention_forward.1} parent=35 // pred_check
        %p4508 = pneg %p122
      $region38: #{attention_forward.1} parent=35 // pred_check_branch
        %4510 = sbr.rel (%p4508) target = $region40
      $region39: #{attention_forward.1} parent=35 // pred_region
        %s4511 = smul.u32 2, %s15
      $region40: #{attention_forward.1} parent=35 // pred_fallthru
        _
    $region36: #{attention_forward.1} parent=5 // pred_fallthru
      _
    %p4512 = scmp.le.s32.totalorder 2, %s10
    // Predicated region
    $region41: #{attention_forward.1} parent=5 // pred_check
      %p4513 = pneg %p4512
    $region42: #{attention_forward.1} parent=5 // pred_check_branch
      %4515 = sbr.rel (%p4513) target = $region44
    $region43: #{attention_forward.1} parent=5 // pred_region
      %s4516 = ssub.s32 %s10, 2
      // Predicated region
      $region45: #{attention_forward.1} parent=43 // pred_check
        %p4517 = pneg %p128
      $region46: #{attention_forward.1} parent=43 // pred_check_branch
        %4519 = sbr.rel (%p4517) target = $region48
      $region47: #{attention_forward.1} parent=43 // pred_region
        %s4520 = smul.u32 2, %s16
        %p4521 = scmp.lt.s32.totalorder %s4520, 3
        %s4522 = scalar_select %p4521, %s4520, 3
        %s4523 = smul.addr %s4522, 4
        %s4524 = scalar_lea.vmem %s4, %s4523
      $region48: #{attention_forward.1} parent=43 // pred_fallthru
        _
    $region44: #{attention_forward.1} parent=5 // pred_fallthru
      _
  $region6: #{attention_forward.1} parent=0 // loop_footer
    %s14 = sadd.s32 1, %s10
  $region7: #{attention_forward.1} parent=0 // loop_footer_branch
    %9 = sbr.rel target = $region3
  $region8: #{attention_forward.1} parent=0 // loop_exit
    _

</llo_original>
